<compile_context>
chip_gen: v5e
topology: v5e:2x2
jax: 0.10.0
libtpu: 0.0.40
codegen_flags: <defaults>
</compile_context>

<pallas_src>
import jax
import jax.numpy as jnp
import numpy as np
from jax.experimental import pallas as pl
from jax.experimental.pallas import tpu as pltpu

INPUT_DIM = 5000      # from the PyTorch module (nn.Linear(5000, 100))
INPUT_PAD = 5120      # 40 * 128: dense lane axis / dense K-loop
HIDDEN_DIM = 100      # logical hidden size
HIDDEN_PAD = 128      # lane-dense padded hidden size
BATCH = 128           # amortizes the weight stream
TILE_B = BATCH        # single grid step (one TC); see perf notes above


def spam_classifier_kernel(x_ref, w1q_ref, scale_ref, b1_ref, w2_ref, b2_ref,
                           o_ref):
    # Dequantize int8 weights to bf16 (values |q| <= 127 are exact in bf16);
    # the per-column scale is applied after the matmul on the small [B, Hp]
    # result instead of the big [D, Hp] weight block.
    w1 = w1q_ref[...].astype(jnp.bfloat16)
    # fc1: [B, Dp](bf16) @ [Dp, Hp](bf16) -> f32 accumulate on the MXU.
    h = jnp.dot(x_ref[...], w1, preferred_element_type=jnp.float32)
    h = jnp.maximum(h * scale_ref[...] + b1_ref[...], 0.0)      # scale+bias+ReLU (VPU)
    # fc2 as VPU multiply + lane (XLU) reduction against w2 stored as [1, Hp].
    # Padded hidden lanes have w2 == 0, so they contribute nothing.
    z = jnp.sum(h * w2_ref[...], axis=-1, keepdims=True) + b2_ref[...]
    # Sigmoid: clamp so exp never overflows, exp + approx reciprocal on the EUP.
    z = jnp.clip(z, -30.0, 30.0)
    o_ref[...] = pl.reciprocal(1.0 + jnp.exp(-z), approx=True)


def spam_classifier_forward(x_bf16, w1_q, scale, b1, w2_row, b2):
    B = x_bf16.shape[0]
    assert B % TILE_B == 0
    grid = (B // TILE_B,)   # == (1,) at BATCH=128: single step, no pipeline overhead
    return pl.pallas_call(
        spam_classifier_kernel,
        out_shape=jax.ShapeDtypeStruct((B, 1), jnp.float32),
        grid=grid,
        in_specs=[
            pl.BlockSpec((TILE_B, INPUT_PAD), lambda i: (i, 0)),     # x tile (bf16)
            pl.BlockSpec((INPUT_PAD, HIDDEN_PAD), lambda i: (0, 0)),  # w1 (int8, resident)
            pl.BlockSpec((1, HIDDEN_PAD), lambda i: (0, 0)),          # per-column scale
            pl.BlockSpec((1, HIDDEN_PAD), lambda i: (0, 0)),          # b1
            pl.BlockSpec((1, HIDDEN_PAD), lambda i: (0, 0)),          # w2 row
            pl.BlockSpec((1, 1), lambda i: (0, 0)),                   # b2
        ],
        out_specs=pl.BlockSpec((TILE_B, 1), lambda i: (i, 0)),
        compiler_params=pltpu.CompilerParams(
            dimension_semantics=("arbitrary",),
        ),
    )(x_bf16, w1_q, scale, b1, w2_row, b2)


def init_params(key):
    # Deterministic init mimicking nn.Linear's U(-1/sqrt(fan_in), 1/sqrt(fan_in)),
    # stored pre-transposed (x @ w1), zero-padded on D and H, w1 quantized to
    # per-hidden-column symmetric int8.
    k1, k2, k3, k4 = jax.random.split(key, 4)
    bound1 = 1.0 / np.sqrt(INPUT_DIM)
    bound2 = 1.0 / np.sqrt(HIDDEN_DIM)
    w1 = jax.random.uniform(k1, (INPUT_DIM, HIDDEN_DIM), jnp.float32, -bound1, bound1)
    b1 = jax.random.uniform(k2, (1, HIDDEN_DIM), jnp.float32, -bound1, bound1)
    w2 = jax.random.uniform(k3, (HIDDEN_DIM,), jnp.float32, -bound2, bound2)
    b2 = jax.random.uniform(k4, (1, 1), jnp.float32, -bound2, bound2)

    # Per-column symmetric int8 quantization of w1.
    absmax = jnp.max(jnp.abs(w1), axis=0)                     # [H]
    scale = jnp.where(absmax > 0, absmax / 127.0, 1.0)        # [H]
    w1_q = jnp.round(w1 / scale).astype(jnp.int8)             # [D, H]

    pad_d = INPUT_PAD - INPUT_DIM
    pad_h = HIDDEN_PAD - HIDDEN_DIM
    w1_qp = jnp.pad(w1_q, ((0, pad_d), (0, pad_h)))                     # [Dp, Hp] int8
    scale_p = jnp.pad(scale, ((0, pad_h),), constant_values=1.0)        # [Hp]
    scale_p = scale_p.reshape(1, HIDDEN_PAD).astype(jnp.float32)        # [1, Hp]
    b1_p = jnp.pad(b1, ((0, 0), (0, pad_h)))                            # [1, Hp]
    w2_row = jnp.pad(w2, ((0, pad_h),)).reshape(1, HIDDEN_PAD)          # [1, Hp], pad = 0

    return w1_qp, scale_p, b1_p, w2_row, b2


def reference_forward(x_bf16, w1_q, scale, b1, w2_row, b2):
    # Pure-JAX reference on the same quantized inputs, f32 math.
    x32 = x_bf16.astype(jnp.float32)
    w1_deq = w1_q.astype(jnp.float32) * scale                 # [Dp, Hp]
    h = jnp.maximum(x32 @ w1_deq + b1, 0.0)
    z = jnp.sum(h * w2_row, axis=-1, keepdims=True) + b2
    return jax.nn.sigmoid(z)


if __name__ == "__main__":
    key = jax.random.PRNGKey(0)
    kx, kp = jax.random.split(key)
    # Bag-of-words-ish activations, zero-padded D 5000 -> 5120 (pad contributes 0).
    x = jax.random.uniform(kx, (BATCH, INPUT_DIM), jnp.float32)
    x = jnp.pad(x, ((0, 0), (0, INPUT_PAD - INPUT_DIM)))
    x_bf16 = x.astype(jnp.bfloat16)

    w1_q, scale, b1, w2_row, b2 = init_params(kp)

    out = spam_classifier_forward(x_bf16, w1_q, scale, b1, w2_row, b2)
    jax.block_until_ready(out)

    ref = reference_forward(x_bf16, w1_q, scale, b1, w2_row, b2)
    np.testing.assert_allclose(np.asarray(out), np.asarray(ref), rtol=1e-2, atol=1e-2)

    print("KERNEL_OK")
</pallas_src>

<mosaic_0001>
module attributes {stable_mosaic.version = 11 : i64} {
  func.func @spam_classifier_kernel(%arg0: i32, %arg1: memref<128x5120xbf16, #tpu.memory_space<vmem>>, %arg2: memref<5120x128xi8, #tpu.memory_space<vmem>>, %arg3: memref<1x128xf32, #tpu.memory_space<vmem>>, %arg4: memref<1x128xf32, #tpu.memory_space<vmem>>, %arg5: memref<1x128xf32, #tpu.memory_space<vmem>>, %arg6: memref<1x1xf32, #tpu.memory_space<vmem>>, %arg7: memref<128x1xf32, #tpu.memory_space<vmem>>) attributes {dimension_semantics = [#tpu.dimension_semantics<arbitrary>], iteration_bounds = array<i64: 1>, scalar_prefetch = 0 : i64, scratch_operands = 0 : i64, tpu.core_type = #tpu.core_type<tc>, window_params = [{transform_indices = @transform_0, window_bounds = array<i64: 128, 5120>}, {pipeline_mode = #tpu.pipeline_mode<synchronous>, transform_indices = @transform_1, window_bounds = array<i64: 5120, 128>}, {pipeline_mode = #tpu.pipeline_mode<synchronous>, transform_indices = @transform_2, window_bounds = array<i64: 1, 128>}, {pipeline_mode = #tpu.pipeline_mode<synchronous>, transform_indices = @transform_3, window_bounds = array<i64: 1, 128>}, {pipeline_mode = #tpu.pipeline_mode<synchronous>, transform_indices = @transform_4, window_bounds = array<i64: 1, 128>}, {pipeline_mode = #tpu.pipeline_mode<synchronous>, transform_indices = @transform_5, window_bounds = array<i64: 1, 1>}, {transform_indices = @transform_6, window_bounds = array<i64: 128, 1>}]} {
    %c0 = arith.constant 0 : index
    %c0_0 = arith.constant 0 : index
    %0 = vector.load %arg2[%c0, %c0_0] : memref<5120x128xi8, #tpu.memory_space<vmem>>, vector<5120x128xi8>
    %1 = arith.sitofp %0 : vector<5120x128xi8> to vector<5120x128xbf16>
    %c0_1 = arith.constant 0 : index
    %c0_2 = arith.constant 0 : index
    %2 = vector.load %arg1[%c0_1, %c0_2] : memref<128x5120xbf16, #tpu.memory_space<vmem>>, vector<128x5120xbf16>
    %cst = arith.constant dense<0.000000e+00> : vector<128x128xf32>
    %3 = tpu.matmul %2, %1, %cst {dimension_numbers = #tpu.dot_dimension_numbers<[1], [0], [0], [1], [0, 0, 1, 1], [], []>} : vector<128x5120xbf16>, vector<5120x128xbf16>, vector<128x128xf32> -> vector<128x128xf32>
    %c0_3 = arith.constant 0 : index
    %c0_4 = arith.constant 0 : index
    %4 = vector.load %arg3[%c0_3, %c0_4] : memref<1x128xf32, #tpu.memory_space<vmem>>, vector<1x128xf32>
    %5 = vector.broadcast %4 : vector<1x128xf32> to vector<128x128xf32>
    %6 = arith.mulf %3, %5 : vector<128x128xf32>
    %c0_5 = arith.constant 0 : index
    %c0_6 = arith.constant 0 : index
    %7 = vector.load %arg4[%c0_5, %c0_6] : memref<1x128xf32, #tpu.memory_space<vmem>>, vector<1x128xf32>
    %8 = vector.broadcast %7 : vector<1x128xf32> to vector<128x128xf32>
    %9 = arith.addf %6, %8 : vector<128x128xf32>
    %cst_7 = arith.constant 0.000000e+00 : f32
    %10 = vector.broadcast %cst_7 : f32 to vector<128x128xf32>
    %11 = arith.maximumf %9, %10 : vector<128x128xf32>
    %c0_8 = arith.constant 0 : index
    %c0_9 = arith.constant 0 : index
    %12 = vector.load %arg5[%c0_8, %c0_9] : memref<1x128xf32, #tpu.memory_space<vmem>>, vector<1x128xf32>
    %13 = vector.broadcast %12 : vector<1x128xf32> to vector<128x128xf32>
    %14 = arith.mulf %11, %13 : vector<128x128xf32>
    %cst_10 = arith.constant dense<0.000000e+00> : vector<128xf32>
    %15 = vector.multi_reduction <add>, %14, %cst_10 [1] : vector<128x128xf32> to vector<128xf32>
    %16 = vector.shape_cast %15 : vector<128xf32> to vector<128x1xf32>
    %c0_11 = arith.constant 0 : index
    %c0_12 = arith.constant 0 : index
    %17 = vector.load %arg6[%c0_11, %c0_12] : memref<1x1xf32, #tpu.memory_space<vmem>>, vector<1x1xf32>
    %18 = vector.broadcast %17 : vector<1x1xf32> to vector<128x1xf32>
    %19 = arith.addf %16, %18 : vector<128x1xf32>
    %cst_13 = arith.constant -3.000000e+01 : f32
    %cst_14 = arith.constant 3.000000e+01 : f32
    %20 = vector.broadcast %cst_13 : f32 to vector<128x1xf32>
    %21 = arith.maximumf %20, %19 : vector<128x1xf32>
    %22 = vector.broadcast %cst_14 : f32 to vector<128x1xf32>
    %23 = arith.minimumf %22, %21 : vector<128x1xf32>
    %cst_15 = arith.constant 0.000000e+00 : f32
    %24 = vector.broadcast %cst_15 : f32 to vector<128x1xf32>
    %25 = arith.subf %24, %23 : vector<128x1xf32>
    %26 = math.exp %25 : vector<128x1xf32>
    %cst_16 = arith.constant 1.000000e+00 : f32
    %27 = vector.broadcast %cst_16 : f32 to vector<128x1xf32>
    %28 = arith.addf %27, %26 : vector<128x1xf32>
    %29 = tpu.reciprocal %28 {approx = true} : vector<128x1xf32> -> vector<128x1xf32>
    %c0_17 = arith.constant 0 : index
    %c0_18 = arith.constant 0 : index
    %30 = vector.load %arg7[%c0_17, %c0_18] : memref<128x1xf32, #tpu.memory_space<vmem>>, vector<128x1xf32>
    tpu.vector_store %arg7[%c0_17, %c0_18], %29 {strides = array<i32>} : memref<128x1xf32, #tpu.memory_space<vmem>>, vector<128x1xf32>,
    return
  }
  func.func @transform_0(%arg0: i32) -> (i32, i32) {
    %c0_i32 = arith.constant 0 : i32
    %c0_i32_0 = arith.constant 0 : i32
    return %arg0, %c0_i32 : i32, i32
  }
  func.func @transform_1(%arg0: i32) -> (i32, i32) {
    %c0_i32 = arith.constant 0 : i32
    %c0_i32_0 = arith.constant 0 : i32
    %c0_i32_1 = arith.constant 0 : i32
    return %c0_i32, %c0_i32_0 : i32, i32
  }
  func.func @transform_2(%arg0: i32) -> (i32, i32) {
    %c0_i32 = arith.constant 0 : i32
    %c0_i32_0 = arith.constant 0 : i32
    %c0_i32_1 = arith.constant 0 : i32
    return %c0_i32, %c0_i32_0 : i32, i32
  }
  func.func @transform_3(%arg0: i32) -> (i32, i32) {
    %c0_i32 = arith.constant 0 : i32
    %c0_i32_0 = arith.constant 0 : i32
    %c0_i32_1 = arith.constant 0 : i32
    return %c0_i32, %c0_i32_0 : i32, i32
  }
  func.func @transform_4(%arg0: i32) -> (i32, i32) {
    %c0_i32 = arith.constant 0 : i32
    %c0_i32_0 = arith.constant 0 : i32
    %c0_i32_1 = arith.constant 0 : i32
    return %c0_i32, %c0_i32_0 : i32, i32
  }
  func.func @transform_5(%arg0: i32) -> (i32, i32) {
    %c0_i32 = arith.constant 0 : i32
    %c0_i32_0 = arith.constant 0 : i32
    %c0_i32_1 = arith.constant 0 : i32
    return %c0_i32, %c0_i32_0 : i32, i32
  }
  func.func @transform_6(%arg0: i32) -> (i32, i32) {
    %c0_i32 = arith.constant 0 : i32
    %c0_i32_0 = arith.constant 0 : i32
    return %arg0, %c0_i32 : i32, i32
  }
}

</mosaic_0001>

<llo_original>
// kernel: tpu_custom_call.1
$region0: #{tpu_custom_call.1}
  #allocation0 [shape = 'u32[]', space=smem, size = 0x4, offset = 0x4, fixed_abs, tag = 'smem constant byte address 0x4 - core index']
  #allocation1 [shape = 'u32[72,128]{1,0:T(1,128)}', space=vmem, size = 0x9000, scoped, tag = 'internal scratch']
  #allocation2 [shape = 'f32[1,1]{1,0:T(1,128)S(1)}', space=vmem, size = 0x200, scoped, tag = 'scoped memory for tpu_custom_call.1']
  %s0 = inlined_call_operand.hbm [shape: bf16[128,5120], index: 0, kind: input, shape index: {}]
  %s1 = inlined_call_operand.hbm [shape: s8[5120,128], index: 1, kind: input, shape index: {}]
  %s2 = inlined_call_operand.hbm [shape: f32[1,128], index: 2, kind: input, shape index: {}]
  %s3 = inlined_call_operand.hbm [shape: f32[1,128], index: 3, kind: input, shape index: {}]
  %s4 = inlined_call_operand.hbm [shape: f32[1,128], index: 4, kind: input, shape index: {}]
  %s5 = inlined_call_operand.<no memory space> [shape: f32[1,1], index: 5, kind: input, shape index: {}]
  %s6 = inlined_call_operand.vmem [shape: f32[128,1], index: 6, kind: output, shape index: {}]
  %s7 = sld [smem:[#allocation0]]
  $region54: #{tpu_custom_call.1} parent=0
    _
  %s9 = ssub.s32 1, %s7
  %s10 = scalar_select 0, %s9, %s7
  %v11 = vstv %s5
  %12 = vst [vmem:[#allocation2] sm:$0x1] %v11
  $region1: #{tpu_custom_call.1} parent=0
    #allocation3 [shape = 'u8[1310720]{0}', space=vmem, size = 0x140000, scoped, tag = 'input window, operand 0, single buffered']
    #allocation4 [shape = 's32[1]{0}', space=sflag, size = 0x4, scoped, tag = 'scoped memory for tpu_custom_call.1']
    #allocation5 [shape = 'u8[655360]{0}', space=vmem, size = 0xa0000, scoped, tag = 'input window, operand 1, single buffered']
    #allocation6 [shape = 's32[1]{0}', space=sflag, size = 0x4, scoped, tag = 'scoped memory for tpu_custom_call.1']
    #allocation7 [shape = 'u8[512]{0}', space=vmem, size = 0x400, scoped, tag = 'input window, operand 2, single buffered']
    #allocation8 [shape = 'u8[512]{0}', space=vmem, size = 0x400, scoped, tag = 'input window, operand 3, single buffered']
    #allocation9 [shape = 's32[1]{0}', space=sflag, size = 0x4, scoped, tag = 'scoped memory for tpu_custom_call.1']
    #allocation10 [shape = 'u8[512]{0}', space=vmem, size = 0x400, scoped, tag = 'input window, operand 4, single buffered']
    %13 = vsyncpa [#allocation4], 0
    %14 = vsyncpa [#allocation6], 0
    %15 = vsyncpa [#allocation9], 0
    // Predicated region
    $region2: #{tpu_custom_call.1} parent=1 // pred_check
      _
    $region3: #{tpu_custom_call.1} parent=1 // pred_check_branch
      %17 = sbr.rel (0) target = $region5
    $region4: #{tpu_custom_call.1} parent=1 // pred_region
      %19 = vsyncadd [#allocation4], 0
      %s20 = sshll.u32 %s0, 4
      %s21 = int_to_ptr.hbm [resolvable:$true] %s20
      %s22 = sshll.u32 [#allocation3], 4
      %s23 = int_to_ptr.vmem [resolvable:$true] %s22
      %28 = dma.hbm_to_vmem [thread:$0]  %s21, 40960, %s23, [#allocation4], 2560, 2560, 160
    $region5: #{tpu_custom_call.1} parent=1 // pred_fallthru
      _
    // Predicated region
    $region6: #{tpu_custom_call.1} parent=1 // pred_check
      _
    $region7: #{tpu_custom_call.1} parent=1 // pred_check_branch
      %30 = sbr.rel (0) target = $region9
    $region8: #{tpu_custom_call.1} parent=1 // pred_region
      %32 = vsyncadd [#allocation6], 0
      %s33 = sshll.u32 %s1, 4
      %s34 = int_to_ptr.hbm [resolvable:$true] %s33
      %s35 = sshll.u32 [#allocation5], 4
      %s36 = int_to_ptr.vmem [resolvable:$true] %s35
      %41 = dma.hbm_to_vmem [thread:$0]  %s34, 20480, %s36, [#allocation6], 128, 128, 8
    $region9: #{tpu_custom_call.1} parent=1 // pred_fallthru
      _
    // Predicated region
    $region10: #{tpu_custom_call.1} parent=1 // pred_check
      _
    $region11: #{tpu_custom_call.1} parent=1 // pred_check_branch
      %43 = sbr.rel (0) target = $region13
    $region12: #{tpu_custom_call.1} parent=1 // pred_region
      %45 = vsyncadd [#allocation6], 0
      %s47 = sshll.u32 %s2, 4
      %s48 = int_to_ptr.hbm [resolvable:$true] %s47
      %s49 = sshll.u32 [#allocation7], 4
      %s50 = int_to_ptr.vmem [resolvable:$true] %s49
      %52 = dma.hbm_to_vmem [thread:$0]  %s48, 16, %s50, [#allocation6]
    $region13: #{tpu_custom_call.1} parent=1 // pred_fallthru
      _
    // Predicated region
    $region14: #{tpu_custom_call.1} parent=1 // pred_check
      _
    $region15: #{tpu_custom_call.1} parent=1 // pred_check_branch
      %54 = sbr.rel (0) target = $region17
    $region16: #{tpu_custom_call.1} parent=1 // pred_region
      %56 = vsyncadd [#allocation9], 0
      %s58 = sshll.u32 %s3, 4
      %s59 = int_to_ptr.hbm [resolvable:$true] %s58
      %s60 = sshll.u32 [#allocation8], 4
      %s61 = int_to_ptr.vmem [resolvable:$true] %s60
      %63 = dma.hbm_to_vmem [thread:$0]  %s59, 16, %s61, [#allocation9]
    $region17: #{tpu_custom_call.1} parent=1 // pred_fallthru
      _
    // Predicated region
    $region18: #{tpu_custom_call.1} parent=1 // pred_check
      _
    $region19: #{tpu_custom_call.1} parent=1 // pred_check_branch
      %65 = sbr.rel (0) target = $region21
    $region20: #{tpu_custom_call.1} parent=1 // pred_region
      %67 = vsyncadd [#allocation9], 0
      %s69 = sshll.u32 %s4, 4
      %s70 = int_to_ptr.hbm [resolvable:$true] %s69
      %s71 = sshll.u32 [#allocation10], 4
      %s72 = int_to_ptr.vmem [resolvable:$true] %s71
      %74 = dma.hbm_to_vmem [thread:$0]  %s70, 16, %s72, [#allocation9]
    $region21: #{tpu_custom_call.1} parent=1 // pred_fallthru
      _
    // Predicated region
    $region22: #{tpu_custom_call.1} parent=1 // pred_check
      _
    $region23: #{tpu_custom_call.1} parent=1 // pred_check_branch
      %76 = sbr.rel (0) target = $region25
    $region24: #{tpu_custom_call.1} parent=1 // pred_region
      _
    $region25: #{tpu_custom_call.1} parent=1 // pred_fallthru
      _
    // Predicated region
    $region26: #{tpu_custom_call.1} parent=1 // pred_check
      _
    $region27: #{tpu_custom_call.1} parent=1 // pred_check_branch
      %78 = sbr.rel (0) target = $region29
    $region28: #{tpu_custom_call.1} parent=1 // pred_region
      %80 = dma.done [#allocation4], 40960
    $region29: #{tpu_custom_call.1} parent=1 // pred_fallthru
      _
    // Predicated region
    $region30: #{tpu_custom_call.1} parent=1 // pred_check
      _
    $region31: #{tpu_custom_call.1} parent=1 // pred_check_branch
      %82 = sbr.rel (0) target = $region33
    $region32: #{tpu_custom_call.1} parent=1 // pred_region
      %84 = dma.done [#allocation6], 20480
    $region33: #{tpu_custom_call.1} parent=1 // pred_fallthru
      _
    // Predicated region
    $region34: #{tpu_custom_call.1} parent=1 // pred_check
      _
    $region35: #{tpu_custom_call.1} parent=1 // pred_check_branch
      %86 = sbr.rel (0) target = $region37
    $region36: #{tpu_custom_call.1} parent=1 // pred_region
      %88 = dma.done [#allocation6], 16
    $region37: #{tpu_custom_call.1} parent=1 // pred_fallthru
      _
    // Predicated region
    $region38: #{tpu_custom_call.1} parent=1 // pred_check
      _
    $region39: #{tpu_custom_call.1} parent=1 // pred_check_branch
      %90 = sbr.rel (0) target = $region41
    $region40: #{tpu_custom_call.1} parent=1 // pred_region
      %92 = dma.done [#allocation9], 16
    $region41: #{tpu_custom_call.1} parent=1 // pred_fallthru
      _
    // Predicated region
    $region42: #{tpu_custom_call.1} parent=1 // pred_check
      _
    $region43: #{tpu_custom_call.1} parent=1 // pred_check_branch
      %94 = sbr.rel (0) target = $region45
    $region44: #{tpu_custom_call.1} parent=1 // pred_region
      %96 = dma.done [#allocation9], 16
    $region45: #{tpu_custom_call.1} parent=1 // pred_fallthru
      _
    %v97 = vld [vmem:[#allocation5] sm:$0xff]
    %v98 = vld [vmem:[#allocation5 + $0x8] sm:$0xff]
    %v99 = vld [vmem:[#allocation5 + $0x10] sm:$0xff]
    %v100 = vld [vmem:[#allocation5 + $0x18] sm:$0xff]
    %v101 = vld [vmem:[#allocation5 + $0x20] sm:$0xff]
    %v102 = vld [vmem:[#allocation5 + $0x28] sm:$0xff]
    %v103 = vld [vmem:[#allocation5 + $0x30] sm:$0xff]
    %v104 = vld [vmem:[#allocation5 + $0x38] sm:$0xff]
    %v105 = vld [vmem:[#allocation5 + $0x40] sm:$0xff]
    %v106 = vld [vmem:[#allocation5 + $0x48] sm:$0xff]
    %v107 = vld [vmem:[#allocation5 + $0x50] sm:$0xff]
    %v108 = vld [vmem:[#allocation5 + $0x58] sm:$0xff]
    %v109 = vld [vmem:[#allocation5 + $0x60] sm:$0xff]
    %v110 = vld [vmem:[#allocation5 + $0x68] sm:$0xff]
    %v111 = vld [vmem:[#allocation5 + $0x70] sm:$0xff]
    %v112 = vld [vmem:[#allocation5 + $0x78] sm:$0xff]
    %v113 = vld [vmem:[#allocation5 + $0x80] sm:$0xff]
    %v114 = vld [vmem:[#allocation5 + $0x88] sm:$0xff]
    %v115 = vld [vmem:[#allocation5 + $0x90] sm:$0xff]
    %v116 = vld [vmem:[#allocation5 + $0x98] sm:$0xff]
    %v117 = vld [vmem:[#allocation5 + $0xa0] sm:$0xff]
    %v118 = vld [vmem:[#allocation5 + $0xa8] sm:$0xff]
    %v119 = vld [vmem:[#allocation5 + $0xb0] sm:$0xff]
    %v120 = vld [vmem:[#allocation5 + $0xb8] sm:$0xff]
    %v121 = vld [vmem:[#allocation5 + $0xc0] sm:$0xff]
    %v122 = vld [vmem:[#allocation5 + $0xc8] sm:$0xff]
    %v123 = vld [vmem:[#allocation5 + $0xd0] sm:$0xff]
    %v124 = vld [vmem:[#allocation5 + $0xd8] sm:$0xff]
    %v125 = vld [vmem:[#allocation5 + $0xe0] sm:$0xff]
    %v126 = vld [vmem:[#allocation5 + $0xe8] sm:$0xff]
    %v127 = vld [vmem:[#allocation5 + $0xf0] sm:$0xff]
    %v128 = vld [vmem:[#allocation5 + $0xf8] sm:$0xff]
    %v129 = vld [vmem:[#allocation5 + $0x100] sm:$0xff]
    %v130 = vld [vmem:[#allocation5 + $0x108] sm:$0xff]
    %v131 = vld [vmem:[#allocation5 + $0x110] sm:$0xff]
    %v132 = vld [vmem:[#allocation5 + $0x118] sm:$0xff]
    %v133 = vld [vmem:[#allocation5 + $0x120] sm:$0xff]
    %v134 = vld [vmem:[#allocation5 + $0x128] sm:$0xff]
    %v135 = vld [vmem:[#allocation5 + $0x130] sm:$0xff]
    %v136 = vld [vmem:[#allocation5 + $0x138] sm:$0xff]
    %v137 = vld [vmem:[#allocation5 + $0x140] sm:$0xff]
    %v138 = vld [vmem:[#allocation5 + $0x148] sm:$0xff]
    %v139 = vld [vmem:[#allocation5 + $0x150] sm:$0xff]
    %v140 = vld [vmem:[#allocation5 + $0x158] sm:$0xff]
    %v141 = vld [vmem:[#allocation5 + $0x160] sm:$0xff]
    %v142 = vld [vmem:[#allocation5 + $0x168] sm:$0xff]
    %v143 = vld [vmem:[#allocation5 + $0x170] sm:$0xff]
    %v144 = vld [vmem:[#allocation5 + $0x178] sm:$0xff]
    %v145 = vld [vmem:[#allocation5 + $0x180] sm:$0xff]
    %v146 = vld [vmem:[#allocation5 + $0x188] sm:$0xff]
    %v147 = vld [vmem:[#allocation5 + $0x190] sm:$0xff]
    %v148 = vld [vmem:[#allocation5 + $0x198] sm:$0xff]
    %v149 = vld [vmem:[#allocation5 + $0x1a0] sm:$0xff]
    %v150 = vld [vmem:[#allocation5 + $0x1a8] sm:$0xff]
    %v151 = vld [vmem:[#allocation5 + $0x1b0] sm:$0xff]
    %v152 = vld [vmem:[#allocation5 + $0x1b8] sm:$0xff]
    %v153 = vld [vmem:[#allocation5 + $0x1c0] sm:$0xff]
    %v154 = vld [vmem:[#allocation5 + $0x1c8] sm:$0xff]
    %v155 = vld [vmem:[#allocation5 + $0x1d0] sm:$0xff]
    %v156 = vld [vmem:[#allocation5 + $0x1d8] sm:$0xff]
    %v157 = vld [vmem:[#allocation5 + $0x1e0] sm:$0xff]
    %v158 = vld [vmem:[#allocation5 + $0x1e8] sm:$0xff]
    %v159 = vld [vmem:[#allocation5 + $0x1f0] sm:$0xff]
    %v160 = vld [vmem:[#allocation5 + $0x1f8] sm:$0xff]
    %v161 = vld [vmem:[#allocation5 + $0x200] sm:$0xff]
    %v162 = vld [vmem:[#allocation5 + $0x208] sm:$0xff]
    %v163 = vld [vmem:[#allocation5 + $0x210] sm:$0xff]
    %v164 = vld [vmem:[#allocation5 + $0x218] sm:$0xff]
    %v165 = vld [vmem:[#allocation5 + $0x220] sm:$0xff]
    %v166 = vld [vmem:[#allocation5 + $0x228] sm:$0xff]
    %v167 = vld [vmem:[#allocation5 + $0x230] sm:$0xff]
    %v168 = vld [vmem:[#allocation5 + $0x238] sm:$0xff]
    %v169 = vld [vmem:[#allocation5 + $0x240] sm:$0xff]
    %v170 = vld [vmem:[#allocation5 + $0x248] sm:$0xff]
    %v171 = vld [vmem:[#allocation5 + $0x250] sm:$0xff]
    %v172 = vld [vmem:[#allocation5 + $0x258] sm:$0xff]
    %v173 = vld [vmem:[#allocation5 + $0x260] sm:$0xff]
    %v174 = vld [vmem:[#allocation5 + $0x268] sm:$0xff]
    %v175 = vld [vmem:[#allocation5 + $0x270] sm:$0xff]
    %v176 = vld [vmem:[#allocation5 + $0x278] sm:$0xff]
    %v177 = vld [vmem:[#allocation5 + $0x280] sm:$0xff]
    %v178 = vld [vmem:[#allocation5 + $0x288] sm:$0xff]
    %v179 = vld [vmem:[#allocation5 + $0x290] sm:$0xff]
    %v180 = vld [vmem:[#allocation5 + $0x298] sm:$0xff]
    %v181 = vld [vmem:[#allocation5 + $0x2a0] sm:$0xff]
    %v182 = vld [vmem:[#allocation5 + $0x2a8] sm:$0xff]
    %v183 = vld [vmem:[#allocation5 + $0x2b0] sm:$0xff]
    %v184 = vld [vmem:[#allocation5 + $0x2b8] sm:$0xff]
    %v185 = vld [vmem:[#allocation5 + $0x2c0] sm:$0xff]
    %v186 = vld [vmem:[#allocation5 + $0x2c8] sm:$0xff]
    %v187 = vld [vmem:[#allocation5 + $0x2d0] sm:$0xff]
    %v188 = vld [vmem:[#allocation5 + $0x2d8] sm:$0xff]
    %v189 = vld [vmem:[#allocation5 + $0x2e0] sm:$0xff]
    %v190 = vld [vmem:[#allocation5 + $0x2e8] sm:$0xff]
    %v191 = vld [vmem:[#allocation5 + $0x2f0] sm:$0xff]
    %v192 = vld [vmem:[#allocation5 + $0x2f8] sm:$0xff]
    %v193 = vld [vmem:[#allocation5 + $0x300] sm:$0xff]
    %v194 = vld [vmem:[#allocation5 + $0x308] sm:$0xff]
    %v195 = vld [vmem:[#allocation5 + $0x310] sm:$0xff]
    %v196 = vld [vmem:[#allocation5 + $0x318] sm:$0xff]
    %v197 = vld [vmem:[#allocation5 + $0x320] sm:$0xff]
    %v198 = vld [vmem:[#allocation5 + $0x328] sm:$0xff]
    %v199 = vld [vmem:[#allocation5 + $0x330] sm:$0xff]
    %v200 = vld [vmem:[#allocation5 + $0x338] sm:$0xff]
    %v201 = vld [vmem:[#allocation5 + $0x340] sm:$0xff]
    %v202 = vld [vmem:[#allocation5 + $0x348] sm:$0xff]
    %v203 = vld [vmem:[#allocation5 + $0x350] sm:$0xff]
    %v204 = vld [vmem:[#allocation5 + $0x358] sm:$0xff]
    %v205 = vld [vmem:[#allocation5 + $0x360] sm:$0xff]
    %v206 = vld [vmem:[#allocation5 + $0x368] sm:$0xff]
    %v207 = vld [vmem:[#allocation5 + $0x370] sm:$0xff]
    %v208 = vld [vmem:[#allocation5 + $0x378] sm:$0xff]
    %v209 = vld [vmem:[#allocation5 + $0x380] sm:$0xff]
    %v210 = vld [vmem:[#allocation5 + $0x388] sm:$0xff]
    %v211 = vld [vmem:[#allocation5 + $0x390] sm:$0xff]
    %v212 = vld [vmem:[#allocation5 + $0x398] sm:$0xff]
    %v213 = vld [vmem:[#allocation5 + $0x3a0] sm:$0xff]
    %v214 = vld [vmem:[#allocation5 + $0x3a8] sm:$0xff]
    %v215 = vld [vmem:[#allocation5 + $0x3b0] sm:$0xff]
    %v216 = vld [vmem:[#allocation5 + $0x3b8] sm:$0xff]
    %v217 = vld [vmem:[#allocation5 + $0x3c0] sm:$0xff]
    %v218 = vld [vmem:[#allocation5 + $0x3c8] sm:$0xff]
    %v219 = vld [vmem:[#allocation5 + $0x3d0] sm:$0xff]
    %v220 = vld [vmem:[#allocation5 + $0x3d8] sm:$0xff]
    %v221 = vld [vmem:[#allocation5 + $0x3e0] sm:$0xff]
    %v222 = vld [vmem:[#allocation5 + $0x3e8] sm:$0xff]
    %v223 = vld [vmem:[#allocation5 + $0x3f0] sm:$0xff]
    %v224 = vld [vmem:[#allocation5 + $0x3f8] sm:$0xff]
    %v225 = vld [vmem:[#allocation5 + $0x400] sm:$0xff]
    %v226 = vld [vmem:[#allocation5 + $0x408] sm:$0xff]
    %v227 = vld [vmem:[#allocation5 + $0x410] sm:$0xff]
    %v228 = vld [vmem:[#allocation5 + $0x418] sm:$0xff]
    %v229 = vld [vmem:[#allocation5 + $0x420] sm:$0xff]
    %v230 = vld [vmem:[#allocation5 + $0x428] sm:$0xff]
    %v231 = vld [vmem:[#allocation5 + $0x430] sm:$0xff]
    %v232 = vld [vmem:[#allocation5 + $0x438] sm:$0xff]
    %v233 = vld [vmem:[#allocation5 + $0x440] sm:$0xff]
    %v234 = vld [vmem:[#allocation5 + $0x448] sm:$0xff]
    %v235 = vld [vmem:[#allocation5 + $0x450] sm:$0xff]
    %v236 = vld [vmem:[#allocation5 + $0x458] sm:$0xff]
    %v237 = vld [vmem:[#allocation5 + $0x460] sm:$0xff]
    %v238 = vld [vmem:[#allocation5 + $0x468] sm:$0xff]
    %v239 = vld [vmem:[#allocation5 + $0x470] sm:$0xff]
    %v240 = vld [vmem:[#allocation5 + $0x478] sm:$0xff]
    %v241 = vld [vmem:[#allocation5 + $0x480] sm:$0xff]
    %v242 = vld [vmem:[#allocation5 + $0x488] sm:$0xff]
    %v243 = vld [vmem:[#allocation5 + $0x490] sm:$0xff]
    %v244 = vld [vmem:[#allocation5 + $0x498] sm:$0xff]
    %v245 = vld [vmem:[#allocation5 + $0x4a0] sm:$0xff]
    %v246 = vld [vmem:[#allocation5 + $0x4a8] sm:$0xff]
    %v247 = vld [vmem:[#allocation5 + $0x4b0] sm:$0xff]
    %v248 = vld [vmem:[#allocation5 + $0x4b8] sm:$0xff]
    %v249 = vld [vmem:[#allocation5 + $0x4c0] sm:$0xff]
    %v250 = vld [vmem:[#allocation5 + $0x4c8] sm:$0xff]
    %v251 = vld [vmem:[#allocation5 + $0x4d0] sm:$0xff]
    %v252 = vld [vmem:[#allocation5 + $0x4d8] sm:$0xff]
    %v253 = vld [vmem:[#allocation5 + $0x4e0] sm:$0xff]
    %v254 = vld [vmem:[#allocation5 + $0x4e8] sm:$0xff]
    %v255 = vld [vmem:[#allocation5 + $0x4f0] sm:$0xff]
    %v256 = vld [vmem:[#allocation5 + $0x4f8] sm:$0xff]
    %v257 = vunpack.c.0.s8 %v97
    %v258 = vunpack.c.1.s8 %v97
    %v259 = vunpack.c.2.s8 %v97
    %v260 = vunpack.c.3.s8 %v97
    %v261 = vunpack.c.0.s8 %v98
    %v262 = vunpack.c.1.s8 %v98
    %v263 = vunpack.c.2.s8 %v98
    %v264 = vunpack.c.3.s8 %v98
    %v265 = vunpack.c.0.s8 %v99
    %v266 = vunpack.c.1.s8 %v99
    %v267 = vunpack.c.2.s8 %v99
    %v268 = vunpack.c.3.s8 %v99
    %v269 = vunpack.c.0.s8 %v100
    %v270 = vunpack.c.1.s8 %v100
    %v271 = vunpack.c.2.s8 %v100
    %v272 = vunpack.c.3.s8 %v100
    %v273 = vunpack.c.0.s8 %v101
    %v274 = vunpack.c.1.s8 %v101
    %v275 = vunpack.c.2.s8 %v101
    %v276 = vunpack.c.3.s8 %v101
    %v277 = vunpack.c.0.s8 %v102
    %v278 = vunpack.c.1.s8 %v102
    %v279 = vunpack.c.2.s8 %v102
    %v280 = vunpack.c.3.s8 %v102
    %v281 = vunpack.c.0.s8 %v103
    %v282 = vunpack.c.1.s8 %v103
    %v283 = vunpack.c.2.s8 %v103
    %v284 = vunpack.c.3.s8 %v103
    %v285 = vunpack.c.0.s8 %v104
    %v286 = vunpack.c.1.s8 %v104
    %v287 = vunpack.c.2.s8 %v104
    %v288 = vunpack.c.3.s8 %v104
    %v289 = vunpack.c.0.s8 %v105
    %v290 = vunpack.c.1.s8 %v105
    %v291 = vunpack.c.2.s8 %v105
    %v292 = vunpack.c.3.s8 %v105
    %v293 = vunpack.c.0.s8 %v106
    %v294 = vunpack.c.1.s8 %v106
    %v295 = vunpack.c.2.s8 %v106
    %v296 = vunpack.c.3.s8 %v106
    %v297 = vunpack.c.0.s8 %v107
    %v298 = vunpack.c.1.s8 %v107
    %v299 = vunpack.c.2.s8 %v107
    %v300 = vunpack.c.3.s8 %v107
    %v301 = vunpack.c.0.s8 %v108
    %v302 = vunpack.c.1.s8 %v108
    %v303 = vunpack.c.2.s8 %v108
    %v304 = vunpack.c.3.s8 %v108
    %v305 = vunpack.c.0.s8 %v109
    %v306 = vunpack.c.1.s8 %v109
    %v307 = vunpack.c.2.s8 %v109
    %v308 = vunpack.c.3.s8 %v109
    %v309 = vunpack.c.0.s8 %v110
    %v310 = vunpack.c.1.s8 %v110
    %v311 = vunpack.c.2.s8 %v110
    %v312 = vunpack.c.3.s8 %v110
    %v313 = vunpack.c.0.s8 %v111
    %v314 = vunpack.c.1.s8 %v111
    %v315 = vunpack.c.2.s8 %v111
    %v316 = vunpack.c.3.s8 %v111
    %v317 = vunpack.c.0.s8 %v112
    %v318 = vunpack.c.1.s8 %v112
    %v319 = vunpack.c.2.s8 %v112
    %v320 = vunpack.c.3.s8 %v112
    %v321 = vunpack.c.0.s8 %v113
    %v322 = vunpack.c.1.s8 %v113
    %v323 = vunpack.c.2.s8 %v113
    %v324 = vunpack.c.3.s8 %v113
    %v325 = vunpack.c.0.s8 %v114
    %v326 = vunpack.c.1.s8 %v114
    %v327 = vunpack.c.2.s8 %v114
    %v328 = vunpack.c.3.s8 %v114
    %v329 = vunpack.c.0.s8 %v115
    %v330 = vunpack.c.1.s8 %v115
    %v331 = vunpack.c.2.s8 %v115
    %v332 = vunpack.c.3.s8 %v115
    %v333 = vunpack.c.0.s8 %v116
    %v334 = vunpack.c.1.s8 %v116
    %v335 = vunpack.c.2.s8 %v116
    %v336 = vunpack.c.3.s8 %v116
    %v337 = vunpack.c.0.s8 %v117
    %v338 = vunpack.c.1.s8 %v117
    %v339 = vunpack.c.2.s8 %v117
    %v340 = vunpack.c.3.s8 %v117
    %v341 = vunpack.c.0.s8 %v118
    %v342 = vunpack.c.1.s8 %v118
    %v343 = vunpack.c.2.s8 %v118
    %v344 = vunpack.c.3.s8 %v118
    %v345 = vunpack.c.0.s8 %v119
    %v346 = vunpack.c.1.s8 %v119
    %v347 = vunpack.c.2.s8 %v119
    %v348 = vunpack.c.3.s8 %v119
    %v349 = vunpack.c.0.s8 %v120
    %v350 = vunpack.c.1.s8 %v120
    %v351 = vunpack.c.2.s8 %v120
    %v352 = vunpack.c.3.s8 %v120
    %v353 = vunpack.c.0.s8 %v121
    %v354 = vunpack.c.1.s8 %v121
    %v355 = vunpack.c.2.s8 %v121
    %v356 = vunpack.c.3.s8 %v121
    %v357 = vunpack.c.0.s8 %v122
    %v358 = vunpack.c.1.s8 %v122
    %v359 = vunpack.c.2.s8 %v122
    %v360 = vunpack.c.3.s8 %v122
    %v361 = vunpack.c.0.s8 %v123
    %v362 = vunpack.c.1.s8 %v123
    %v363 = vunpack.c.2.s8 %v123
    %v364 = vunpack.c.3.s8 %v123
    %v365 = vunpack.c.0.s8 %v124
    %v366 = vunpack.c.1.s8 %v124
    %v367 = vunpack.c.2.s8 %v124
    %v368 = vunpack.c.3.s8 %v124
    %v369 = vunpack.c.0.s8 %v125
    %v370 = vunpack.c.1.s8 %v125
    %v371 = vunpack.c.2.s8 %v125
    %v372 = vunpack.c.3.s8 %v125
    %v373 = vunpack.c.0.s8 %v126
    %v374 = vunpack.c.1.s8 %v126
    %v375 = vunpack.c.2.s8 %v126
    %v376 = vunpack.c.3.s8 %v126
    %v377 = vunpack.c.0.s8 %v127
    %v378 = vunpack.c.1.s8 %v127
    %v379 = vunpack.c.2.s8 %v127
    %v380 = vunpack.c.3.s8 %v127
    %v381 = vunpack.c.0.s8 %v128
    %v382 = vunpack.c.1.s8 %v128
    %v383 = vunpack.c.2.s8 %v128
    %v384 = vunpack.c.3.s8 %v128
    %v385 = vunpack.c.0.s8 %v129
    %v386 = vunpack.c.1.s8 %v129
    %v387 = vunpack.c.2.s8 %v129
    %v388 = vunpack.c.3.s8 %v129
    %v389 = vunpack.c.0.s8 %v130
    %v390 = vunpack.c.1.s8 %v130
    %v391 = vunpack.c.2.s8 %v130
    %v392 = vunpack.c.3.s8 %v130
    %v393 = vunpack.c.0.s8 %v131
    %v394 = vunpack.c.1.s8 %v131
    %v395 = vunpack.c.2.s8 %v131
    %v396 = vunpack.c.3.s8 %v131
    %v397 = vunpack.c.0.s8 %v132
    %v398 = vunpack.c.1.s8 %v132
    %v399 = vunpack.c.2.s8 %v132
    %v400 = vunpack.c.3.s8 %v132
    %v401 = vunpack.c.0.s8 %v133
    %v402 = vunpack.c.1.s8 %v133
    %v403 = vunpack.c.2.s8 %v133
    %v404 = vunpack.c.3.s8 %v133
    %v405 = vunpack.c.0.s8 %v134
    %v406 = vunpack.c.1.s8 %v134
    %v407 = vunpack.c.2.s8 %v134
    %v408 = vunpack.c.3.s8 %v134
    %v409 = vunpack.c.0.s8 %v135
    %v410 = vunpack.c.1.s8 %v135
    %v411 = vunpack.c.2.s8 %v135
    %v412 = vunpack.c.3.s8 %v135
    %v413 = vunpack.c.0.s8 %v136
    %v414 = vunpack.c.1.s8 %v136
    %v415 = vunpack.c.2.s8 %v136
    %v416 = vunpack.c.3.s8 %v136
    %v417 = vunpack.c.0.s8 %v137
    %v418 = vunpack.c.1.s8 %v137
    %v419 = vunpack.c.2.s8 %v137
    %v420 = vunpack.c.3.s8 %v137
    %v421 = vunpack.c.0.s8 %v138
    %v422 = vunpack.c.1.s8 %v138
    %v423 = vunpack.c.2.s8 %v138
    %v424 = vunpack.c.3.s8 %v138
    %v425 = vunpack.c.0.s8 %v139
    %v426 = vunpack.c.1.s8 %v139
    %v427 = vunpack.c.2.s8 %v139
    %v428 = vunpack.c.3.s8 %v139
    %v429 = vunpack.c.0.s8 %v140
    %v430 = vunpack.c.1.s8 %v140
    %v431 = vunpack.c.2.s8 %v140
    %v432 = vunpack.c.3.s8 %v140
    %v433 = vunpack.c.0.s8 %v141
    %v434 = vunpack.c.1.s8 %v141
    %v435 = vunpack.c.2.s8 %v141
    %v436 = vunpack.c.3.s8 %v141
    %v437 = vunpack.c.0.s8 %v142
    %v438 = vunpack.c.1.s8 %v142
    %v439 = vunpack.c.2.s8 %v142
    %v440 = vunpack.c.3.s8 %v142
    %v441 = vunpack.c.0.s8 %v143
    %v442 = vunpack.c.1.s8 %v143
    %v443 = vunpack.c.2.s8 %v143
    %v444 = vunpack.c.3.s8 %v143
    %v445 = vunpack.c.0.s8 %v144
    %v446 = vunpack.c.1.s8 %v144
    %v447 = vunpack.c.2.s8 %v144
    %v448 = vunpack.c.3.s8 %v144
    %v449 = vunpack.c.0.s8 %v145
    %v450 = vunpack.c.1.s8 %v145
    %v451 = vunpack.c.2.s8 %v145
    %v452 = vunpack.c.3.s8 %v145
    %v453 = vunpack.c.0.s8 %v146
    %v454 = vunpack.c.1.s8 %v146
    %v455 = vunpack.c.2.s8 %v146
    %v456 = vunpack.c.3.s8 %v146
    %v457 = vunpack.c.0.s8 %v147
    %v458 = vunpack.c.1.s8 %v147
    %v459 = vunpack.c.2.s8 %v147
    %v460 = vunpack.c.3.s8 %v147
    %v461 = vunpack.c.0.s8 %v148
    %v462 = vunpack.c.1.s8 %v148
    %v463 = vunpack.c.2.s8 %v148
    %v464 = vunpack.c.3.s8 %v148
    %v465 = vunpack.c.0.s8 %v149
    %v466 = vunpack.c.1.s8 %v149
    %v467 = vunpack.c.2.s8 %v149
    %v468 = vunpack.c.3.s8 %v149
    %v469 = vunpack.c.0.s8 %v150
    %v470 = vunpack.c.1.s8 %v150
    %v471 = vunpack.c.2.s8 %v150
    %v472 = vunpack.c.3.s8 %v150
    %v473 = vunpack.c.0.s8 %v151
    %v474 = vunpack.c.1.s8 %v151
    %v475 = vunpack.c.2.s8 %v151
    %v476 = vunpack.c.3.s8 %v151
    %v477 = vunpack.c.0.s8 %v152
    %v478 = vunpack.c.1.s8 %v152
    %v479 = vunpack.c.2.s8 %v152
    %v480 = vunpack.c.3.s8 %v152
    %v481 = vunpack.c.0.s8 %v153
    %v482 = vunpack.c.1.s8 %v153
    %v483 = vunpack.c.2.s8 %v153
    %v484 = vunpack.c.3.s8 %v153
    %v485 = vunpack.c.0.s8 %v154
    %v486 = vunpack.c.1.s8 %v154
    %v487 = vunpack.c.2.s8 %v154
    %v488 = vunpack.c.3.s8 %v154
    %v489 = vunpack.c.0.s8 %v155
    %v490 = vunpack.c.1.s8 %v155
    %v491 = vunpack.c.2.s8 %v155
    %v492 = vunpack.c.3.s8 %v155
    %v493 = vunpack.c.0.s8 %v156
    %v494 = vunpack.c.1.s8 %v156
    %v495 = vunpack.c.2.s8 %v156
    %v496 = vunpack.c.3.s8 %v156
    %v497 = vunpack.c.0.s8 %v157
    %v498 = vunpack.c.1.s8 %v157
    %v499 = vunpack.c.2.s8 %v157
    %v500 = vunpack.c.3.s8 %v157
    %v501 = vunpack.c.0.s8 %v158
    %v502 = vunpack.c.1.s8 %v158
    %v503 = vunpack.c.2.s8 %v158
    %v504 = vunpack.c.3.s8 %v158
    %v505 = vunpack.c.0.s8 %v159
    %v506 = vunpack.c.1.s8 %v159
    %v507 = vunpack.c.2.s8 %v159
    %v508 = vunpack.c.3.s8 %v159
    %v509 = vunpack.c.0.s8 %v160
    %v510 = vunpack.c.1.s8 %v160
    %v511 = vunpack.c.2.s8 %v160
    %v512 = vunpack.c.3.s8 %v160
    %v513 = vunpack.c.0.s8 %v161
    %v514 = vunpack.c.1.s8 %v161
    %v515 = vunpack.c.2.s8 %v161
    %v516 = vunpack.c.3.s8 %v161
    %v517 = vunpack.c.0.s8 %v162
    %v518 = vunpack.c.1.s8 %v162
    %v519 = vunpack.c.2.s8 %v162
    %v520 = vunpack.c.3.s8 %v162
    %v521 = vunpack.c.0.s8 %v163
    %v522 = vunpack.c.1.s8 %v163
    %v523 = vunpack.c.2.s8 %v163
    %v524 = vunpack.c.3.s8 %v163
    %v525 = vunpack.c.0.s8 %v164
    %v526 = vunpack.c.1.s8 %v164
    %v527 = vunpack.c.2.s8 %v164
    %v528 = vunpack.c.3.s8 %v164
    %v529 = vunpack.c.0.s8 %v165
    %v530 = vunpack.c.1.s8 %v165
    %v531 = vunpack.c.2.s8 %v165
    %v532 = vunpack.c.3.s8 %v165
    %v533 = vunpack.c.0.s8 %v166
    %v534 = vunpack.c.1.s8 %v166
    %v535 = vunpack.c.2.s8 %v166
    %v536 = vunpack.c.3.s8 %v166
    %v537 = vunpack.c.0.s8 %v167
    %v538 = vunpack.c.1.s8 %v167
    %v539 = vunpack.c.2.s8 %v167
    %v540 = vunpack.c.3.s8 %v167
    %v541 = vunpack.c.0.s8 %v168
    %v542 = vunpack.c.1.s8 %v168
    %v543 = vunpack.c.2.s8 %v168
    %v544 = vunpack.c.3.s8 %v168
    %v545 = vunpack.c.0.s8 %v169
    %v546 = vunpack.c.1.s8 %v169
    %v547 = vunpack.c.2.s8 %v169
    %v548 = vunpack.c.3.s8 %v169
    %v549 = vunpack.c.0.s8 %v170
    %v550 = vunpack.c.1.s8 %v170
    %v551 = vunpack.c.2.s8 %v170
    %v552 = vunpack.c.3.s8 %v170
    %v553 = vunpack.c.0.s8 %v171
    %v554 = vunpack.c.1.s8 %v171
    %v555 = vunpack.c.2.s8 %v171
    %v556 = vunpack.c.3.s8 %v171
    %v557 = vunpack.c.0.s8 %v172
    %v558 = vunpack.c.1.s8 %v172
    %v559 = vunpack.c.2.s8 %v172
    %v560 = vunpack.c.3.s8 %v172
    %v561 = vunpack.c.0.s8 %v173
    %v562 = vunpack.c.1.s8 %v173
    %v563 = vunpack.c.2.s8 %v173
    %v564 = vunpack.c.3.s8 %v173
    %v565 = vunpack.c.0.s8 %v174
    %v566 = vunpack.c.1.s8 %v174
    %v567 = vunpack.c.2.s8 %v174
    %v568 = vunpack.c.3.s8 %v174
    %v569 = vunpack.c.0.s8 %v175
    %v570 = vunpack.c.1.s8 %v175
    %v571 = vunpack.c.2.s8 %v175
    %v572 = vunpack.c.3.s8 %v175
    %v573 = vunpack.c.0.s8 %v176
    %v574 = vunpack.c.1.s8 %v176
    %v575 = vunpack.c.2.s8 %v176
    %v576 = vunpack.c.3.s8 %v176
    %v577 = vunpack.c.0.s8 %v177
    %v578 = vunpack.c.1.s8 %v177
    %v579 = vunpack.c.2.s8 %v177
    %v580 = vunpack.c.3.s8 %v177
    %v581 = vunpack.c.0.s8 %v178
    %v582 = vunpack.c.1.s8 %v178
    %v583 = vunpack.c.2.s8 %v178
    %v584 = vunpack.c.3.s8 %v178
    %v585 = vunpack.c.0.s8 %v179
    %v586 = vunpack.c.1.s8 %v179
    %v587 = vunpack.c.2.s8 %v179
    %v588 = vunpack.c.3.s8 %v179
    %v589 = vunpack.c.0.s8 %v180
    %v590 = vunpack.c.1.s8 %v180
    %v591 = vunpack.c.2.s8 %v180
    %v592 = vunpack.c.3.s8 %v180
    %v593 = vunpack.c.0.s8 %v181
    %v594 = vunpack.c.1.s8 %v181
    %v595 = vunpack.c.2.s8 %v181
    %v596 = vunpack.c.3.s8 %v181
    %v597 = vunpack.c.0.s8 %v182
    %v598 = vunpack.c.1.s8 %v182
    %v599 = vunpack.c.2.s8 %v182
    %v600 = vunpack.c.3.s8 %v182
    %v601 = vunpack.c.0.s8 %v183
    %v602 = vunpack.c.1.s8 %v183
    %v603 = vunpack.c.2.s8 %v183
    %v604 = vunpack.c.3.s8 %v183
    %v605 = vunpack.c.0.s8 %v184
    %v606 = vunpack.c.1.s8 %v184
    %v607 = vunpack.c.2.s8 %v184
    %v608 = vunpack.c.3.s8 %v184
    %v609 = vunpack.c.0.s8 %v185
    %v610 = vunpack.c.1.s8 %v185
    %v611 = vunpack.c.2.s8 %v185
    %v612 = vunpack.c.3.s8 %v185
    %v613 = vunpack.c.0.s8 %v186
    %v614 = vunpack.c.1.s8 %v186
    %v615 = vunpack.c.2.s8 %v186
    %v616 = vunpack.c.3.s8 %v186
    %v617 = vunpack.c.0.s8 %v187
    %v618 = vunpack.c.1.s8 %v187
    %v619 = vunpack.c.2.s8 %v187
    %v620 = vunpack.c.3.s8 %v187
    %v621 = vunpack.c.0.s8 %v188
    %v622 = vunpack.c.1.s8 %v188
    %v623 = vunpack.c.2.s8 %v188
    %v624 = vunpack.c.3.s8 %v188
    %v625 = vunpack.c.0.s8 %v189
    %v626 = vunpack.c.1.s8 %v189
    %v627 = vunpack.c.2.s8 %v189
    %v628 = vunpack.c.3.s8 %v189
    %v629 = vunpack.c.0.s8 %v190
    %v630 = vunpack.c.1.s8 %v190
    %v631 = vunpack.c.2.s8 %v190
    %v632 = vunpack.c.3.s8 %v190
    %v633 = vunpack.c.0.s8 %v191
    %v634 = vunpack.c.1.s8 %v191
    %v635 = vunpack.c.2.s8 %v191
    %v636 = vunpack.c.3.s8 %v191
    %v637 = vunpack.c.0.s8 %v192
    %v638 = vunpack.c.1.s8 %v192
    %v639 = vunpack.c.2.s8 %v192
    %v640 = vunpack.c.3.s8 %v192
    %v641 = vunpack.c.0.s8 %v193
    %v642 = vunpack.c.1.s8 %v193
    %v643 = vunpack.c.2.s8 %v193
    %v644 = vunpack.c.3.s8 %v193
    %v645 = vunpack.c.0.s8 %v194
    %v646 = vunpack.c.1.s8 %v194
    %v647 = vunpack.c.2.s8 %v194
    %v648 = vunpack.c.3.s8 %v194
    %v649 = vunpack.c.0.s8 %v195
    %v650 = vunpack.c.1.s8 %v195
    %v651 = vunpack.c.2.s8 %v195
    %v652 = vunpack.c.3.s8 %v195
    %v653 = vunpack.c.0.s8 %v196
    %v654 = vunpack.c.1.s8 %v196
    %v655 = vunpack.c.2.s8 %v196
    %v656 = vunpack.c.3.s8 %v196
    %v657 = vunpack.c.0.s8 %v197
    %v658 = vunpack.c.1.s8 %v197
    %v659 = vunpack.c.2.s8 %v197
    %v660 = vunpack.c.3.s8 %v197
    %v661 = vunpack.c.0.s8 %v198
    %v662 = vunpack.c.1.s8 %v198
    %v663 = vunpack.c.2.s8 %v198
    %v664 = vunpack.c.3.s8 %v198
    %v665 = vunpack.c.0.s8 %v199
    %v666 = vunpack.c.1.s8 %v199
    %v667 = vunpack.c.2.s8 %v199
    %v668 = vunpack.c.3.s8 %v199
    %v669 = vunpack.c.0.s8 %v200
    %v670 = vunpack.c.1.s8 %v200
    %v671 = vunpack.c.2.s8 %v200
    %v672 = vunpack.c.3.s8 %v200
    %v673 = vunpack.c.0.s8 %v201
    %v674 = vunpack.c.1.s8 %v201
    %v675 = vunpack.c.2.s8 %v201
    %v676 = vunpack.c.3.s8 %v201
    %v677 = vunpack.c.0.s8 %v202
    %v678 = vunpack.c.1.s8 %v202
    %v679 = vunpack.c.2.s8 %v202
    %v680 = vunpack.c.3.s8 %v202
    %v681 = vunpack.c.0.s8 %v203
    %v682 = vunpack.c.1.s8 %v203
    %v683 = vunpack.c.2.s8 %v203
    %v684 = vunpack.c.3.s8 %v203
    %v685 = vunpack.c.0.s8 %v204
    %v686 = vunpack.c.1.s8 %v204
    %v687 = vunpack.c.2.s8 %v204
    %v688 = vunpack.c.3.s8 %v204
    %v689 = vunpack.c.0.s8 %v205
    %v690 = vunpack.c.1.s8 %v205
    %v691 = vunpack.c.2.s8 %v205
    %v692 = vunpack.c.3.s8 %v205
    %v693 = vunpack.c.0.s8 %v206
    %v694 = vunpack.c.1.s8 %v206
    %v695 = vunpack.c.2.s8 %v206
    %v696 = vunpack.c.3.s8 %v206
    %v697 = vunpack.c.0.s8 %v207
    %v698 = vunpack.c.1.s8 %v207
    %v699 = vunpack.c.2.s8 %v207
    %v700 = vunpack.c.3.s8 %v207
    %v701 = vunpack.c.0.s8 %v208
    %v702 = vunpack.c.1.s8 %v208
    %v703 = vunpack.c.2.s8 %v208
    %v704 = vunpack.c.3.s8 %v208
    %v705 = vunpack.c.0.s8 %v209
    %v706 = vunpack.c.1.s8 %v209
    %v707 = vunpack.c.2.s8 %v209
    %v708 = vunpack.c.3.s8 %v209
    %v709 = vunpack.c.0.s8 %v210
    %v710 = vunpack.c.1.s8 %v210
    %v711 = vunpack.c.2.s8 %v210
    %v712 = vunpack.c.3.s8 %v210
    %v713 = vunpack.c.0.s8 %v211
    %v714 = vunpack.c.1.s8 %v211
    %v715 = vunpack.c.2.s8 %v211
    %v716 = vunpack.c.3.s8 %v211
    %v717 = vunpack.c.0.s8 %v212
    %v718 = vunpack.c.1.s8 %v212
    %v719 = vunpack.c.2.s8 %v212
    %v720 = vunpack.c.3.s8 %v212
    %v721 = vunpack.c.0.s8 %v213
    %v722 = vunpack.c.1.s8 %v213
    %v723 = vunpack.c.2.s8 %v213
    %v724 = vunpack.c.3.s8 %v213
    %v725 = vunpack.c.0.s8 %v214
    %v726 = vunpack.c.1.s8 %v214
    %v727 = vunpack.c.2.s8 %v214
    %v728 = vunpack.c.3.s8 %v214
    %v729 = vunpack.c.0.s8 %v215
    %v730 = vunpack.c.1.s8 %v215
    %v731 = vunpack.c.2.s8 %v215
    %v732 = vunpack.c.3.s8 %v215
    %v733 = vunpack.c.0.s8 %v216
    %v734 = vunpack.c.1.s8 %v216
    %v735 = vunpack.c.2.s8 %v216
    %v736 = vunpack.c.3.s8 %v216
    %v737 = vunpack.c.0.s8 %v217
    %v738 = vunpack.c.1.s8 %v217
    %v739 = vunpack.c.2.s8 %v217
    %v740 = vunpack.c.3.s8 %v217
    %v741 = vunpack.c.0.s8 %v218
    %v742 = vunpack.c.1.s8 %v218
    %v743 = vunpack.c.2.s8 %v218
    %v744 = vunpack.c.3.s8 %v218
    %v745 = vunpack.c.0.s8 %v219
    %v746 = vunpack.c.1.s8 %v219
    %v747 = vunpack.c.2.s8 %v219
    %v748 = vunpack.c.3.s8 %v219
    %v749 = vunpack.c.0.s8 %v220
    %v750 = vunpack.c.1.s8 %v220
    %v751 = vunpack.c.2.s8 %v220
    %v752 = vunpack.c.3.s8 %v220
    %v753 = vunpack.c.0.s8 %v221
    %v754 = vunpack.c.1.s8 %v221
    %v755 = vunpack.c.2.s8 %v221
    %v756 = vunpack.c.3.s8 %v221
    %v757 = vunpack.c.0.s8 %v222
    %v758 = vunpack.c.1.s8 %v222
    %v759 = vunpack.c.2.s8 %v222
    %v760 = vunpack.c.3.s8 %v222
    %v761 = vunpack.c.0.s8 %v223
    %v762 = vunpack.c.1.s8 %v223
    %v763 = vunpack.c.2.s8 %v223
    %v764 = vunpack.c.3.s8 %v223
    %v765 = vunpack.c.0.s8 %v224
    %v766 = vunpack.c.1.s8 %v224
    %v767 = vunpack.c.2.s8 %v224
    %v768 = vunpack.c.3.s8 %v224
    %v769 = vunpack.c.0.s8 %v225
    %v770 = vunpack.c.1.s8 %v225
    %v771 = vunpack.c.2.s8 %v225
    %v772 = vunpack.c.3.s8 %v225
    %v773 = vunpack.c.0.s8 %v226
    %v774 = vunpack.c.1.s8 %v226
    %v775 = vunpack.c.2.s8 %v226
    %v776 = vunpack.c.3.s8 %v226
    %v777 = vunpack.c.0.s8 %v227
    %v778 = vunpack.c.1.s8 %v227
    %v779 = vunpack.c.2.s8 %v227
    %v780 = vunpack.c.3.s8 %v227
    %v781 = vunpack.c.0.s8 %v228
    %v782 = vunpack.c.1.s8 %v228
    %v783 = vunpack.c.2.s8 %v228
    %v784 = vunpack.c.3.s8 %v228
    %v785 = vunpack.c.0.s8 %v229
    %v786 = vunpack.c.1.s8 %v229
    %v787 = vunpack.c.2.s8 %v229
    %v788 = vunpack.c.3.s8 %v229
    %v789 = vunpack.c.0.s8 %v230
    %v790 = vunpack.c.1.s8 %v230
    %v791 = vunpack.c.2.s8 %v230
    %v792 = vunpack.c.3.s8 %v230
    %v793 = vunpack.c.0.s8 %v231
    %v794 = vunpack.c.1.s8 %v231
    %v795 = vunpack.c.2.s8 %v231
    %v796 = vunpack.c.3.s8 %v231
    %v797 = vunpack.c.0.s8 %v232
    %v798 = vunpack.c.1.s8 %v232
    %v799 = vunpack.c.2.s8 %v232
    %v800 = vunpack.c.3.s8 %v232
    %v801 = vunpack.c.0.s8 %v233
    %v802 = vunpack.c.1.s8 %v233
    %v803 = vunpack.c.2.s8 %v233
    %v804 = vunpack.c.3.s8 %v233
    %v805 = vunpack.c.0.s8 %v234
    %v806 = vunpack.c.1.s8 %v234
    %v807 = vunpack.c.2.s8 %v234
    %v808 = vunpack.c.3.s8 %v234
    %v809 = vunpack.c.0.s8 %v235
    %v810 = vunpack.c.1.s8 %v235
    %v811 = vunpack.c.2.s8 %v235
    %v812 = vunpack.c.3.s8 %v235
    %v813 = vunpack.c.0.s8 %v236
    %v814 = vunpack.c.1.s8 %v236
    %v815 = vunpack.c.2.s8 %v236
    %v816 = vunpack.c.3.s8 %v236
    %v817 = vunpack.c.0.s8 %v237
    %v818 = vunpack.c.1.s8 %v237
    %v819 = vunpack.c.2.s8 %v237
    %v820 = vunpack.c.3.s8 %v237
    %v821 = vunpack.c.0.s8 %v238
    %v822 = vunpack.c.1.s8 %v238
    %v823 = vunpack.c.2.s8 %v238
    %v824 = vunpack.c.3.s8 %v238
    %v825 = vunpack.c.0.s8 %v239
    %v826 = vunpack.c.1.s8 %v239
    %v827 = vunpack.c.2.s8 %v239
    %v828 = vunpack.c.3.s8 %v239
    %v829 = vunpack.c.0.s8 %v240
    %v830 = vunpack.c.1.s8 %v240
    %v831 = vunpack.c.2.s8 %v240
    %v832 = vunpack.c.3.s8 %v240
    %v833 = vunpack.c.0.s8 %v241
    %v834 = vunpack.c.1.s8 %v241
    %v835 = vunpack.c.2.s8 %v241
    %v836 = vunpack.c.3.s8 %v241
    %v837 = vunpack.c.0.s8 %v242
    %v838 = vunpack.c.1.s8 %v242
    %v839 = vunpack.c.2.s8 %v242
    %v840 = vunpack.c.3.s8 %v242
    %v841 = vunpack.c.0.s8 %v243
    %v842 = vunpack.c.1.s8 %v243
    %v843 = vunpack.c.2.s8 %v243
    %v844 = vunpack.c.3.s8 %v243
    %v845 = vunpack.c.0.s8 %v244
    %v846 = vunpack.c.1.s8 %v244
    %v847 = vunpack.c.2.s8 %v244
    %v848 = vunpack.c.3.s8 %v244
    %v849 = vunpack.c.0.s8 %v245
    %v850 = vunpack.c.1.s8 %v245
    %v851 = vunpack.c.2.s8 %v245
    %v852 = vunpack.c.3.s8 %v245
    %v853 = vunpack.c.0.s8 %v246
    %v854 = vunpack.c.1.s8 %v246
    %v855 = vunpack.c.2.s8 %v246
    %v856 = vunpack.c.3.s8 %v246
    %v857 = vunpack.c.0.s8 %v247
    %v858 = vunpack.c.1.s8 %v247
    %v859 = vunpack.c.2.s8 %v247
    %v860 = vunpack.c.3.s8 %v247
    %v861 = vunpack.c.0.s8 %v248
    %v862 = vunpack.c.1.s8 %v248
    %v863 = vunpack.c.2.s8 %v248
    %v864 = vunpack.c.3.s8 %v248
    %v865 = vunpack.c.0.s8 %v249
    %v866 = vunpack.c.1.s8 %v249
    %v867 = vunpack.c.2.s8 %v249
    %v868 = vunpack.c.3.s8 %v249
    %v869 = vunpack.c.0.s8 %v250
    %v870 = vunpack.c.1.s8 %v250
    %v871 = vunpack.c.2.s8 %v250
    %v872 = vunpack.c.3.s8 %v250
    %v873 = vunpack.c.0.s8 %v251
    %v874 = vunpack.c.1.s8 %v251
    %v875 = vunpack.c.2.s8 %v251
    %v876 = vunpack.c.3.s8 %v251
    %v877 = vunpack.c.0.s8 %v252
    %v878 = vunpack.c.1.s8 %v252
    %v879 = vunpack.c.2.s8 %v252
    %v880 = vunpack.c.3.s8 %v252
    %v881 = vunpack.c.0.s8 %v253
    %v882 = vunpack.c.1.s8 %v253
    %v883 = vunpack.c.2.s8 %v253
    %v884 = vunpack.c.3.s8 %v253
    %v885 = vunpack.c.0.s8 %v254
    %v886 = vunpack.c.1.s8 %v254
    %v887 = vunpack.c.2.s8 %v254
    %v888 = vunpack.c.3.s8 %v254
    %v889 = vunpack.c.0.s8 %v255
    %v890 = vunpack.c.1.s8 %v255
    %v891 = vunpack.c.2.s8 %v255
    %v892 = vunpack.c.3.s8 %v255
    %v893 = vunpack.c.0.s8 %v256
    %v894 = vunpack.c.1.s8 %v256
    %v895 = vunpack.c.2.s8 %v256
    %v896 = vunpack.c.3.s8 %v256
    %v897 = vcvt.s32.f32 %v257
    %v898 = vcvt.s32.f32 %v258
    %v899 = vcvt.s32.f32 %v259
    %v900 = vcvt.s32.f32 %v260
    %v901 = vcvt.s32.f32 %v261
    %v902 = vcvt.s32.f32 %v262
    %v903 = vcvt.s32.f32 %v263
    %v904 = vcvt.s32.f32 %v264
    %v905 = vcvt.s32.f32 %v265
    %v906 = vcvt.s32.f32 %v266
    %v907 = vcvt.s32.f32 %v267
    %v908 = vcvt.s32.f32 %v268
    %v909 = vcvt.s32.f32 %v269
    %v910 = vcvt.s32.f32 %v270
    %v911 = vcvt.s32.f32 %v271
    %v912 = vcvt.s32.f32 %v272
    %v913 = vcvt.s32.f32 %v273
    %v914 = vcvt.s32.f32 %v274
    %v915 = vcvt.s32.f32 %v275
    %v916 = vcvt.s32.f32 %v276
    %v917 = vcvt.s32.f32 %v277
    %v918 = vcvt.s32.f32 %v278
    %v919 = vcvt.s32.f32 %v279
    %v920 = vcvt.s32.f32 %v280
    %v921 = vcvt.s32.f32 %v281
    %v922 = vcvt.s32.f32 %v282
    %v923 = vcvt.s32.f32 %v283
    %v924 = vcvt.s32.f32 %v284
    %v925 = vcvt.s32.f32 %v285
    %v926 = vcvt.s32.f32 %v286
    %v927 = vcvt.s32.f32 %v287
    %v928 = vcvt.s32.f32 %v288
    %v929 = vcvt.s32.f32 %v289
    %v930 = vcvt.s32.f32 %v290
    %v931 = vcvt.s32.f32 %v291
    %v932 = vcvt.s32.f32 %v292
    %v933 = vcvt.s32.f32 %v293
    %v934 = vcvt.s32.f32 %v294
    %v935 = vcvt.s32.f32 %v295
    %v936 = vcvt.s32.f32 %v296
    %v937 = vcvt.s32.f32 %v297
    %v938 = vcvt.s32.f32 %v298
    %v939 = vcvt.s32.f32 %v299
    %v940 = vcvt.s32.f32 %v300
    %v941 = vcvt.s32.f32 %v301
    %v942 = vcvt.s32.f32 %v302
    %v943 = vcvt.s32.f32 %v303
    %v944 = vcvt.s32.f32 %v304
    %v945 = vcvt.s32.f32 %v305
    %v946 = vcvt.s32.f32 %v306
    %v947 = vcvt.s32.f32 %v307
    %v948 = vcvt.s32.f32 %v308
    %v949 = vcvt.s32.f32 %v309
    %v950 = vcvt.s32.f32 %v310
    %v951 = vcvt.s32.f32 %v311
    %v952 = vcvt.s32.f32 %v312
    %v953 = vcvt.s32.f32 %v313
    %v954 = vcvt.s32.f32 %v314
    %v955 = vcvt.s32.f32 %v315
    %v956 = vcvt.s32.f32 %v316
    %v957 = vcvt.s32.f32 %v317
    %v958 = vcvt.s32.f32 %v318
    %v959 = vcvt.s32.f32 %v319
    %v960 = vcvt.s32.f32 %v320
    %v961 = vcvt.s32.f32 %v321
    %v962 = vcvt.s32.f32 %v322
    %v963 = vcvt.s32.f32 %v323
    %v964 = vcvt.s32.f32 %v324
    %v965 = vcvt.s32.f32 %v325
    %v966 = vcvt.s32.f32 %v326
    %v967 = vcvt.s32.f32 %v327
    %v968 = vcvt.s32.f32 %v328
    %v969 = vcvt.s32.f32 %v329
    %v970 = vcvt.s32.f32 %v330
    %v971 = vcvt.s32.f32 %v331
    %v972 = vcvt.s32.f32 %v332
    %v973 = vcvt.s32.f32 %v333
    %v974 = vcvt.s32.f32 %v334
    %v975 = vcvt.s32.f32 %v335
    %v976 = vcvt.s32.f32 %v336
    %v977 = vcvt.s32.f32 %v337
    %v978 = vcvt.s32.f32 %v338
    %v979 = vcvt.s32.f32 %v339
    %v980 = vcvt.s32.f32 %v340
    %v981 = vcvt.s32.f32 %v341
    %v982 = vcvt.s32.f32 %v342
    %v983 = vcvt.s32.f32 %v343
    %v984 = vcvt.s32.f32 %v344
    %v985 = vcvt.s32.f32 %v345
    %v986 = vcvt.s32.f32 %v346
    %v987 = vcvt.s32.f32 %v347
    %v988 = vcvt.s32.f32 %v348
    %v989 = vcvt.s32.f32 %v349
    %v990 = vcvt.s32.f32 %v350
    %v991 = vcvt.s32.f32 %v351
    %v992 = vcvt.s32.f32 %v352
    %v993 = vcvt.s32.f32 %v353
    %v994 = vcvt.s32.f32 %v354
    %v995 = vcvt.s32.f32 %v355
    %v996 = vcvt.s32.f32 %v356
    %v997 = vcvt.s32.f32 %v357
    %v998 = vcvt.s32.f32 %v358
    %v999 = vcvt.s32.f32 %v359
    %v1000 = vcvt.s32.f32 %v360
    %v1001 = vcvt.s32.f32 %v361
    %v1002 = vcvt.s32.f32 %v362
    %v1003 = vcvt.s32.f32 %v363
    %v1004 = vcvt.s32.f32 %v364
    %v1005 = vcvt.s32.f32 %v365
    %v1006 = vcvt.s32.f32 %v366
    %v1007 = vcvt.s32.f32 %v367
    %v1008 = vcvt.s32.f32 %v368
    %v1009 = vcvt.s32.f32 %v369
    %v1010 = vcvt.s32.f32 %v370
    %v1011 = vcvt.s32.f32 %v371
    %v1012 = vcvt.s32.f32 %v372
    %v1013 = vcvt.s32.f32 %v373
    %v1014 = vcvt.s32.f32 %v374
    %v1015 = vcvt.s32.f32 %v375
    %v1016 = vcvt.s32.f32 %v376
    %v1017 = vcvt.s32.f32 %v377
    %v1018 = vcvt.s32.f32 %v378
    %v1019 = vcvt.s32.f32 %v379
    %v1020 = vcvt.s32.f32 %v380
    %v1021 = vcvt.s32.f32 %v381
    %v1022 = vcvt.s32.f32 %v382
    %v1023 = vcvt.s32.f32 %v383
    %v1024 = vcvt.s32.f32 %v384
    %v1025 = vcvt.s32.f32 %v385
    %v1026 = vcvt.s32.f32 %v386
    %v1027 = vcvt.s32.f32 %v387
    %v1028 = vcvt.s32.f32 %v388
    %v1029 = vcvt.s32.f32 %v389
    %v1030 = vcvt.s32.f32 %v390
    %v1031 = vcvt.s32.f32 %v391
    %v1032 = vcvt.s32.f32 %v392
    %v1033 = vcvt.s32.f32 %v393
    %v1034 = vcvt.s32.f32 %v394
    %v1035 = vcvt.s32.f32 %v395
    %v1036 = vcvt.s32.f32 %v396
    %v1037 = vcvt.s32.f32 %v397
    %v1038 = vcvt.s32.f32 %v398
    %v1039 = vcvt.s32.f32 %v399
    %v1040 = vcvt.s32.f32 %v400
    %v1041 = vcvt.s32.f32 %v401
    %v1042 = vcvt.s32.f32 %v402
    %v1043 = vcvt.s32.f32 %v403
    %v1044 = vcvt.s32.f32 %v404
    %v1045 = vcvt.s32.f32 %v405
    %v1046 = vcvt.s32.f32 %v406
    %v1047 = vcvt.s32.f32 %v407
    %v1048 = vcvt.s32.f32 %v408
    %v1049 = vcvt.s32.f32 %v409
    %v1050 = vcvt.s32.f32 %v410
    %v1051 = vcvt.s32.f32 %v411
    %v1052 = vcvt.s32.f32 %v412
    %v1053 = vcvt.s32.f32 %v413
    %v1054 = vcvt.s32.f32 %v414
    %v1055 = vcvt.s32.f32 %v415
    %v1056 = vcvt.s32.f32 %v416
    %v1057 = vcvt.s32.f32 %v417
    %v1058 = vcvt.s32.f32 %v418
    %v1059 = vcvt.s32.f32 %v419
    %v1060 = vcvt.s32.f32 %v420
    %v1061 = vcvt.s32.f32 %v421
    %v1062 = vcvt.s32.f32 %v422
    %v1063 = vcvt.s32.f32 %v423
    %v1064 = vcvt.s32.f32 %v424
    %v1065 = vcvt.s32.f32 %v425
    %v1066 = vcvt.s32.f32 %v426
    %v1067 = vcvt.s32.f32 %v427
    %v1068 = vcvt.s32.f32 %v428
    %v1069 = vcvt.s32.f32 %v429
    %v1070 = vcvt.s32.f32 %v430
    %v1071 = vcvt.s32.f32 %v431
    %v1072 = vcvt.s32.f32 %v432
    %v1073 = vcvt.s32.f32 %v433
    %v1074 = vcvt.s32.f32 %v434
    %v1075 = vcvt.s32.f32 %v435
    %v1076 = vcvt.s32.f32 %v436
    %v1077 = vcvt.s32.f32 %v437
    %v1078 = vcvt.s32.f32 %v438
    %v1079 = vcvt.s32.f32 %v439
    %v1080 = vcvt.s32.f32 %v440
    %v1081 = vcvt.s32.f32 %v441
    %v1082 = vcvt.s32.f32 %v442
    %v1083 = vcvt.s32.f32 %v443
    %v1084 = vcvt.s32.f32 %v444
    %v1085 = vcvt.s32.f32 %v445
    %v1086 = vcvt.s32.f32 %v446
    %v1087 = vcvt.s32.f32 %v447
    %v1088 = vcvt.s32.f32 %v448
    %v1089 = vcvt.s32.f32 %v449
    %v1090 = vcvt.s32.f32 %v450
    %v1091 = vcvt.s32.f32 %v451
    %v1092 = vcvt.s32.f32 %v452
    %v1093 = vcvt.s32.f32 %v453
    %v1094 = vcvt.s32.f32 %v454
    %v1095 = vcvt.s32.f32 %v455
    %v1096 = vcvt.s32.f32 %v456
    %v1097 = vcvt.s32.f32 %v457
    %v1098 = vcvt.s32.f32 %v458
    %v1099 = vcvt.s32.f32 %v459
    %v1100 = vcvt.s32.f32 %v460
    %v1101 = vcvt.s32.f32 %v461
    %v1102 = vcvt.s32.f32 %v462
    %v1103 = vcvt.s32.f32 %v463
    %v1104 = vcvt.s32.f32 %v464
    %v1105 = vcvt.s32.f32 %v465
    %v1106 = vcvt.s32.f32 %v466
    %v1107 = vcvt.s32.f32 %v467
    %v1108 = vcvt.s32.f32 %v468
    %v1109 = vcvt.s32.f32 %v469
    %v1110 = vcvt.s32.f32 %v470
    %v1111 = vcvt.s32.f32 %v471
    %v1112 = vcvt.s32.f32 %v472
    %v1113 = vcvt.s32.f32 %v473
    %v1114 = vcvt.s32.f32 %v474
    %v1115 = vcvt.s32.f32 %v475
    %v1116 = vcvt.s32.f32 %v476
    %v1117 = vcvt.s32.f32 %v477
    %v1118 = vcvt.s32.f32 %v478
    %v1119 = vcvt.s32.f32 %v479
    %v1120 = vcvt.s32.f32 %v480
    %v1121 = vcvt.s32.f32 %v481
    %v1122 = vcvt.s32.f32 %v482
    %v1123 = vcvt.s32.f32 %v483
    %v1124 = vcvt.s32.f32 %v484
    %v1125 = vcvt.s32.f32 %v485
    %v1126 = vcvt.s32.f32 %v486
    %v1127 = vcvt.s32.f32 %v487
    %v1128 = vcvt.s32.f32 %v488
    %v1129 = vcvt.s32.f32 %v489
    %v1130 = vcvt.s32.f32 %v490
    %v1131 = vcvt.s32.f32 %v491
    %v1132 = vcvt.s32.f32 %v492
    %v1133 = vcvt.s32.f32 %v493
    %v1134 = vcvt.s32.f32 %v494
    %v1135 = vcvt.s32.f32 %v495
    %v1136 = vcvt.s32.f32 %v496
    %v1137 = vcvt.s32.f32 %v497
    %v1138 = vcvt.s32.f32 %v498
    %v1139 = vcvt.s32.f32 %v499
    %v1140 = vcvt.s32.f32 %v500
    %v1141 = vcvt.s32.f32 %v501
    %v1142 = vcvt.s32.f32 %v502
    %v1143 = vcvt.s32.f32 %v503
    %v1144 = vcvt.s32.f32 %v504
    %v1145 = vcvt.s32.f32 %v505
    %v1146 = vcvt.s32.f32 %v506
    %v1147 = vcvt.s32.f32 %v507
    %v1148 = vcvt.s32.f32 %v508
    %v1149 = vcvt.s32.f32 %v509
    %v1150 = vcvt.s32.f32 %v510
    %v1151 = vcvt.s32.f32 %v511
    %v1152 = vcvt.s32.f32 %v512
    %v1153 = vcvt.s32.f32 %v513
    %v1154 = vcvt.s32.f32 %v514
    %v1155 = vcvt.s32.f32 %v515
    %v1156 = vcvt.s32.f32 %v516
    %v1157 = vcvt.s32.f32 %v517
    %v1158 = vcvt.s32.f32 %v518
    %v1159 = vcvt.s32.f32 %v519
    %v1160 = vcvt.s32.f32 %v520
    %v1161 = vcvt.s32.f32 %v521
    %v1162 = vcvt.s32.f32 %v522
    %v1163 = vcvt.s32.f32 %v523
    %v1164 = vcvt.s32.f32 %v524
    %v1165 = vcvt.s32.f32 %v525
    %v1166 = vcvt.s32.f32 %v526
    %v1167 = vcvt.s32.f32 %v527
    %v1168 = vcvt.s32.f32 %v528
    %v1169 = vcvt.s32.f32 %v529
    %v1170 = vcvt.s32.f32 %v530
    %v1171 = vcvt.s32.f32 %v531
    %v1172 = vcvt.s32.f32 %v532
    %v1173 = vcvt.s32.f32 %v533
    %v1174 = vcvt.s32.f32 %v534
    %v1175 = vcvt.s32.f32 %v535
    %v1176 = vcvt.s32.f32 %v536
    %v1177 = vcvt.s32.f32 %v537
    %v1178 = vcvt.s32.f32 %v538
    %v1179 = vcvt.s32.f32 %v539
    %v1180 = vcvt.s32.f32 %v540
    %v1181 = vcvt.s32.f32 %v541
    %v1182 = vcvt.s32.f32 %v542
    %v1183 = vcvt.s32.f32 %v543
    %v1184 = vcvt.s32.f32 %v544
    %v1185 = vcvt.s32.f32 %v545
    %v1186 = vcvt.s32.f32 %v546
    %v1187 = vcvt.s32.f32 %v547
    %v1188 = vcvt.s32.f32 %v548
    %v1189 = vcvt.s32.f32 %v549
    %v1190 = vcvt.s32.f32 %v550
    %v1191 = vcvt.s32.f32 %v551
    %v1192 = vcvt.s32.f32 %v552
    %v1193 = vcvt.s32.f32 %v553
    %v1194 = vcvt.s32.f32 %v554
    %v1195 = vcvt.s32.f32 %v555
    %v1196 = vcvt.s32.f32 %v556
    %v1197 = vcvt.s32.f32 %v557
    %v1198 = vcvt.s32.f32 %v558
    %v1199 = vcvt.s32.f32 %v559
    %v1200 = vcvt.s32.f32 %v560
    %v1201 = vcvt.s32.f32 %v561
    %v1202 = vcvt.s32.f32 %v562
    %v1203 = vcvt.s32.f32 %v563
    %v1204 = vcvt.s32.f32 %v564
    %v1205 = vcvt.s32.f32 %v565
    %v1206 = vcvt.s32.f32 %v566
    %v1207 = vcvt.s32.f32 %v567
    %v1208 = vcvt.s32.f32 %v568
    %v1209 = vcvt.s32.f32 %v569
    %v1210 = vcvt.s32.f32 %v570
    %v1211 = vcvt.s32.f32 %v571
    %v1212 = vcvt.s32.f32 %v572
    %v1213 = vcvt.s32.f32 %v573
    %v1214 = vcvt.s32.f32 %v574
    %v1215 = vcvt.s32.f32 %v575
    %v1216 = vcvt.s32.f32 %v576
    %v1217 = vcvt.s32.f32 %v577
    %v1218 = vcvt.s32.f32 %v578
    %v1219 = vcvt.s32.f32 %v579
    %v1220 = vcvt.s32.f32 %v580
    %v1221 = vcvt.s32.f32 %v581
    %v1222 = vcvt.s32.f32 %v582
    %v1223 = vcvt.s32.f32 %v583
    %v1224 = vcvt.s32.f32 %v584
    %v1225 = vcvt.s32.f32 %v585
    %v1226 = vcvt.s32.f32 %v586
    %v1227 = vcvt.s32.f32 %v587
    %v1228 = vcvt.s32.f32 %v588
    %v1229 = vcvt.s32.f32 %v589
    %v1230 = vcvt.s32.f32 %v590
    %v1231 = vcvt.s32.f32 %v591
    %v1232 = vcvt.s32.f32 %v592
    %v1233 = vcvt.s32.f32 %v593
    %v1234 = vcvt.s32.f32 %v594
    %v1235 = vcvt.s32.f32 %v595
    %v1236 = vcvt.s32.f32 %v596
    %v1237 = vcvt.s32.f32 %v597
    %v1238 = vcvt.s32.f32 %v598
    %v1239 = vcvt.s32.f32 %v599
    %v1240 = vcvt.s32.f32 %v600
    %v1241 = vcvt.s32.f32 %v601
    %v1242 = vcvt.s32.f32 %v602
    %v1243 = vcvt.s32.f32 %v603
    %v1244 = vcvt.s32.f32 %v604
    %v1245 = vcvt.s32.f32 %v605
    %v1246 = vcvt.s32.f32 %v606
    %v1247 = vcvt.s32.f32 %v607
    %v1248 = vcvt.s32.f32 %v608
    %v1249 = vcvt.s32.f32 %v609
    %v1250 = vcvt.s32.f32 %v610
    %v1251 = vcvt.s32.f32 %v611
    %v1252 = vcvt.s32.f32 %v612
    %v1253 = vcvt.s32.f32 %v613
    %v1254 = vcvt.s32.f32 %v614
    %v1255 = vcvt.s32.f32 %v615
    %v1256 = vcvt.s32.f32 %v616
    %v1257 = vcvt.s32.f32 %v617
    %v1258 = vcvt.s32.f32 %v618
    %v1259 = vcvt.s32.f32 %v619
    %v1260 = vcvt.s32.f32 %v620
    %v1261 = vcvt.s32.f32 %v621
    %v1262 = vcvt.s32.f32 %v622
    %v1263 = vcvt.s32.f32 %v623
    %v1264 = vcvt.s32.f32 %v624
    %v1265 = vcvt.s32.f32 %v625
    %v1266 = vcvt.s32.f32 %v626
    %v1267 = vcvt.s32.f32 %v627
    %v1268 = vcvt.s32.f32 %v628
    %v1269 = vcvt.s32.f32 %v629
    %v1270 = vcvt.s32.f32 %v630
    %v1271 = vcvt.s32.f32 %v631
    %v1272 = vcvt.s32.f32 %v632
    %v1273 = vcvt.s32.f32 %v633
    %v1274 = vcvt.s32.f32 %v634
    %v1275 = vcvt.s32.f32 %v635
    %v1276 = vcvt.s32.f32 %v636
    %v1277 = vcvt.s32.f32 %v637
    %v1278 = vcvt.s32.f32 %v638
    %v1279 = vcvt.s32.f32 %v639
    %v1280 = vcvt.s32.f32 %v640
    %v1281 = vcvt.s32.f32 %v641
    %v1282 = vcvt.s32.f32 %v642
    %v1283 = vcvt.s32.f32 %v643
    %v1284 = vcvt.s32.f32 %v644
    %v1285 = vcvt.s32.f32 %v645
    %v1286 = vcvt.s32.f32 %v646
    %v1287 = vcvt.s32.f32 %v647
    %v1288 = vcvt.s32.f32 %v648
    %v1289 = vcvt.s32.f32 %v649
    %v1290 = vcvt.s32.f32 %v650
    %v1291 = vcvt.s32.f32 %v651
    %v1292 = vcvt.s32.f32 %v652
    %v1293 = vcvt.s32.f32 %v653
    %v1294 = vcvt.s32.f32 %v654
    %v1295 = vcvt.s32.f32 %v655
    %v1296 = vcvt.s32.f32 %v656
    %v1297 = vcvt.s32.f32 %v657
    %v1298 = vcvt.s32.f32 %v658
    %v1299 = vcvt.s32.f32 %v659
    %v1300 = vcvt.s32.f32 %v660
    %v1301 = vcvt.s32.f32 %v661
    %v1302 = vcvt.s32.f32 %v662
    %v1303 = vcvt.s32.f32 %v663
    %v1304 = vcvt.s32.f32 %v664
    %v1305 = vcvt.s32.f32 %v665
    %v1306 = vcvt.s32.f32 %v666
    %v1307 = vcvt.s32.f32 %v667
    %v1308 = vcvt.s32.f32 %v668
    %v1309 = vcvt.s32.f32 %v669
    %v1310 = vcvt.s32.f32 %v670
    %v1311 = vcvt.s32.f32 %v671
    %v1312 = vcvt.s32.f32 %v672
    %v1313 = vcvt.s32.f32 %v673
    %v1314 = vcvt.s32.f32 %v674
    %v1315 = vcvt.s32.f32 %v675
    %v1316 = vcvt.s32.f32 %v676
    %v1317 = vcvt.s32.f32 %v677
    %v1318 = vcvt.s32.f32 %v678
    %v1319 = vcvt.s32.f32 %v679
    %v1320 = vcvt.s32.f32 %v680
    %v1321 = vcvt.s32.f32 %v681
    %v1322 = vcvt.s32.f32 %v682
    %v1323 = vcvt.s32.f32 %v683
    %v1324 = vcvt.s32.f32 %v684
    %v1325 = vcvt.s32.f32 %v685
    %v1326 = vcvt.s32.f32 %v686
    %v1327 = vcvt.s32.f32 %v687
    %v1328 = vcvt.s32.f32 %v688
    %v1329 = vcvt.s32.f32 %v689
    %v1330 = vcvt.s32.f32 %v690
    %v1331 = vcvt.s32.f32 %v691
    %v1332 = vcvt.s32.f32 %v692
    %v1333 = vcvt.s32.f32 %v693
    %v1334 = vcvt.s32.f32 %v694
    %v1335 = vcvt.s32.f32 %v695
    %v1336 = vcvt.s32.f32 %v696
    %v1337 = vcvt.s32.f32 %v697
    %v1338 = vcvt.s32.f32 %v698
    %v1339 = vcvt.s32.f32 %v699
    %v1340 = vcvt.s32.f32 %v700
    %v1341 = vcvt.s32.f32 %v701
    %v1342 = vcvt.s32.f32 %v702
    %v1343 = vcvt.s32.f32 %v703
    %v1344 = vcvt.s32.f32 %v704
    %v1345 = vcvt.s32.f32 %v705
    %v1346 = vcvt.s32.f32 %v706
    %v1347 = vcvt.s32.f32 %v707
    %v1348 = vcvt.s32.f32 %v708
    %v1349 = vcvt.s32.f32 %v709
    %v1350 = vcvt.s32.f32 %v710
    %v1351 = vcvt.s32.f32 %v711
    %v1352 = vcvt.s32.f32 %v712
    %v1353 = vcvt.s32.f32 %v713
    %v1354 = vcvt.s32.f32 %v714
    %v1355 = vcvt.s32.f32 %v715
    %v1356 = vcvt.s32.f32 %v716
    %v1357 = vcvt.s32.f32 %v717
    %v1358 = vcvt.s32.f32 %v718
    %v1359 = vcvt.s32.f32 %v719
    %v1360 = vcvt.s32.f32 %v720
    %v1361 = vcvt.s32.f32 %v721
    %v1362 = vcvt.s32.f32 %v722
    %v1363 = vcvt.s32.f32 %v723
    %v1364 = vcvt.s32.f32 %v724
    %v1365 = vcvt.s32.f32 %v725
    %v1366 = vcvt.s32.f32 %v726
    %v1367 = vcvt.s32.f32 %v727
    %v1368 = vcvt.s32.f32 %v728
    %v1369 = vcvt.s32.f32 %v729
    %v1370 = vcvt.s32.f32 %v730
    %v1371 = vcvt.s32.f32 %v731
    %v1372 = vcvt.s32.f32 %v732
    %v1373 = vcvt.s32.f32 %v733
    %v1374 = vcvt.s32.f32 %v734
    %v1375 = vcvt.s32.f32 %v735
    %v1376 = vcvt.s32.f32 %v736
    %v1377 = vcvt.s32.f32 %v737
    %v1378 = vcvt.s32.f32 %v738
    %v1379 = vcvt.s32.f32 %v739
    %v1380 = vcvt.s32.f32 %v740
    %v1381 = vcvt.s32.f32 %v741
    %v1382 = vcvt.s32.f32 %v742
    %v1383 = vcvt.s32.f32 %v743
    %v1384 = vcvt.s32.f32 %v744
    %v1385 = vcvt.s32.f32 %v745
    %v1386 = vcvt.s32.f32 %v746
    %v1387 = vcvt.s32.f32 %v747
    %v1388 = vcvt.s32.f32 %v748
    %v1389 = vcvt.s32.f32 %v749
    %v1390 = vcvt.s32.f32 %v750
    %v1391 = vcvt.s32.f32 %v751
    %v1392 = vcvt.s32.f32 %v752
    %v1393 = vcvt.s32.f32 %v753
    %v1394 = vcvt.s32.f32 %v754
    %v1395 = vcvt.s32.f32 %v755
    %v1396 = vcvt.s32.f32 %v756
    %v1397 = vcvt.s32.f32 %v757
    %v1398 = vcvt.s32.f32 %v758
    %v1399 = vcvt.s32.f32 %v759
    %v1400 = vcvt.s32.f32 %v760
    %v1401 = vcvt.s32.f32 %v761
    %v1402 = vcvt.s32.f32 %v762
    %v1403 = vcvt.s32.f32 %v763
    %v1404 = vcvt.s32.f32 %v764
    %v1405 = vcvt.s32.f32 %v765
    %v1406 = vcvt.s32.f32 %v766
    %v1407 = vcvt.s32.f32 %v767
    %v1408 = vcvt.s32.f32 %v768
    %v1409 = vcvt.s32.f32 %v769
    %v1410 = vcvt.s32.f32 %v770
    %v1411 = vcvt.s32.f32 %v771
    %v1412 = vcvt.s32.f32 %v772
    %v1413 = vcvt.s32.f32 %v773
    %v1414 = vcvt.s32.f32 %v774
    %v1415 = vcvt.s32.f32 %v775
    %v1416 = vcvt.s32.f32 %v776
    %v1417 = vcvt.s32.f32 %v777
    %v1418 = vcvt.s32.f32 %v778
    %v1419 = vcvt.s32.f32 %v779
    %v1420 = vcvt.s32.f32 %v780
    %v1421 = vcvt.s32.f32 %v781
    %v1422 = vcvt.s32.f32 %v782
    %v1423 = vcvt.s32.f32 %v783
    %v1424 = vcvt.s32.f32 %v784
    %v1425 = vcvt.s32.f32 %v785
    %v1426 = vcvt.s32.f32 %v786
    %v1427 = vcvt.s32.f32 %v787
    %v1428 = vcvt.s32.f32 %v788
    %v1429 = vcvt.s32.f32 %v789
    %v1430 = vcvt.s32.f32 %v790
    %v1431 = vcvt.s32.f32 %v791
    %v1432 = vcvt.s32.f32 %v792
    %v1433 = vcvt.s32.f32 %v793
    %v1434 = vcvt.s32.f32 %v794
    %v1435 = vcvt.s32.f32 %v795
    %v1436 = vcvt.s32.f32 %v796
    %v1437 = vcvt.s32.f32 %v797
    %v1438 = vcvt.s32.f32 %v798
    %v1439 = vcvt.s32.f32 %v799
    %v1440 = vcvt.s32.f32 %v800
    %v1441 = vcvt.s32.f32 %v801
    %v1442 = vcvt.s32.f32 %v802
    %v1443 = vcvt.s32.f32 %v803
    %v1444 = vcvt.s32.f32 %v804
    %v1445 = vcvt.s32.f32 %v805
    %v1446 = vcvt.s32.f32 %v806
    %v1447 = vcvt.s32.f32 %v807
    %v1448 = vcvt.s32.f32 %v808
    %v1449 = vcvt.s32.f32 %v809
    %v1450 = vcvt.s32.f32 %v810
    %v1451 = vcvt.s32.f32 %v811
    %v1452 = vcvt.s32.f32 %v812
    %v1453 = vcvt.s32.f32 %v813
    %v1454 = vcvt.s32.f32 %v814
    %v1455 = vcvt.s32.f32 %v815
    %v1456 = vcvt.s32.f32 %v816
    %v1457 = vcvt.s32.f32 %v817
    %v1458 = vcvt.s32.f32 %v818
    %v1459 = vcvt.s32.f32 %v819
    %v1460 = vcvt.s32.f32 %v820
    %v1461 = vcvt.s32.f32 %v821
    %v1462 = vcvt.s32.f32 %v822
    %v1463 = vcvt.s32.f32 %v823
    %v1464 = vcvt.s32.f32 %v824
    %v1465 = vcvt.s32.f32 %v825
    %v1466 = vcvt.s32.f32 %v826
    %v1467 = vcvt.s32.f32 %v827
    %v1468 = vcvt.s32.f32 %v828
    %v1469 = vcvt.s32.f32 %v829
    %v1470 = vcvt.s32.f32 %v830
    %v1471 = vcvt.s32.f32 %v831
    %v1472 = vcvt.s32.f32 %v832
    %v1473 = vcvt.s32.f32 %v833
    %v1474 = vcvt.s32.f32 %v834
    %v1475 = vcvt.s32.f32 %v835
    %v1476 = vcvt.s32.f32 %v836
    %v1477 = vcvt.s32.f32 %v837
    %v1478 = vcvt.s32.f32 %v838
    %v1479 = vcvt.s32.f32 %v839
    %v1480 = vcvt.s32.f32 %v840
    %v1481 = vcvt.s32.f32 %v841
    %v1482 = vcvt.s32.f32 %v842
    %v1483 = vcvt.s32.f32 %v843
    %v1484 = vcvt.s32.f32 %v844
    %v1485 = vcvt.s32.f32 %v845
    %v1486 = vcvt.s32.f32 %v846
    %v1487 = vcvt.s32.f32 %v847
    %v1488 = vcvt.s32.f32 %v848
    %v1489 = vcvt.s32.f32 %v849
    %v1490 = vcvt.s32.f32 %v850
    %v1491 = vcvt.s32.f32 %v851
    %v1492 = vcvt.s32.f32 %v852
    %v1493 = vcvt.s32.f32 %v853
    %v1494 = vcvt.s32.f32 %v854
    %v1495 = vcvt.s32.f32 %v855
    %v1496 = vcvt.s32.f32 %v856
    %v1497 = vcvt.s32.f32 %v857
    %v1498 = vcvt.s32.f32 %v858
    %v1499 = vcvt.s32.f32 %v859
    %v1500 = vcvt.s32.f32 %v860
    %v1501 = vcvt.s32.f32 %v861
    %v1502 = vcvt.s32.f32 %v862
    %v1503 = vcvt.s32.f32 %v863
    %v1504 = vcvt.s32.f32 %v864
    %v1505 = vcvt.s32.f32 %v865
    %v1506 = vcvt.s32.f32 %v866
    %v1507 = vcvt.s32.f32 %v867
    %v1508 = vcvt.s32.f32 %v868
    %v1509 = vcvt.s32.f32 %v869
    %v1510 = vcvt.s32.f32 %v870
    %v1511 = vcvt.s32.f32 %v871
    %v1512 = vcvt.s32.f32 %v872
    %v1513 = vcvt.s32.f32 %v873
    %v1514 = vcvt.s32.f32 %v874
    %v1515 = vcvt.s32.f32 %v875
    %v1516 = vcvt.s32.f32 %v876
    %v1517 = vcvt.s32.f32 %v877
    %v1518 = vcvt.s32.f32 %v878
    %v1519 = vcvt.s32.f32 %v879
    %v1520 = vcvt.s32.f32 %v880
    %v1521 = vcvt.s32.f32 %v881
    %v1522 = vcvt.s32.f32 %v882
    %v1523 = vcvt.s32.f32 %v883
    %v1524 = vcvt.s32.f32 %v884
    %v1525 = vcvt.s32.f32 %v885
    %v1526 = vcvt.s32.f32 %v886
    %v1527 = vcvt.s32.f32 %v887
    %v1528 = vcvt.s32.f32 %v888
    %v1529 = vcvt.s32.f32 %v889
    %v1530 = vcvt.s32.f32 %v890
    %v1531 = vcvt.s32.f32 %v891
    %v1532 = vcvt.s32.f32 %v892
    %v1533 = vcvt.s32.f32 %v893
    %v1534 = vcvt.s32.f32 %v894
    %v1535 = vcvt.s32.f32 %v895
    %v1536 = vcvt.s32.f32 %v896
    %v1537 = vpack.c.bf16 %v898, %v897
    %v1538 = vpack.c.bf16 %v900, %v899
    %v1539 = vpack.c.bf16 %v902, %v901
    %v1540 = vpack.c.bf16 %v904, %v903
    %v1541 = vpack.c.bf16 %v906, %v905
    %v1542 = vpack.c.bf16 %v908, %v907
    %v1543 = vpack.c.bf16 %v910, %v909
    %v1544 = vpack.c.bf16 %v912, %v911
    %v1545 = vpack.c.bf16 %v914, %v913
    %v1546 = vpack.c.bf16 %v916, %v915
    %v1547 = vpack.c.bf16 %v918, %v917
    %v1548 = vpack.c.bf16 %v920, %v919
    %v1549 = vpack.c.bf16 %v922, %v921
    %v1550 = vpack.c.bf16 %v924, %v923
    %v1551 = vpack.c.bf16 %v926, %v925
    %v1552 = vpack.c.bf16 %v928, %v927
    %v1553 = vpack.c.bf16 %v930, %v929
    %v1554 = vpack.c.bf16 %v932, %v931
    %v1555 = vpack.c.bf16 %v934, %v933
    %v1556 = vpack.c.bf16 %v936, %v935
    %v1557 = vpack.c.bf16 %v938, %v937
    %v1558 = vpack.c.bf16 %v940, %v939
    %v1559 = vpack.c.bf16 %v942, %v941
    %v1560 = vpack.c.bf16 %v944, %v943
    %v1561 = vpack.c.bf16 %v946, %v945
    %v1562 = vpack.c.bf16 %v948, %v947
    %v1563 = vpack.c.bf16 %v950, %v949
    %v1564 = vpack.c.bf16 %v952, %v951
    %v1565 = vpack.c.bf16 %v954, %v953
    %v1566 = vpack.c.bf16 %v956, %v955
    %v1567 = vpack.c.bf16 %v958, %v957
    %v1568 = vpack.c.bf16 %v960, %v959
    %v1569 = vpack.c.bf16 %v962, %v961
    %v1570 = vpack.c.bf16 %v964, %v963
    %v1571 = vpack.c.bf16 %v966, %v965
    %v1572 = vpack.c.bf16 %v968, %v967
    %v1573 = vpack.c.bf16 %v970, %v969
    %v1574 = vpack.c.bf16 %v972, %v971
    %v1575 = vpack.c.bf16 %v974, %v973
    %v1576 = vpack.c.bf16 %v976, %v975
    %v1577 = vpack.c.bf16 %v978, %v977
    %v1578 = vpack.c.bf16 %v980, %v979
    %v1579 = vpack.c.bf16 %v982, %v981
    %v1580 = vpack.c.bf16 %v984, %v983
    %v1581 = vpack.c.bf16 %v986, %v985
    %v1582 = vpack.c.bf16 %v988, %v987
    %v1583 = vpack.c.bf16 %v990, %v989
    %v1584 = vpack.c.bf16 %v992, %v991
    %v1585 = vpack.c.bf16 %v994, %v993
    %v1586 = vpack.c.bf16 %v996, %v995
    %v1587 = vpack.c.bf16 %v998, %v997
    %v1588 = vpack.c.bf16 %v1000, %v999
    %v1589 = vpack.c.bf16 %v1002, %v1001
    %v1590 = vpack.c.bf16 %v1004, %v1003
    %v1591 = vpack.c.bf16 %v1006, %v1005
    %v1592 = vpack.c.bf16 %v1008, %v1007
    %v1593 = vpack.c.bf16 %v1010, %v1009
    %v1594 = vpack.c.bf16 %v1012, %v1011
    %v1595 = vpack.c.bf16 %v1014, %v1013
    %v1596 = vpack.c.bf16 %v1016, %v1015
    %v1597 = vpack.c.bf16 %v1018, %v1017
    %v1598 = vpack.c.bf16 %v1020, %v1019
    %v1599 = vpack.c.bf16 %v1022, %v1021
    %v1600 = vpack.c.bf16 %v1024, %v1023
    %v1601 = vpack.c.bf16 %v1026, %v1025
    %v1602 = vpack.c.bf16 %v1028, %v1027
    %v1603 = vpack.c.bf16 %v1030, %v1029
    %v1604 = vpack.c.bf16 %v1032, %v1031
    %v1605 = vpack.c.bf16 %v1034, %v1033
    %v1606 = vpack.c.bf16 %v1036, %v1035
    %v1607 = vpack.c.bf16 %v1038, %v1037
    %v1608 = vpack.c.bf16 %v1040, %v1039
    %v1609 = vpack.c.bf16 %v1042, %v1041
    %v1610 = vpack.c.bf16 %v1044, %v1043
    %v1611 = vpack.c.bf16 %v1046, %v1045
    %v1612 = vpack.c.bf16 %v1048, %v1047
    %v1613 = vpack.c.bf16 %v1050, %v1049
    %v1614 = vpack.c.bf16 %v1052, %v1051
    %v1615 = vpack.c.bf16 %v1054, %v1053
    %v1616 = vpack.c.bf16 %v1056, %v1055
    %v1617 = vpack.c.bf16 %v1058, %v1057
    %v1618 = vpack.c.bf16 %v1060, %v1059
    %v1619 = vpack.c.bf16 %v1062, %v1061
    %v1620 = vpack.c.bf16 %v1064, %v1063
    %v1621 = vpack.c.bf16 %v1066, %v1065
    %v1622 = vpack.c.bf16 %v1068, %v1067
    %v1623 = vpack.c.bf16 %v1070, %v1069
    %v1624 = vpack.c.bf16 %v1072, %v1071
    %v1625 = vpack.c.bf16 %v1074, %v1073
    %v1626 = vpack.c.bf16 %v1076, %v1075
    %v1627 = vpack.c.bf16 %v1078, %v1077
    %v1628 = vpack.c.bf16 %v1080, %v1079
    %v1629 = vpack.c.bf16 %v1082, %v1081
    %v1630 = vpack.c.bf16 %v1084, %v1083
    %v1631 = vpack.c.bf16 %v1086, %v1085
    %v1632 = vpack.c.bf16 %v1088, %v1087
    %v1633 = vpack.c.bf16 %v1090, %v1089
    %v1634 = vpack.c.bf16 %v1092, %v1091
    %v1635 = vpack.c.bf16 %v1094, %v1093
    %v1636 = vpack.c.bf16 %v1096, %v1095
    %v1637 = vpack.c.bf16 %v1098, %v1097
    %v1638 = vpack.c.bf16 %v1100, %v1099
    %v1639 = vpack.c.bf16 %v1102, %v1101
    %v1640 = vpack.c.bf16 %v1104, %v1103
    %v1641 = vpack.c.bf16 %v1106, %v1105
    %v1642 = vpack.c.bf16 %v1108, %v1107
    %v1643 = vpack.c.bf16 %v1110, %v1109
    %v1644 = vpack.c.bf16 %v1112, %v1111
    %v1645 = vpack.c.bf16 %v1114, %v1113
    %v1646 = vpack.c.bf16 %v1116, %v1115
    %v1647 = vpack.c.bf16 %v1118, %v1117
    %v1648 = vpack.c.bf16 %v1120, %v1119
    %v1649 = vpack.c.bf16 %v1122, %v1121
    %v1650 = vpack.c.bf16 %v1124, %v1123
    %v1651 = vpack.c.bf16 %v1126, %v1125
    %v1652 = vpack.c.bf16 %v1128, %v1127
    %v1653 = vpack.c.bf16 %v1130, %v1129
    %v1654 = vpack.c.bf16 %v1132, %v1131
    %v1655 = vpack.c.bf16 %v1134, %v1133
    %v1656 = vpack.c.bf16 %v1136, %v1135
    %v1657 = vpack.c.bf16 %v1138, %v1137
    %v1658 = vpack.c.bf16 %v1140, %v1139
    %v1659 = vpack.c.bf16 %v1142, %v1141
    %v1660 = vpack.c.bf16 %v1144, %v1143
    %v1661 = vpack.c.bf16 %v1146, %v1145
    %v1662 = vpack.c.bf16 %v1148, %v1147
    %v1663 = vpack.c.bf16 %v1150, %v1149
    %v1664 = vpack.c.bf16 %v1152, %v1151
    %v1665 = vpack.c.bf16 %v1154, %v1153
    %v1666 = vpack.c.bf16 %v1156, %v1155
    %v1667 = vpack.c.bf16 %v1158, %v1157
    %v1668 = vpack.c.bf16 %v1160, %v1159
    %v1669 = vpack.c.bf16 %v1162, %v1161
    %v1670 = vpack.c.bf16 %v1164, %v1163
    %v1671 = vpack.c.bf16 %v1166, %v1165
    %v1672 = vpack.c.bf16 %v1168, %v1167
    %v1673 = vpack.c.bf16 %v1170, %v1169
    %v1674 = vpack.c.bf16 %v1172, %v1171
    %v1675 = vpack.c.bf16 %v1174, %v1173
    %v1676 = vpack.c.bf16 %v1176, %v1175
    %v1677 = vpack.c.bf16 %v1178, %v1177
    %v1678 = vpack.c.bf16 %v1180, %v1179
    %v1679 = vpack.c.bf16 %v1182, %v1181
    %v1680 = vpack.c.bf16 %v1184, %v1183
    %v1681 = vpack.c.bf16 %v1186, %v1185
    %v1682 = vpack.c.bf16 %v1188, %v1187
    %v1683 = vpack.c.bf16 %v1190, %v1189
    %v1684 = vpack.c.bf16 %v1192, %v1191
    %v1685 = vpack.c.bf16 %v1194, %v1193
    %v1686 = vpack.c.bf16 %v1196, %v1195
    %v1687 = vpack.c.bf16 %v1198, %v1197
    %v1688 = vpack.c.bf16 %v1200, %v1199
    %v1689 = vpack.c.bf16 %v1202, %v1201
    %v1690 = vpack.c.bf16 %v1204, %v1203
    %v1691 = vpack.c.bf16 %v1206, %v1205
    %v1692 = vpack.c.bf16 %v1208, %v1207
    %v1693 = vpack.c.bf16 %v1210, %v1209
    %v1694 = vpack.c.bf16 %v1212, %v1211
    %v1695 = vpack.c.bf16 %v1214, %v1213
    %v1696 = vpack.c.bf16 %v1216, %v1215
    %v1697 = vpack.c.bf16 %v1218, %v1217
    %v1698 = vpack.c.bf16 %v1220, %v1219
    %v1699 = vpack.c.bf16 %v1222, %v1221
    %v1700 = vpack.c.bf16 %v1224, %v1223
    %v1701 = vpack.c.bf16 %v1226, %v1225
    %v1702 = vpack.c.bf16 %v1228, %v1227
    %v1703 = vpack.c.bf16 %v1230, %v1229
    %v1704 = vpack.c.bf16 %v1232, %v1231
    %v1705 = vpack.c.bf16 %v1234, %v1233
    %v1706 = vpack.c.bf16 %v1236, %v1235
    %v1707 = vpack.c.bf16 %v1238, %v1237
    %v1708 = vpack.c.bf16 %v1240, %v1239
    %v1709 = vpack.c.bf16 %v1242, %v1241
    %v1710 = vpack.c.bf16 %v1244, %v1243
    %v1711 = vpack.c.bf16 %v1246, %v1245
    %v1712 = vpack.c.bf16 %v1248, %v1247
    %v1713 = vpack.c.bf16 %v1250, %v1249
    %v1714 = vpack.c.bf16 %v1252, %v1251
    %v1715 = vpack.c.bf16 %v1254, %v1253
    %v1716 = vpack.c.bf16 %v1256, %v1255
    %v1717 = vpack.c.bf16 %v1258, %v1257
    %v1718 = vpack.c.bf16 %v1260, %v1259
    %v1719 = vpack.c.bf16 %v1262, %v1261
    %v1720 = vpack.c.bf16 %v1264, %v1263
    %v1721 = vpack.c.bf16 %v1266, %v1265
    %v1722 = vpack.c.bf16 %v1268, %v1267
    %v1723 = vpack.c.bf16 %v1270, %v1269
    %v1724 = vpack.c.bf16 %v1272, %v1271
    %v1725 = vpack.c.bf16 %v1274, %v1273
    %v1726 = vpack.c.bf16 %v1276, %v1275
    %v1727 = vpack.c.bf16 %v1278, %v1277
    %v1728 = vpack.c.bf16 %v1280, %v1279
    %v1729 = vpack.c.bf16 %v1282, %v1281
    %v1730 = vpack.c.bf16 %v1284, %v1283
    %v1731 = vpack.c.bf16 %v1286, %v1285
    %v1732 = vpack.c.bf16 %v1288, %v1287
    %v1733 = vpack.c.bf16 %v1290, %v1289
    %v1734 = vpack.c.bf16 %v1292, %v1291
    %v1735 = vpack.c.bf16 %v1294, %v1293
    %v1736 = vpack.c.bf16 %v1296, %v1295
    %v1737 = vpack.c.bf16 %v1298, %v1297
    %v1738 = vpack.c.bf16 %v1300, %v1299
    %v1739 = vpack.c.bf16 %v1302, %v1301
    %v1740 = vpack.c.bf16 %v1304, %v1303
    %v1741 = vpack.c.bf16 %v1306, %v1305
    %v1742 = vpack.c.bf16 %v1308, %v1307
    %v1743 = vpack.c.bf16 %v1310, %v1309
    %v1744 = vpack.c.bf16 %v1312, %v1311
    %v1745 = vpack.c.bf16 %v1314, %v1313
    %v1746 = vpack.c.bf16 %v1316, %v1315
    %v1747 = vpack.c.bf16 %v1318, %v1317
    %v1748 = vpack.c.bf16 %v1320, %v1319
    %v1749 = vpack.c.bf16 %v1322, %v1321
    %v1750 = vpack.c.bf16 %v1324, %v1323
    %v1751 = vpack.c.bf16 %v1326, %v1325
    %v1752 = vpack.c.bf16 %v1328, %v1327
    %v1753 = vpack.c.bf16 %v1330, %v1329
    %v1754 = vpack.c.bf16 %v1332, %v1331
    %v1755 = vpack.c.bf16 %v1334, %v1333
    %v1756 = vpack.c.bf16 %v1336, %v1335
    %v1757 = vpack.c.bf16 %v1338, %v1337
    %v1758 = vpack.c.bf16 %v1340, %v1339
    %v1759 = vpack.c.bf16 %v1342, %v1341
    %v1760 = vpack.c.bf16 %v1344, %v1343
    %v1761 = vpack.c.bf16 %v1346, %v1345
    %v1762 = vpack.c.bf16 %v1348, %v1347
    %v1763 = vpack.c.bf16 %v1350, %v1349
    %v1764 = vpack.c.bf16 %v1352, %v1351
    %v1765 = vpack.c.bf16 %v1354, %v1353
    %v1766 = vpack.c.bf16 %v1356, %v1355
    %v1767 = vpack.c.bf16 %v1358, %v1357
    %v1768 = vpack.c.bf16 %v1360, %v1359
    %v1769 = vpack.c.bf16 %v1362, %v1361
    %v1770 = vpack.c.bf16 %v1364, %v1363
    %v1771 = vpack.c.bf16 %v1366, %v1365
    %v1772 = vpack.c.bf16 %v1368, %v1367
    %v1773 = vpack.c.bf16 %v1370, %v1369
    %v1774 = vpack.c.bf16 %v1372, %v1371
    %v1775 = vpack.c.bf16 %v1374, %v1373
    %v1776 = vpack.c.bf16 %v1376, %v1375
    %v1777 = vpack.c.bf16 %v1378, %v1377
    %v1778 = vpack.c.bf16 %v1380, %v1379
    %v1779 = vpack.c.bf16 %v1382, %v1381
    %v1780 = vpack.c.bf16 %v1384, %v1383
    %v1781 = vpack.c.bf16 %v1386, %v1385
    %v1782 = vpack.c.bf16 %v1388, %v1387
    %v1783 = vpack.c.bf16 %v1390, %v1389
    %v1784 = vpack.c.bf16 %v1392, %v1391
    %v1785 = vpack.c.bf16 %v1394, %v1393
    %v1786 = vpack.c.bf16 %v1396, %v1395
    %v1787 = vpack.c.bf16 %v1398, %v1397
    %v1788 = vpack.c.bf16 %v1400, %v1399
    %v1789 = vpack.c.bf16 %v1402, %v1401
    %v1790 = vpack.c.bf16 %v1404, %v1403
    %v1791 = vpack.c.bf16 %v1406, %v1405
    %v1792 = vpack.c.bf16 %v1408, %v1407
    %v1793 = vpack.c.bf16 %v1410, %v1409
    %v1794 = vpack.c.bf16 %v1412, %v1411
    %v1795 = vpack.c.bf16 %v1414, %v1413
    %v1796 = vpack.c.bf16 %v1416, %v1415
    %v1797 = vpack.c.bf16 %v1418, %v1417
    %v1798 = vpack.c.bf16 %v1420, %v1419
    %v1799 = vpack.c.bf16 %v1422, %v1421
    %v1800 = vpack.c.bf16 %v1424, %v1423
    %v1801 = vpack.c.bf16 %v1426, %v1425
    %v1802 = vpack.c.bf16 %v1428, %v1427
    %v1803 = vpack.c.bf16 %v1430, %v1429
    %v1804 = vpack.c.bf16 %v1432, %v1431
    %v1805 = vpack.c.bf16 %v1434, %v1433
    %v1806 = vpack.c.bf16 %v1436, %v1435
    %v1807 = vpack.c.bf16 %v1438, %v1437
    %v1808 = vpack.c.bf16 %v1440, %v1439
    %v1809 = vpack.c.bf16 %v1442, %v1441
    %v1810 = vpack.c.bf16 %v1444, %v1443
    %v1811 = vpack.c.bf16 %v1446, %v1445
    %v1812 = vpack.c.bf16 %v1448, %v1447
    %v1813 = vpack.c.bf16 %v1450, %v1449
    %v1814 = vpack.c.bf16 %v1452, %v1451
    %v1815 = vpack.c.bf16 %v1454, %v1453
    %v1816 = vpack.c.bf16 %v1456, %v1455
    %v1817 = vpack.c.bf16 %v1458, %v1457
    %v1818 = vpack.c.bf16 %v1460, %v1459
    %v1819 = vpack.c.bf16 %v1462, %v1461
    %v1820 = vpack.c.bf16 %v1464, %v1463
    %v1821 = vpack.c.bf16 %v1466, %v1465
    %v1822 = vpack.c.bf16 %v1468, %v1467
    %v1823 = vpack.c.bf16 %v1470, %v1469
    %v1824 = vpack.c.bf16 %v1472, %v1471
    %v1825 = vpack.c.bf16 %v1474, %v1473
    %v1826 = vpack.c.bf16 %v1476, %v1475
    %v1827 = vpack.c.bf16 %v1478, %v1477
    %v1828 = vpack.c.bf16 %v1480, %v1479
    %v1829 = vpack.c.bf16 %v1482, %v1481
    %v1830 = vpack.c.bf16 %v1484, %v1483
    %v1831 = vpack.c.bf16 %v1486, %v1485
    %v1832 = vpack.c.bf16 %v1488, %v1487
    %v1833 = vpack.c.bf16 %v1490, %v1489
    %v1834 = vpack.c.bf16 %v1492, %v1491
    %v1835 = vpack.c.bf16 %v1494, %v1493
    %v1836 = vpack.c.bf16 %v1496, %v1495
    %v1837 = vpack.c.bf16 %v1498, %v1497
    %v1838 = vpack.c.bf16 %v1500, %v1499
    %v1839 = vpack.c.bf16 %v1502, %v1501
    %v1840 = vpack.c.bf16 %v1504, %v1503
    %v1841 = vpack.c.bf16 %v1506, %v1505
    %v1842 = vpack.c.bf16 %v1508, %v1507
    %v1843 = vpack.c.bf16 %v1510, %v1509
    %v1844 = vpack.c.bf16 %v1512, %v1511
    %v1845 = vpack.c.bf16 %v1514, %v1513
    %v1846 = vpack.c.bf16 %v1516, %v1515
    %v1847 = vpack.c.bf16 %v1518, %v1517
    %v1848 = vpack.c.bf16 %v1520, %v1519
    %v1849 = vpack.c.bf16 %v1522, %v1521
    %v1850 = vpack.c.bf16 %v1524, %v1523
    %v1851 = vpack.c.bf16 %v1526, %v1525
    %v1852 = vpack.c.bf16 %v1528, %v1527
    %v1853 = vpack.c.bf16 %v1530, %v1529
    %v1854 = vpack.c.bf16 %v1532, %v1531
    %v1855 = vpack.c.bf16 %v1534, %v1533
    %v1856 = vpack.c.bf16 %v1536, %v1535
    %v1857 = vld [vmem:[#allocation3] sm:$0xff]
    %v1858 = vld [vmem:[#allocation3 + $0x8] sm:$0xff]
    %v1859 = vld [vmem:[#allocation3 + $0x10] sm:$0xff]
    %v1860 = vld [vmem:[#allocation3 + $0x18] sm:$0xff]
    %v1861 = vld [vmem:[#allocation3 + $0x20] sm:$0xff]
    %v1862 = vld [vmem:[#allocation3 + $0x28] sm:$0xff]
    %v1863 = vld [vmem:[#allocation3 + $0x30] sm:$0xff]
    %v1864 = vld [vmem:[#allocation3 + $0x38] sm:$0xff]
    %v1865 = vld [vmem:[#allocation3 + $0x40] sm:$0xff]
    %v1866 = vld [vmem:[#allocation3 + $0x48] sm:$0xff]
    %v1867 = vld [vmem:[#allocation3 + $0x50] sm:$0xff]
    %v1868 = vld [vmem:[#allocation3 + $0x58] sm:$0xff]
    %v1869 = vld [vmem:[#allocation3 + $0x60] sm:$0xff]
    %v1870 = vld [vmem:[#allocation3 + $0x68] sm:$0xff]
    %v1871 = vld [vmem:[#allocation3 + $0x70] sm:$0xff]
    %v1872 = vld [vmem:[#allocation3 + $0x78] sm:$0xff]
    %v1873 = vld [vmem:[#allocation3 + $0x80] sm:$0xff]
    %v1874 = vld [vmem:[#allocation3 + $0x88] sm:$0xff]
    %v1875 = vld [vmem:[#allocation3 + $0x90] sm:$0xff]
    %v1876 = vld [vmem:[#allocation3 + $0x98] sm:$0xff]
    %v1877 = vld [vmem:[#allocation3 + $0xa0] sm:$0xff]
    %v1878 = vld [vmem:[#allocation3 + $0xa8] sm:$0xff]
    %v1879 = vld [vmem:[#allocation3 + $0xb0] sm:$0xff]
    %v1880 = vld [vmem:[#allocation3 + $0xb8] sm:$0xff]
    %v1881 = vld [vmem:[#allocation3 + $0xc0] sm:$0xff]
    %v1882 = vld [vmem:[#allocation3 + $0xc8] sm:$0xff]
    %v1883 = vld [vmem:[#allocation3 + $0xd0] sm:$0xff]
    %v1884 = vld [vmem:[#allocation3 + $0xd8] sm:$0xff]
    %v1885 = vld [vmem:[#allocation3 + $0xe0] sm:$0xff]
    %v1886 = vld [vmem:[#allocation3 + $0xe8] sm:$0xff]
    %v1887 = vld [vmem:[#allocation3 + $0xf0] sm:$0xff]
    %v1888 = vld [vmem:[#allocation3 + $0xf8] sm:$0xff]
    %v1889 = vld [vmem:[#allocation3 + $0x100] sm:$0xff]
    %v1890 = vld [vmem:[#allocation3 + $0x108] sm:$0xff]
    %v1891 = vld [vmem:[#allocation3 + $0x110] sm:$0xff]
    %v1892 = vld [vmem:[#allocation3 + $0x118] sm:$0xff]
    %v1893 = vld [vmem:[#allocation3 + $0x120] sm:$0xff]
    %v1894 = vld [vmem:[#allocation3 + $0x128] sm:$0xff]
    %v1895 = vld [vmem:[#allocation3 + $0x130] sm:$0xff]
    %v1896 = vld [vmem:[#allocation3 + $0x138] sm:$0xff]
    %v1897 = vld [vmem:[#allocation3 + $0x140] sm:$0xff]
    %v1898 = vld [vmem:[#allocation3 + $0x148] sm:$0xff]
    %v1899 = vld [vmem:[#allocation3 + $0x150] sm:$0xff]
    %v1900 = vld [vmem:[#allocation3 + $0x158] sm:$0xff]
    %v1901 = vld [vmem:[#allocation3 + $0x160] sm:$0xff]
    %v1902 = vld [vmem:[#allocation3 + $0x168] sm:$0xff]
    %v1903 = vld [vmem:[#allocation3 + $0x170] sm:$0xff]
    %v1904 = vld [vmem:[#allocation3 + $0x178] sm:$0xff]
    %v1905 = vld [vmem:[#allocation3 + $0x180] sm:$0xff]
    %v1906 = vld [vmem:[#allocation3 + $0x188] sm:$0xff]
    %v1907 = vld [vmem:[#allocation3 + $0x190] sm:$0xff]
    %v1908 = vld [vmem:[#allocation3 + $0x198] sm:$0xff]
    %v1909 = vld [vmem:[#allocation3 + $0x1a0] sm:$0xff]
    %v1910 = vld [vmem:[#allocation3 + $0x1a8] sm:$0xff]
    %v1911 = vld [vmem:[#allocation3 + $0x1b0] sm:$0xff]
    %v1912 = vld [vmem:[#allocation3 + $0x1b8] sm:$0xff]
    %v1913 = vld [vmem:[#allocation3 + $0x1c0] sm:$0xff]
    %v1914 = vld [vmem:[#allocation3 + $0x1c8] sm:$0xff]
    %v1915 = vld [vmem:[#allocation3 + $0x1d0] sm:$0xff]
    %v1916 = vld [vmem:[#allocation3 + $0x1d8] sm:$0xff]
    %v1917 = vld [vmem:[#allocation3 + $0x1e0] sm:$0xff]
    %v1918 = vld [vmem:[#allocation3 + $0x1e8] sm:$0xff]
    %v1919 = vld [vmem:[#allocation3 + $0x1f0] sm:$0xff]
    %v1920 = vld [vmem:[#allocation3 + $0x1f8] sm:$0xff]
    %v1921 = vld [vmem:[#allocation3 + $0x200] sm:$0xff]
    %v1922 = vld [vmem:[#allocation3 + $0x208] sm:$0xff]
    %v1923 = vld [vmem:[#allocation3 + $0x210] sm:$0xff]
    %v1924 = vld [vmem:[#allocation3 + $0x218] sm:$0xff]
    %v1925 = vld [vmem:[#allocation3 + $0x220] sm:$0xff]
    %v1926 = vld [vmem:[#allocation3 + $0x228] sm:$0xff]
    %v1927 = vld [vmem:[#allocation3 + $0x230] sm:$0xff]
    %v1928 = vld [vmem:[#allocation3 + $0x238] sm:$0xff]
    %v1929 = vld [vmem:[#allocation3 + $0x240] sm:$0xff]
    %v1930 = vld [vmem:[#allocation3 + $0x248] sm:$0xff]
    %v1931 = vld [vmem:[#allocation3 + $0x250] sm:$0xff]
    %v1932 = vld [vmem:[#allocation3 + $0x258] sm:$0xff]
    %v1933 = vld [vmem:[#allocation3 + $0x260] sm:$0xff]
    %v1934 = vld [vmem:[#allocation3 + $0x268] sm:$0xff]
    %v1935 = vld [vmem:[#allocation3 + $0x270] sm:$0xff]
    %v1936 = vld [vmem:[#allocation3 + $0x278] sm:$0xff]
    %v1937 = vld [vmem:[#allocation3 + $0x280] sm:$0xff]
    %v1938 = vld [vmem:[#allocation3 + $0x288] sm:$0xff]
    %v1939 = vld [vmem:[#allocation3 + $0x290] sm:$0xff]
    %v1940 = vld [vmem:[#allocation3 + $0x298] sm:$0xff]
    %v1941 = vld [vmem:[#allocation3 + $0x2a0] sm:$0xff]
    %v1942 = vld [vmem:[#allocation3 + $0x2a8] sm:$0xff]
    %v1943 = vld [vmem:[#allocation3 + $0x2b0] sm:$0xff]
    %v1944 = vld [vmem:[#allocation3 + $0x2b8] sm:$0xff]
    %v1945 = vld [vmem:[#allocation3 + $0x2c0] sm:$0xff]
    %v1946 = vld [vmem:[#allocation3 + $0x2c8] sm:$0xff]
    %v1947 = vld [vmem:[#allocation3 + $0x2d0] sm:$0xff]
    %v1948 = vld [vmem:[#allocation3 + $0x2d8] sm:$0xff]
    %v1949 = vld [vmem:[#allocation3 + $0x2e0] sm:$0xff]
    %v1950 = vld [vmem:[#allocation3 + $0x2e8] sm:$0xff]
    %v1951 = vld [vmem:[#allocation3 + $0x2f0] sm:$0xff]
    %v1952 = vld [vmem:[#allocation3 + $0x2f8] sm:$0xff]
    %v1953 = vld [vmem:[#allocation3 + $0x300] sm:$0xff]
    %v1954 = vld [vmem:[#allocation3 + $0x308] sm:$0xff]
    %v1955 = vld [vmem:[#allocation3 + $0x310] sm:$0xff]
    %v1956 = vld [vmem:[#allocation3 + $0x318] sm:$0xff]
    %v1957 = vld [vmem:[#allocation3 + $0x320] sm:$0xff]
    %v1958 = vld [vmem:[#allocation3 + $0x328] sm:$0xff]
    %v1959 = vld [vmem:[#allocation3 + $0x330] sm:$0xff]
    %v1960 = vld [vmem:[#allocation3 + $0x338] sm:$0xff]
    %v1961 = vld [vmem:[#allocation3 + $0x340] sm:$0xff]
    %v1962 = vld [vmem:[#allocation3 + $0x348] sm:$0xff]
    %v1963 = vld [vmem:[#allocation3 + $0x350] sm:$0xff]
    %v1964 = vld [vmem:[#allocation3 + $0x358] sm:$0xff]
    %v1965 = vld [vmem:[#allocation3 + $0x360] sm:$0xff]
    %v1966 = vld [vmem:[#allocation3 + $0x368] sm:$0xff]
    %v1967 = vld [vmem:[#allocation3 + $0x370] sm:$0xff]
    %v1968 = vld [vmem:[#allocation3 + $0x378] sm:$0xff]
    %v1969 = vld [vmem:[#allocation3 + $0x380] sm:$0xff]
    %v1970 = vld [vmem:[#allocation3 + $0x388] sm:$0xff]
    %v1971 = vld [vmem:[#allocation3 + $0x390] sm:$0xff]
    %v1972 = vld [vmem:[#allocation3 + $0x398] sm:$0xff]
    %v1973 = vld [vmem:[#allocation3 + $0x3a0] sm:$0xff]
    %v1974 = vld [vmem:[#allocation3 + $0x3a8] sm:$0xff]
    %v1975 = vld [vmem:[#allocation3 + $0x3b0] sm:$0xff]
    %v1976 = vld [vmem:[#allocation3 + $0x3b8] sm:$0xff]
    %v1977 = vld [vmem:[#allocation3 + $0x3c0] sm:$0xff]
    %v1978 = vld [vmem:[#allocation3 + $0x3c8] sm:$0xff]
    %v1979 = vld [vmem:[#allocation3 + $0x3d0] sm:$0xff]
    %v1980 = vld [vmem:[#allocation3 + $0x3d8] sm:$0xff]
    %v1981 = vld [vmem:[#allocation3 + $0x3e0] sm:$0xff]
    %v1982 = vld [vmem:[#allocation3 + $0x3e8] sm:$0xff]
    %v1983 = vld [vmem:[#allocation3 + $0x3f0] sm:$0xff]
    %v1984 = vld [vmem:[#allocation3 + $0x3f8] sm:$0xff]
    %v1985 = vld [vmem:[#allocation3 + $0x400] sm:$0xff]
    %v1986 = vld [vmem:[#allocation3 + $0x408] sm:$0xff]
    %v1987 = vld [vmem:[#allocation3 + $0x410] sm:$0xff]
    %v1988 = vld [vmem:[#allocation3 + $0x418] sm:$0xff]
    %v1989 = vld [vmem:[#allocation3 + $0x420] sm:$0xff]
    %v1990 = vld [vmem:[#allocation3 + $0x428] sm:$0xff]
    %v1991 = vld [vmem:[#allocation3 + $0x430] sm:$0xff]
    %v1992 = vld [vmem:[#allocation3 + $0x438] sm:$0xff]
    %v1993 = vld [vmem:[#allocation3 + $0x440] sm:$0xff]
    %v1994 = vld [vmem:[#allocation3 + $0x448] sm:$0xff]
    %v1995 = vld [vmem:[#allocation3 + $0x450] sm:$0xff]
    %v1996 = vld [vmem:[#allocation3 + $0x458] sm:$0xff]
    %v1997 = vld [vmem:[#allocation3 + $0x460] sm:$0xff]
    %v1998 = vld [vmem:[#allocation3 + $0x468] sm:$0xff]
    %v1999 = vld [vmem:[#allocation3 + $0x470] sm:$0xff]
    %v2000 = vld [vmem:[#allocation3 + $0x478] sm:$0xff]
    %v2001 = vld [vmem:[#allocation3 + $0x480] sm:$0xff]
    %v2002 = vld [vmem:[#allocation3 + $0x488] sm:$0xff]
    %v2003 = vld [vmem:[#allocation3 + $0x490] sm:$0xff]
    %v2004 = vld [vmem:[#allocation3 + $0x498] sm:$0xff]
    %v2005 = vld [vmem:[#allocation3 + $0x4a0] sm:$0xff]
    %v2006 = vld [vmem:[#allocation3 + $0x4a8] sm:$0xff]
    %v2007 = vld [vmem:[#allocation3 + $0x4b0] sm:$0xff]
    %v2008 = vld [vmem:[#allocation3 + $0x4b8] sm:$0xff]
    %v2009 = vld [vmem:[#allocation3 + $0x4c0] sm:$0xff]
    %v2010 = vld [vmem:[#allocation3 + $0x4c8] sm:$0xff]
    %v2011 = vld [vmem:[#allocation3 + $0x4d0] sm:$0xff]
    %v2012 = vld [vmem:[#allocation3 + $0x4d8] sm:$0xff]
    %v2013 = vld [vmem:[#allocation3 + $0x4e0] sm:$0xff]
    %v2014 = vld [vmem:[#allocation3 + $0x4e8] sm:$0xff]
    %v2015 = vld [vmem:[#allocation3 + $0x4f0] sm:$0xff]
    %v2016 = vld [vmem:[#allocation3 + $0x4f8] sm:$0xff]
    %v2017 = vld [vmem:[#allocation3 + $0x500] sm:$0xff]
    %v2018 = vld [vmem:[#allocation3 + $0x508] sm:$0xff]
    %v2019 = vld [vmem:[#allocation3 + $0x510] sm:$0xff]
    %v2020 = vld [vmem:[#allocation3 + $0x518] sm:$0xff]
    %v2021 = vld [vmem:[#allocation3 + $0x520] sm:$0xff]
    %v2022 = vld [vmem:[#allocation3 + $0x528] sm:$0xff]
    %v2023 = vld [vmem:[#allocation3 + $0x530] sm:$0xff]
    %v2024 = vld [vmem:[#allocation3 + $0x538] sm:$0xff]
    %v2025 = vld [vmem:[#allocation3 + $0x540] sm:$0xff]
    %v2026 = vld [vmem:[#allocation3 + $0x548] sm:$0xff]
    %v2027 = vld [vmem:[#allocation3 + $0x550] sm:$0xff]
    %v2028 = vld [vmem:[#allocation3 + $0x558] sm:$0xff]
    %v2029 = vld [vmem:[#allocation3 + $0x560] sm:$0xff]
    %v2030 = vld [vmem:[#allocation3 + $0x568] sm:$0xff]
    %v2031 = vld [vmem:[#allocation3 + $0x570] sm:$0xff]
    %v2032 = vld [vmem:[#allocation3 + $0x578] sm:$0xff]
    %v2033 = vld [vmem:[#allocation3 + $0x580] sm:$0xff]
    %v2034 = vld [vmem:[#allocation3 + $0x588] sm:$0xff]
    %v2035 = vld [vmem:[#allocation3 + $0x590] sm:$0xff]
    %v2036 = vld [vmem:[#allocation3 + $0x598] sm:$0xff]
    %v2037 = vld [vmem:[#allocation3 + $0x5a0] sm:$0xff]
    %v2038 = vld [vmem:[#allocation3 + $0x5a8] sm:$0xff]
    %v2039 = vld [vmem:[#allocation3 + $0x5b0] sm:$0xff]
    %v2040 = vld [vmem:[#allocation3 + $0x5b8] sm:$0xff]
    %v2041 = vld [vmem:[#allocation3 + $0x5c0] sm:$0xff]
    %v2042 = vld [vmem:[#allocation3 + $0x5c8] sm:$0xff]
    %v2043 = vld [vmem:[#allocation3 + $0x5d0] sm:$0xff]
    %v2044 = vld [vmem:[#allocation3 + $0x5d8] sm:$0xff]
    %v2045 = vld [vmem:[#allocation3 + $0x5e0] sm:$0xff]
    %v2046 = vld [vmem:[#allocation3 + $0x5e8] sm:$0xff]
    %v2047 = vld [vmem:[#allocation3 + $0x5f0] sm:$0xff]
    %v2048 = vld [vmem:[#allocation3 + $0x5f8] sm:$0xff]
    %v2049 = vld [vmem:[#allocation3 + $0x600] sm:$0xff]
    %v2050 = vld [vmem:[#allocation3 + $0x608] sm:$0xff]
    %v2051 = vld [vmem:[#allocation3 + $0x610] sm:$0xff]
    %v2052 = vld [vmem:[#allocation3 + $0x618] sm:$0xff]
    %v2053 = vld [vmem:[#allocation3 + $0x620] sm:$0xff]
    %v2054 = vld [vmem:[#allocation3 + $0x628] sm:$0xff]
    %v2055 = vld [vmem:[#allocation3 + $0x630] sm:$0xff]
    %v2056 = vld [vmem:[#allocation3 + $0x638] sm:$0xff]
    %v2057 = vld [vmem:[#allocation3 + $0x640] sm:$0xff]
    %v2058 = vld [vmem:[#allocation3 + $0x648] sm:$0xff]
    %v2059 = vld [vmem:[#allocation3 + $0x650] sm:$0xff]
    %v2060 = vld [vmem:[#allocation3 + $0x658] sm:$0xff]
    %v2061 = vld [vmem:[#allocation3 + $0x660] sm:$0xff]
    %v2062 = vld [vmem:[#allocation3 + $0x668] sm:$0xff]
    %v2063 = vld [vmem:[#allocation3 + $0x670] sm:$0xff]
    %v2064 = vld [vmem:[#allocation3 + $0x678] sm:$0xff]
    %v2065 = vld [vmem:[#allocation3 + $0x680] sm:$0xff]
    %v2066 = vld [vmem:[#allocation3 + $0x688] sm:$0xff]
    %v2067 = vld [vmem:[#allocation3 + $0x690] sm:$0xff]
    %v2068 = vld [vmem:[#allocation3 + $0x698] sm:$0xff]
    %v2069 = vld [vmem:[#allocation3 + $0x6a0] sm:$0xff]
    %v2070 = vld [vmem:[#allocation3 + $0x6a8] sm:$0xff]
    %v2071 = vld [vmem:[#allocation3 + $0x6b0] sm:$0xff]
    %v2072 = vld [vmem:[#allocation3 + $0x6b8] sm:$0xff]
    %v2073 = vld [vmem:[#allocation3 + $0x6c0] sm:$0xff]
    %v2074 = vld [vmem:[#allocation3 + $0x6c8] sm:$0xff]
    %v2075 = vld [vmem:[#allocation3 + $0x6d0] sm:$0xff]
    %v2076 = vld [vmem:[#allocation3 + $0x6d8] sm:$0xff]
    %v2077 = vld [vmem:[#allocation3 + $0x6e0] sm:$0xff]
    %v2078 = vld [vmem:[#allocation3 + $0x6e8] sm:$0xff]
    %v2079 = vld [vmem:[#allocation3 + $0x6f0] sm:$0xff]
    %v2080 = vld [vmem:[#allocation3 + $0x6f8] sm:$0xff]
    %v2081 = vld [vmem:[#allocation3 + $0x700] sm:$0xff]
    %v2082 = vld [vmem:[#allocation3 + $0x708] sm:$0xff]
    %v2083 = vld [vmem:[#allocation3 + $0x710] sm:$0xff]
    %v2084 = vld [vmem:[#allocation3 + $0x718] sm:$0xff]
    %v2085 = vld [vmem:[#allocation3 + $0x720] sm:$0xff]
    %v2086 = vld [vmem:[#allocation3 + $0x728] sm:$0xff]
    %v2087 = vld [vmem:[#allocation3 + $0x730] sm:$0xff]
    %v2088 = vld [vmem:[#allocation3 + $0x738] sm:$0xff]
    %v2089 = vld [vmem:[#allocation3 + $0x740] sm:$0xff]
    %v2090 = vld [vmem:[#allocation3 + $0x748] sm:$0xff]
    %v2091 = vld [vmem:[#allocation3 + $0x750] sm:$0xff]
    %v2092 = vld [vmem:[#allocation3 + $0x758] sm:$0xff]
    %v2093 = vld [vmem:[#allocation3 + $0x760] sm:$0xff]
    %v2094 = vld [vmem:[#allocation3 + $0x768] sm:$0xff]
    %v2095 = vld [vmem:[#allocation3 + $0x770] sm:$0xff]
    %v2096 = vld [vmem:[#allocation3 + $0x778] sm:$0xff]
    %v2097 = vld [vmem:[#allocation3 + $0x780] sm:$0xff]
    %v2098 = vld [vmem:[#allocation3 + $0x788] sm:$0xff]
    %v2099 = vld [vmem:[#allocation3 + $0x790] sm:$0xff]
    %v2100 = vld [vmem:[#allocation3 + $0x798] sm:$0xff]
    %v2101 = vld [vmem:[#allocation3 + $0x7a0] sm:$0xff]
    %v2102 = vld [vmem:[#allocation3 + $0x7a8] sm:$0xff]
    %v2103 = vld [vmem:[#allocation3 + $0x7b0] sm:$0xff]
    %v2104 = vld [vmem:[#allocation3 + $0x7b8] sm:$0xff]
    %v2105 = vld [vmem:[#allocation3 + $0x7c0] sm:$0xff]
    %v2106 = vld [vmem:[#allocation3 + $0x7c8] sm:$0xff]
    %v2107 = vld [vmem:[#allocation3 + $0x7d0] sm:$0xff]
    %v2108 = vld [vmem:[#allocation3 + $0x7d8] sm:$0xff]
    %v2109 = vld [vmem:[#allocation3 + $0x7e0] sm:$0xff]
    %v2110 = vld [vmem:[#allocation3 + $0x7e8] sm:$0xff]
    %v2111 = vld [vmem:[#allocation3 + $0x7f0] sm:$0xff]
    %v2112 = vld [vmem:[#allocation3 + $0x7f8] sm:$0xff]
    %v2113 = vld [vmem:[#allocation3 + $0x800] sm:$0xff]
    %v2114 = vld [vmem:[#allocation3 + $0x808] sm:$0xff]
    %v2115 = vld [vmem:[#allocation3 + $0x810] sm:$0xff]
    %v2116 = vld [vmem:[#allocation3 + $0x818] sm:$0xff]
    %v2117 = vld [vmem:[#allocation3 + $0x820] sm:$0xff]
    %v2118 = vld [vmem:[#allocation3 + $0x828] sm:$0xff]
    %v2119 = vld [vmem:[#allocation3 + $0x830] sm:$0xff]
    %v2120 = vld [vmem:[#allocation3 + $0x838] sm:$0xff]
    %v2121 = vld [vmem:[#allocation3 + $0x840] sm:$0xff]
    %v2122 = vld [vmem:[#allocation3 + $0x848] sm:$0xff]
    %v2123 = vld [vmem:[#allocation3 + $0x850] sm:$0xff]
    %v2124 = vld [vmem:[#allocation3 + $0x858] sm:$0xff]
    %v2125 = vld [vmem:[#allocation3 + $0x860] sm:$0xff]
    %v2126 = vld [vmem:[#allocation3 + $0x868] sm:$0xff]
    %v2127 = vld [vmem:[#allocation3 + $0x870] sm:$0xff]
    %v2128 = vld [vmem:[#allocation3 + $0x878] sm:$0xff]
    %v2129 = vld [vmem:[#allocation3 + $0x880] sm:$0xff]
    %v2130 = vld [vmem:[#allocation3 + $0x888] sm:$0xff]
    %v2131 = vld [vmem:[#allocation3 + $0x890] sm:$0xff]
    %v2132 = vld [vmem:[#allocation3 + $0x898] sm:$0xff]
    %v2133 = vld [vmem:[#allocation3 + $0x8a0] sm:$0xff]
    %v2134 = vld [vmem:[#allocation3 + $0x8a8] sm:$0xff]
    %v2135 = vld [vmem:[#allocation3 + $0x8b0] sm:$0xff]
    %v2136 = vld [vmem:[#allocation3 + $0x8b8] sm:$0xff]
    %v2137 = vld [vmem:[#allocation3 + $0x8c0] sm:$0xff]
    %v2138 = vld [vmem:[#allocation3 + $0x8c8] sm:$0xff]
    %v2139 = vld [vmem:[#allocation3 + $0x8d0] sm:$0xff]
    %v2140 = vld [vmem:[#allocation3 + $0x8d8] sm:$0xff]
    %v2141 = vld [vmem:[#allocation3 + $0x8e0] sm:$0xff]
    %v2142 = vld [vmem:[#allocation3 + $0x8e8] sm:$0xff]
    %v2143 = vld [vmem:[#allocation3 + $0x8f0] sm:$0xff]
    %v2144 = vld [vmem:[#allocation3 + $0x8f8] sm:$0xff]
    %v2145 = vld [vmem:[#allocation3 + $0x900] sm:$0xff]
    %v2146 = vld [vmem:[#allocation3 + $0x908] sm:$0xff]
    %v2147 = vld [vmem:[#allocation3 + $0x910] sm:$0xff]
    %v2148 = vld [vmem:[#allocation3 + $0x918] sm:$0xff]
    %v2149 = vld [vmem:[#allocation3 + $0x920] sm:$0xff]
    %v2150 = vld [vmem:[#allocation3 + $0x928] sm:$0xff]
    %v2151 = vld [vmem:[#allocation3 + $0x930] sm:$0xff]
    %v2152 = vld [vmem:[#allocation3 + $0x938] sm:$0xff]
    %v2153 = vld [vmem:[#allocation3 + $0x940] sm:$0xff]
    %v2154 = vld [vmem:[#allocation3 + $0x948] sm:$0xff]
    %v2155 = vld [vmem:[#allocation3 + $0x950] sm:$0xff]
    %v2156 = vld [vmem:[#allocation3 + $0x958] sm:$0xff]
    %v2157 = vld [vmem:[#allocation3 + $0x960] sm:$0xff]
    %v2158 = vld [vmem:[#allocation3 + $0x968] sm:$0xff]
    %v2159 = vld [vmem:[#allocation3 + $0x970] sm:$0xff]
    %v2160 = vld [vmem:[#allocation3 + $0x978] sm:$0xff]
    %v2161 = vld [vmem:[#allocation3 + $0x980] sm:$0xff]
    %v2162 = vld [vmem:[#allocation3 + $0x988] sm:$0xff]
    %v2163 = vld [vmem:[#allocation3 + $0x990] sm:$0xff]
    %v2164 = vld [vmem:[#allocation3 + $0x998] sm:$0xff]
    %v2165 = vld [vmem:[#allocation3 + $0x9a0] sm:$0xff]
    %v2166 = vld [vmem:[#allocation3 + $0x9a8] sm:$0xff]
    %v2167 = vld [vmem:[#allocation3 + $0x9b0] sm:$0xff]
    %v2168 = vld [vmem:[#allocation3 + $0x9b8] sm:$0xff]
    %v2169 = vld [vmem:[#allocation3 + $0x9c0] sm:$0xff]
    %v2170 = vld [vmem:[#allocation3 + $0x9c8] sm:$0xff]
    %v2171 = vld [vmem:[#allocation3 + $0x9d0] sm:$0xff]
    %v2172 = vld [vmem:[#allocation3 + $0x9d8] sm:$0xff]
    %v2173 = vld [vmem:[#allocation3 + $0x9e0] sm:$0xff]
    %v2174 = vld [vmem:[#allocation3 + $0x9e8] sm:$0xff]
    %v2175 = vld [vmem:[#allocation3 + $0x9f0] sm:$0xff]
    %v2176 = vld [vmem:[#allocation3 + $0x9f8] sm:$0xff]
    %v2497 = vunpack.c.l.b16 %v1857
    %v2498 = vunpack.c.h.b16 %v1857
    %v2499 = vunpack.c.l.b16 %v1858
    %v2500 = vunpack.c.h.b16 %v1858
    %v2501 = vunpack.c.l.b16 %v1859
    %v2502 = vunpack.c.h.b16 %v1859
    %v2503 = vunpack.c.l.b16 %v1860
    %v2504 = vunpack.c.h.b16 %v1860
    %v2505 = vunpack.c.l.b16 %v1861
    %v2506 = vunpack.c.h.b16 %v1861
    %v2507 = vunpack.c.l.b16 %v1862
    %v2508 = vunpack.c.h.b16 %v1862
    %v2509 = vunpack.c.l.b16 %v1863
    %v2510 = vunpack.c.h.b16 %v1863
    %v2511 = vunpack.c.l.b16 %v1864
    %v2512 = vunpack.c.h.b16 %v1864
    %v2513 = vunpack.c.l.b16 %v1865
    %v2514 = vunpack.c.h.b16 %v1865
    %v2515 = vunpack.c.l.b16 %v1866
    %v2516 = vunpack.c.h.b16 %v1866
    %v2517 = vunpack.c.l.b16 %v1867
    %v2518 = vunpack.c.h.b16 %v1867
    %v2519 = vunpack.c.l.b16 %v1868
    %v2520 = vunpack.c.h.b16 %v1868
    %v2521 = vunpack.c.l.b16 %v1869
    %v2522 = vunpack.c.h.b16 %v1869
    %v2523 = vunpack.c.l.b16 %v1870
    %v2524 = vunpack.c.h.b16 %v1870
    %v2525 = vunpack.c.l.b16 %v1871
    %v2526 = vunpack.c.h.b16 %v1871
    %v2527 = vunpack.c.l.b16 %v1872
    %v2528 = vunpack.c.h.b16 %v1872
    %v2529 = vunpack.c.l.b16 %v1873
    %v2530 = vunpack.c.h.b16 %v1873
    %v2531 = vunpack.c.l.b16 %v1874
    %v2532 = vunpack.c.h.b16 %v1874
    %v2533 = vunpack.c.l.b16 %v1875
    %v2534 = vunpack.c.h.b16 %v1875
    %v2535 = vunpack.c.l.b16 %v1876
    %v2536 = vunpack.c.h.b16 %v1876
    %v2537 = vunpack.c.l.b16 %v1877
    %v2538 = vunpack.c.h.b16 %v1877
    %v2539 = vunpack.c.l.b16 %v1878
    %v2540 = vunpack.c.h.b16 %v1878
    %v2541 = vunpack.c.l.b16 %v1879
    %v2542 = vunpack.c.h.b16 %v1879
    %v2543 = vunpack.c.l.b16 %v1880
    %v2544 = vunpack.c.h.b16 %v1880
    %v2545 = vunpack.c.l.b16 %v1881
    %v2546 = vunpack.c.h.b16 %v1881
    %v2547 = vunpack.c.l.b16 %v1882
    %v2548 = vunpack.c.h.b16 %v1882
    %v2549 = vunpack.c.l.b16 %v1883
    %v2550 = vunpack.c.h.b16 %v1883
    %v2551 = vunpack.c.l.b16 %v1884
    %v2552 = vunpack.c.h.b16 %v1884
    %v2553 = vunpack.c.l.b16 %v1885
    %v2554 = vunpack.c.h.b16 %v1885
    %v2555 = vunpack.c.l.b16 %v1886
    %v2556 = vunpack.c.h.b16 %v1886
    %v2557 = vunpack.c.l.b16 %v1887
    %v2558 = vunpack.c.h.b16 %v1887
    %v2559 = vunpack.c.l.b16 %v1888
    %v2560 = vunpack.c.h.b16 %v1888
    %v2561 = vunpack.c.l.b16 %v1889
    %v2562 = vunpack.c.h.b16 %v1889
    %v2563 = vunpack.c.l.b16 %v1890
    %v2564 = vunpack.c.h.b16 %v1890
    %v2565 = vunpack.c.l.b16 %v1891
    %v2566 = vunpack.c.h.b16 %v1891
    %v2567 = vunpack.c.l.b16 %v1892
    %v2568 = vunpack.c.h.b16 %v1892
    %v2569 = vunpack.c.l.b16 %v1893
    %v2570 = vunpack.c.h.b16 %v1893
    %v2571 = vunpack.c.l.b16 %v1894
    %v2572 = vunpack.c.h.b16 %v1894
    %v2573 = vunpack.c.l.b16 %v1895
    %v2574 = vunpack.c.h.b16 %v1895
    %v2575 = vunpack.c.l.b16 %v1896
    %v2576 = vunpack.c.h.b16 %v1896
    %v2577 = vunpack.c.l.b16 %v1897
    %v2578 = vunpack.c.h.b16 %v1897
    %v2579 = vunpack.c.l.b16 %v1898
    %v2580 = vunpack.c.h.b16 %v1898
    %v2581 = vunpack.c.l.b16 %v1899
    %v2582 = vunpack.c.h.b16 %v1899
    %v2583 = vunpack.c.l.b16 %v1900
    %v2584 = vunpack.c.h.b16 %v1900
    %v2585 = vunpack.c.l.b16 %v1901
    %v2586 = vunpack.c.h.b16 %v1901
    %v2587 = vunpack.c.l.b16 %v1902
    %v2588 = vunpack.c.h.b16 %v1902
    %v2589 = vunpack.c.l.b16 %v1903
    %v2590 = vunpack.c.h.b16 %v1903
    %v2591 = vunpack.c.l.b16 %v1904
    %v2592 = vunpack.c.h.b16 %v1904
    %v2593 = vunpack.c.l.b16 %v1905
    %v2594 = vunpack.c.h.b16 %v1905
    %v2595 = vunpack.c.l.b16 %v1906
    %v2596 = vunpack.c.h.b16 %v1906
    %v2597 = vunpack.c.l.b16 %v1907
    %v2598 = vunpack.c.h.b16 %v1907
    %v2599 = vunpack.c.l.b16 %v1908
    %v2600 = vunpack.c.h.b16 %v1908
    %v2601 = vunpack.c.l.b16 %v1909
    %v2602 = vunpack.c.h.b16 %v1909
    %v2603 = vunpack.c.l.b16 %v1910
    %v2604 = vunpack.c.h.b16 %v1910
    %v2605 = vunpack.c.l.b16 %v1911
    %v2606 = vunpack.c.h.b16 %v1911
    %v2607 = vunpack.c.l.b16 %v1912
    %v2608 = vunpack.c.h.b16 %v1912
    %v2609 = vunpack.c.l.b16 %v1913
    %v2610 = vunpack.c.h.b16 %v1913
    %v2611 = vunpack.c.l.b16 %v1914
    %v2612 = vunpack.c.h.b16 %v1914
    %v2613 = vunpack.c.l.b16 %v1915
    %v2614 = vunpack.c.h.b16 %v1915
    %v2615 = vunpack.c.l.b16 %v1916
    %v2616 = vunpack.c.h.b16 %v1916
    %v2617 = vunpack.c.l.b16 %v1917
    %v2618 = vunpack.c.h.b16 %v1917
    %v2619 = vunpack.c.l.b16 %v1918
    %v2620 = vunpack.c.h.b16 %v1918
    %v2621 = vunpack.c.l.b16 %v1919
    %v2622 = vunpack.c.h.b16 %v1919
    %v2623 = vunpack.c.l.b16 %v1920
    %v2624 = vunpack.c.h.b16 %v1920
    %v2625 = vunpack.c.l.b16 %v1921
    %v2626 = vunpack.c.h.b16 %v1921
    %v2627 = vunpack.c.l.b16 %v1922
    %v2628 = vunpack.c.h.b16 %v1922
    %v2629 = vunpack.c.l.b16 %v1923
    %v2630 = vunpack.c.h.b16 %v1923
    %v2631 = vunpack.c.l.b16 %v1924
    %v2632 = vunpack.c.h.b16 %v1924
    %v2633 = vunpack.c.l.b16 %v1925
    %v2634 = vunpack.c.h.b16 %v1925
    %v2635 = vunpack.c.l.b16 %v1926
    %v2636 = vunpack.c.h.b16 %v1926
    %v2637 = vunpack.c.l.b16 %v1927
    %v2638 = vunpack.c.h.b16 %v1927
    %v2639 = vunpack.c.l.b16 %v1928
    %v2640 = vunpack.c.h.b16 %v1928
    %v2641 = vunpack.c.l.b16 %v1929
    %v2642 = vunpack.c.h.b16 %v1929
    %v2643 = vunpack.c.l.b16 %v1930
    %v2644 = vunpack.c.h.b16 %v1930
    %v2645 = vunpack.c.l.b16 %v1931
    %v2646 = vunpack.c.h.b16 %v1931
    %v2647 = vunpack.c.l.b16 %v1932
    %v2648 = vunpack.c.h.b16 %v1932
    %v2649 = vunpack.c.l.b16 %v1933
    %v2650 = vunpack.c.h.b16 %v1933
    %v2651 = vunpack.c.l.b16 %v1934
    %v2652 = vunpack.c.h.b16 %v1934
    %v2653 = vunpack.c.l.b16 %v1935
    %v2654 = vunpack.c.h.b16 %v1935
    %v2655 = vunpack.c.l.b16 %v1936
    %v2656 = vunpack.c.h.b16 %v1936
    %v2657 = vunpack.c.l.b16 %v1937
    %v2658 = vunpack.c.h.b16 %v1937
    %v2659 = vunpack.c.l.b16 %v1938
    %v2660 = vunpack.c.h.b16 %v1938
    %v2661 = vunpack.c.l.b16 %v1939
    %v2662 = vunpack.c.h.b16 %v1939
    %v2663 = vunpack.c.l.b16 %v1940
    %v2664 = vunpack.c.h.b16 %v1940
    %v2665 = vunpack.c.l.b16 %v1941
    %v2666 = vunpack.c.h.b16 %v1941
    %v2667 = vunpack.c.l.b16 %v1942
    %v2668 = vunpack.c.h.b16 %v1942
    %v2669 = vunpack.c.l.b16 %v1943
    %v2670 = vunpack.c.h.b16 %v1943
    %v2671 = vunpack.c.l.b16 %v1944
    %v2672 = vunpack.c.h.b16 %v1944
    %v2673 = vunpack.c.l.b16 %v1945
    %v2674 = vunpack.c.h.b16 %v1945
    %v2675 = vunpack.c.l.b16 %v1946
    %v2676 = vunpack.c.h.b16 %v1946
    %v2677 = vunpack.c.l.b16 %v1947
    %v2678 = vunpack.c.h.b16 %v1947
    %v2679 = vunpack.c.l.b16 %v1948
    %v2680 = vunpack.c.h.b16 %v1948
    %v2681 = vunpack.c.l.b16 %v1949
    %v2682 = vunpack.c.h.b16 %v1949
    %v2683 = vunpack.c.l.b16 %v1950
    %v2684 = vunpack.c.h.b16 %v1950
    %v2685 = vunpack.c.l.b16 %v1951
    %v2686 = vunpack.c.h.b16 %v1951
    %v2687 = vunpack.c.l.b16 %v1952
    %v2688 = vunpack.c.h.b16 %v1952
    %v2689 = vunpack.c.l.b16 %v1953
    %v2690 = vunpack.c.h.b16 %v1953
    %v2691 = vunpack.c.l.b16 %v1954
    %v2692 = vunpack.c.h.b16 %v1954
    %v2693 = vunpack.c.l.b16 %v1955
    %v2694 = vunpack.c.h.b16 %v1955
    %v2695 = vunpack.c.l.b16 %v1956
    %v2696 = vunpack.c.h.b16 %v1956
    %v2697 = vunpack.c.l.b16 %v1957
    %v2698 = vunpack.c.h.b16 %v1957
    %v2699 = vunpack.c.l.b16 %v1958
    %v2700 = vunpack.c.h.b16 %v1958
    %v2701 = vunpack.c.l.b16 %v1959
    %v2702 = vunpack.c.h.b16 %v1959
    %v2703 = vunpack.c.l.b16 %v1960
    %v2704 = vunpack.c.h.b16 %v1960
    %v2705 = vunpack.c.l.b16 %v1961
    %v2706 = vunpack.c.h.b16 %v1961
    %v2707 = vunpack.c.l.b16 %v1962
    %v2708 = vunpack.c.h.b16 %v1962
    %v2709 = vunpack.c.l.b16 %v1963
    %v2710 = vunpack.c.h.b16 %v1963
    %v2711 = vunpack.c.l.b16 %v1964
    %v2712 = vunpack.c.h.b16 %v1964
    %v2713 = vunpack.c.l.b16 %v1965
    %v2714 = vunpack.c.h.b16 %v1965
    %v2715 = vunpack.c.l.b16 %v1966
    %v2716 = vunpack.c.h.b16 %v1966
    %v2717 = vunpack.c.l.b16 %v1967
    %v2718 = vunpack.c.h.b16 %v1967
    %v2719 = vunpack.c.l.b16 %v1968
    %v2720 = vunpack.c.h.b16 %v1968
    %v2721 = vunpack.c.l.b16 %v1969
    %v2722 = vunpack.c.h.b16 %v1969
    %v2723 = vunpack.c.l.b16 %v1970
    %v2724 = vunpack.c.h.b16 %v1970
    %v2725 = vunpack.c.l.b16 %v1971
    %v2726 = vunpack.c.h.b16 %v1971
    %v2727 = vunpack.c.l.b16 %v1972
    %v2728 = vunpack.c.h.b16 %v1972
    %v2729 = vunpack.c.l.b16 %v1973
    %v2730 = vunpack.c.h.b16 %v1973
    %v2731 = vunpack.c.l.b16 %v1974
    %v2732 = vunpack.c.h.b16 %v1974
    %v2733 = vunpack.c.l.b16 %v1975
    %v2734 = vunpack.c.h.b16 %v1975
    %v2735 = vunpack.c.l.b16 %v1976
    %v2736 = vunpack.c.h.b16 %v1976
    %v2737 = vunpack.c.l.b16 %v1977
    %v2738 = vunpack.c.h.b16 %v1977
    %v2739 = vunpack.c.l.b16 %v1978
    %v2740 = vunpack.c.h.b16 %v1978
    %v2741 = vunpack.c.l.b16 %v1979
    %v2742 = vunpack.c.h.b16 %v1979
    %v2743 = vunpack.c.l.b16 %v1980
    %v2744 = vunpack.c.h.b16 %v1980
    %v2745 = vunpack.c.l.b16 %v1981
    %v2746 = vunpack.c.h.b16 %v1981
    %v2747 = vunpack.c.l.b16 %v1982
    %v2748 = vunpack.c.h.b16 %v1982
    %v2749 = vunpack.c.l.b16 %v1983
    %v2750 = vunpack.c.h.b16 %v1983
    %v2751 = vunpack.c.l.b16 %v1984
    %v2752 = vunpack.c.h.b16 %v1984
    %v2753 = vunpack.c.l.b16 %v1985
    %v2754 = vunpack.c.h.b16 %v1985
    %v2755 = vunpack.c.l.b16 %v1986
    %v2756 = vunpack.c.h.b16 %v1986
    %v2757 = vunpack.c.l.b16 %v1987
    %v2758 = vunpack.c.h.b16 %v1987
    %v2759 = vunpack.c.l.b16 %v1988
    %v2760 = vunpack.c.h.b16 %v1988
    %v2761 = vunpack.c.l.b16 %v1989
    %v2762 = vunpack.c.h.b16 %v1989
    %v2763 = vunpack.c.l.b16 %v1990
    %v2764 = vunpack.c.h.b16 %v1990
    %v2765 = vunpack.c.l.b16 %v1991
    %v2766 = vunpack.c.h.b16 %v1991
    %v2767 = vunpack.c.l.b16 %v1992
    %v2768 = vunpack.c.h.b16 %v1992
    %v2769 = vunpack.c.l.b16 %v1993
    %v2770 = vunpack.c.h.b16 %v1993
    %v2771 = vunpack.c.l.b16 %v1994
    %v2772 = vunpack.c.h.b16 %v1994
    %v2773 = vunpack.c.l.b16 %v1995
    %v2774 = vunpack.c.h.b16 %v1995
    %v2775 = vunpack.c.l.b16 %v1996
    %v2776 = vunpack.c.h.b16 %v1996
    %v2777 = vunpack.c.l.b16 %v1997
    %v2778 = vunpack.c.h.b16 %v1997
    %v2779 = vunpack.c.l.b16 %v1998
    %v2780 = vunpack.c.h.b16 %v1998
    %v2781 = vunpack.c.l.b16 %v1999
    %v2782 = vunpack.c.h.b16 %v1999
    %v2783 = vunpack.c.l.b16 %v2000
    %v2784 = vunpack.c.h.b16 %v2000
    %v2785 = vunpack.c.l.b16 %v2001
    %v2786 = vunpack.c.h.b16 %v2001
    %v2787 = vunpack.c.l.b16 %v2002
    %v2788 = vunpack.c.h.b16 %v2002
    %v2789 = vunpack.c.l.b16 %v2003
    %v2790 = vunpack.c.h.b16 %v2003
    %v2791 = vunpack.c.l.b16 %v2004
    %v2792 = vunpack.c.h.b16 %v2004
    %v2793 = vunpack.c.l.b16 %v2005
    %v2794 = vunpack.c.h.b16 %v2005
    %v2795 = vunpack.c.l.b16 %v2006
    %v2796 = vunpack.c.h.b16 %v2006
    %v2797 = vunpack.c.l.b16 %v2007
    %v2798 = vunpack.c.h.b16 %v2007
    %v2799 = vunpack.c.l.b16 %v2008
    %v2800 = vunpack.c.h.b16 %v2008
    %v2801 = vunpack.c.l.b16 %v2009
    %v2802 = vunpack.c.h.b16 %v2009
    %v2803 = vunpack.c.l.b16 %v2010
    %v2804 = vunpack.c.h.b16 %v2010
    %v2805 = vunpack.c.l.b16 %v2011
    %v2806 = vunpack.c.h.b16 %v2011
    %v2807 = vunpack.c.l.b16 %v2012
    %v2808 = vunpack.c.h.b16 %v2012
    %v2809 = vunpack.c.l.b16 %v2013
    %v2810 = vunpack.c.h.b16 %v2013
    %v2811 = vunpack.c.l.b16 %v2014
    %v2812 = vunpack.c.h.b16 %v2014
    %v2813 = vunpack.c.l.b16 %v2015
    %v2814 = vunpack.c.h.b16 %v2015
    %v2815 = vunpack.c.l.b16 %v2016
    %v2816 = vunpack.c.h.b16 %v2016
    %v2817 = vunpack.c.l.b16 %v2017
    %v2818 = vunpack.c.h.b16 %v2017
    %v2819 = vunpack.c.l.b16 %v2018
    %v2820 = vunpack.c.h.b16 %v2018
    %v2821 = vunpack.c.l.b16 %v2019
    %v2822 = vunpack.c.h.b16 %v2019
    %v2823 = vunpack.c.l.b16 %v2020
    %v2824 = vunpack.c.h.b16 %v2020
    %v2825 = vunpack.c.l.b16 %v2021
    %v2826 = vunpack.c.h.b16 %v2021
    %v2827 = vunpack.c.l.b16 %v2022
    %v2828 = vunpack.c.h.b16 %v2022
    %v2829 = vunpack.c.l.b16 %v2023
    %v2830 = vunpack.c.h.b16 %v2023
    %v2831 = vunpack.c.l.b16 %v2024
    %v2832 = vunpack.c.h.b16 %v2024
    %v2833 = vunpack.c.l.b16 %v2025
    %v2834 = vunpack.c.h.b16 %v2025
    %v2835 = vunpack.c.l.b16 %v2026
    %v2836 = vunpack.c.h.b16 %v2026
    %v2837 = vunpack.c.l.b16 %v2027
    %v2838 = vunpack.c.h.b16 %v2027
    %v2839 = vunpack.c.l.b16 %v2028
    %v2840 = vunpack.c.h.b16 %v2028
    %v2841 = vunpack.c.l.b16 %v2029
    %v2842 = vunpack.c.h.b16 %v2029
    %v2843 = vunpack.c.l.b16 %v2030
    %v2844 = vunpack.c.h.b16 %v2030
    %v2845 = vunpack.c.l.b16 %v2031
    %v2846 = vunpack.c.h.b16 %v2031
    %v2847 = vunpack.c.l.b16 %v2032
    %v2848 = vunpack.c.h.b16 %v2032
    %v2849 = vunpack.c.l.b16 %v2033
    %v2850 = vunpack.c.h.b16 %v2033
    %v2851 = vunpack.c.l.b16 %v2034
    %v2852 = vunpack.c.h.b16 %v2034
    %v2853 = vunpack.c.l.b16 %v2035
    %v2854 = vunpack.c.h.b16 %v2035
    %v2855 = vunpack.c.l.b16 %v2036
    %v2856 = vunpack.c.h.b16 %v2036
    %v2857 = vunpack.c.l.b16 %v2037
    %v2858 = vunpack.c.h.b16 %v2037
    %v2859 = vunpack.c.l.b16 %v2038
    %v2860 = vunpack.c.h.b16 %v2038
    %v2861 = vunpack.c.l.b16 %v2039
    %v2862 = vunpack.c.h.b16 %v2039
    %v2863 = vunpack.c.l.b16 %v2040
    %v2864 = vunpack.c.h.b16 %v2040
    %v2865 = vunpack.c.l.b16 %v2041
    %v2866 = vunpack.c.h.b16 %v2041
    %v2867 = vunpack.c.l.b16 %v2042
    %v2868 = vunpack.c.h.b16 %v2042
    %v2869 = vunpack.c.l.b16 %v2043
    %v2870 = vunpack.c.h.b16 %v2043
    %v2871 = vunpack.c.l.b16 %v2044
    %v2872 = vunpack.c.h.b16 %v2044
    %v2873 = vunpack.c.l.b16 %v2045
    %v2874 = vunpack.c.h.b16 %v2045
    %v2875 = vunpack.c.l.b16 %v2046
    %v2876 = vunpack.c.h.b16 %v2046
    %v2877 = vunpack.c.l.b16 %v2047
    %v2878 = vunpack.c.h.b16 %v2047
    %v2879 = vunpack.c.l.b16 %v2048
    %v2880 = vunpack.c.h.b16 %v2048
    %v2881 = vunpack.c.l.b16 %v2049
    %v2882 = vunpack.c.h.b16 %v2049
    %v2883 = vunpack.c.l.b16 %v2050
    %v2884 = vunpack.c.h.b16 %v2050
    %v2885 = vunpack.c.l.b16 %v2051
    %v2886 = vunpack.c.h.b16 %v2051
    %v2887 = vunpack.c.l.b16 %v2052
    %v2888 = vunpack.c.h.b16 %v2052
    %v2889 = vunpack.c.l.b16 %v2053
    %v2890 = vunpack.c.h.b16 %v2053
    %v2891 = vunpack.c.l.b16 %v2054
    %v2892 = vunpack.c.h.b16 %v2054
    %v2893 = vunpack.c.l.b16 %v2055
    %v2894 = vunpack.c.h.b16 %v2055
    %v2895 = vunpack.c.l.b16 %v2056
    %v2896 = vunpack.c.h.b16 %v2056
    %v2897 = vunpack.c.l.b16 %v2057
    %v2898 = vunpack.c.h.b16 %v2057
    %v2899 = vunpack.c.l.b16 %v2058
    %v2900 = vunpack.c.h.b16 %v2058
    %v2901 = vunpack.c.l.b16 %v2059
    %v2902 = vunpack.c.h.b16 %v2059
    %v2903 = vunpack.c.l.b16 %v2060
    %v2904 = vunpack.c.h.b16 %v2060
    %v2905 = vunpack.c.l.b16 %v2061
    %v2906 = vunpack.c.h.b16 %v2061
    %v2907 = vunpack.c.l.b16 %v2062
    %v2908 = vunpack.c.h.b16 %v2062
    %v2909 = vunpack.c.l.b16 %v2063
    %v2910 = vunpack.c.h.b16 %v2063
    %v2911 = vunpack.c.l.b16 %v2064
    %v2912 = vunpack.c.h.b16 %v2064
    %v2913 = vunpack.c.l.b16 %v2065
    %v2914 = vunpack.c.h.b16 %v2065
    %v2915 = vunpack.c.l.b16 %v2066
    %v2916 = vunpack.c.h.b16 %v2066
    %v2917 = vunpack.c.l.b16 %v2067
    %v2918 = vunpack.c.h.b16 %v2067
    %v2919 = vunpack.c.l.b16 %v2068
    %v2920 = vunpack.c.h.b16 %v2068
    %v2921 = vunpack.c.l.b16 %v2069
    %v2922 = vunpack.c.h.b16 %v2069
    %v2923 = vunpack.c.l.b16 %v2070
    %v2924 = vunpack.c.h.b16 %v2070
    %v2925 = vunpack.c.l.b16 %v2071
    %v2926 = vunpack.c.h.b16 %v2071
    %v2927 = vunpack.c.l.b16 %v2072
    %v2928 = vunpack.c.h.b16 %v2072
    %v2929 = vunpack.c.l.b16 %v2073
    %v2930 = vunpack.c.h.b16 %v2073
    %v2931 = vunpack.c.l.b16 %v2074
    %v2932 = vunpack.c.h.b16 %v2074
    %v2933 = vunpack.c.l.b16 %v2075
    %v2934 = vunpack.c.h.b16 %v2075
    %v2935 = vunpack.c.l.b16 %v2076
    %v2936 = vunpack.c.h.b16 %v2076
    %v2937 = vunpack.c.l.b16 %v2077
    %v2938 = vunpack.c.h.b16 %v2077
    %v2939 = vunpack.c.l.b16 %v2078
    %v2940 = vunpack.c.h.b16 %v2078
    %v2941 = vunpack.c.l.b16 %v2079
    %v2942 = vunpack.c.h.b16 %v2079
    %v2943 = vunpack.c.l.b16 %v2080
    %v2944 = vunpack.c.h.b16 %v2080
    %v2945 = vunpack.c.l.b16 %v2081
    %v2946 = vunpack.c.h.b16 %v2081
    %v2947 = vunpack.c.l.b16 %v2082
    %v2948 = vunpack.c.h.b16 %v2082
    %v2949 = vunpack.c.l.b16 %v2083
    %v2950 = vunpack.c.h.b16 %v2083
    %v2951 = vunpack.c.l.b16 %v2084
    %v2952 = vunpack.c.h.b16 %v2084
    %v2953 = vunpack.c.l.b16 %v2085
    %v2954 = vunpack.c.h.b16 %v2085
    %v2955 = vunpack.c.l.b16 %v2086
    %v2956 = vunpack.c.h.b16 %v2086
    %v2957 = vunpack.c.l.b16 %v2087
    %v2958 = vunpack.c.h.b16 %v2087
    %v2959 = vunpack.c.l.b16 %v2088
    %v2960 = vunpack.c.h.b16 %v2088
    %v2961 = vunpack.c.l.b16 %v2089
    %v2962 = vunpack.c.h.b16 %v2089
    %v2963 = vunpack.c.l.b16 %v2090
    %v2964 = vunpack.c.h.b16 %v2090
    %v2965 = vunpack.c.l.b16 %v2091
    %v2966 = vunpack.c.h.b16 %v2091
    %v2967 = vunpack.c.l.b16 %v2092
    %v2968 = vunpack.c.h.b16 %v2092
    %v2969 = vunpack.c.l.b16 %v2093
    %v2970 = vunpack.c.h.b16 %v2093
    %v2971 = vunpack.c.l.b16 %v2094
    %v2972 = vunpack.c.h.b16 %v2094
    %v2973 = vunpack.c.l.b16 %v2095
    %v2974 = vunpack.c.h.b16 %v2095
    %v2975 = vunpack.c.l.b16 %v2096
    %v2976 = vunpack.c.h.b16 %v2096
    %v2977 = vunpack.c.l.b16 %v2097
    %v2978 = vunpack.c.h.b16 %v2097
    %v2979 = vunpack.c.l.b16 %v2098
    %v2980 = vunpack.c.h.b16 %v2098
    %v2981 = vunpack.c.l.b16 %v2099
    %v2982 = vunpack.c.h.b16 %v2099
    %v2983 = vunpack.c.l.b16 %v2100
    %v2984 = vunpack.c.h.b16 %v2100
    %v2985 = vunpack.c.l.b16 %v2101
    %v2986 = vunpack.c.h.b16 %v2101
    %v2987 = vunpack.c.l.b16 %v2102
    %v2988 = vunpack.c.h.b16 %v2102
    %v2989 = vunpack.c.l.b16 %v2103
    %v2990 = vunpack.c.h.b16 %v2103
    %v2991 = vunpack.c.l.b16 %v2104
    %v2992 = vunpack.c.h.b16 %v2104
    %v2993 = vunpack.c.l.b16 %v2105
    %v2994 = vunpack.c.h.b16 %v2105
    %v2995 = vunpack.c.l.b16 %v2106
    %v2996 = vunpack.c.h.b16 %v2106
    %v2997 = vunpack.c.l.b16 %v2107
    %v2998 = vunpack.c.h.b16 %v2107
    %v2999 = vunpack.c.l.b16 %v2108
    %v3000 = vunpack.c.h.b16 %v2108
    %v3001 = vunpack.c.l.b16 %v2109
    %v3002 = vunpack.c.h.b16 %v2109
    %v3003 = vunpack.c.l.b16 %v2110
    %v3004 = vunpack.c.h.b16 %v2110
    %v3005 = vunpack.c.l.b16 %v2111
    %v3006 = vunpack.c.h.b16 %v2111
    %v3007 = vunpack.c.l.b16 %v2112
    %v3008 = vunpack.c.h.b16 %v2112
    %v3009 = vunpack.c.l.b16 %v2113
    %v3010 = vunpack.c.h.b16 %v2113
    %v3011 = vunpack.c.l.b16 %v2114
    %v3012 = vunpack.c.h.b16 %v2114
    %v3013 = vunpack.c.l.b16 %v2115
    %v3014 = vunpack.c.h.b16 %v2115
    %v3015 = vunpack.c.l.b16 %v2116
    %v3016 = vunpack.c.h.b16 %v2116
    %v3017 = vunpack.c.l.b16 %v2117
    %v3018 = vunpack.c.h.b16 %v2117
    %v3019 = vunpack.c.l.b16 %v2118
    %v3020 = vunpack.c.h.b16 %v2118
    %v3021 = vunpack.c.l.b16 %v2119
    %v3022 = vunpack.c.h.b16 %v2119
    %v3023 = vunpack.c.l.b16 %v2120
    %v3024 = vunpack.c.h.b16 %v2120
    %v3025 = vunpack.c.l.b16 %v2121
    %v3026 = vunpack.c.h.b16 %v2121
    %v3027 = vunpack.c.l.b16 %v2122
    %v3028 = vunpack.c.h.b16 %v2122
    %v3029 = vunpack.c.l.b16 %v2123
    %v3030 = vunpack.c.h.b16 %v2123
    %v3031 = vunpack.c.l.b16 %v2124
    %v3032 = vunpack.c.h.b16 %v2124
    %v3033 = vunpack.c.l.b16 %v2125
    %v3034 = vunpack.c.h.b16 %v2125
    %v3035 = vunpack.c.l.b16 %v2126
    %v3036 = vunpack.c.h.b16 %v2126
    %v3037 = vunpack.c.l.b16 %v2127
    %v3038 = vunpack.c.h.b16 %v2127
    %v3039 = vunpack.c.l.b16 %v2128
    %v3040 = vunpack.c.h.b16 %v2128
    %v3041 = vunpack.c.l.b16 %v2129
    %v3042 = vunpack.c.h.b16 %v2129
    %v3043 = vunpack.c.l.b16 %v2130
    %v3044 = vunpack.c.h.b16 %v2130
    %v3045 = vunpack.c.l.b16 %v2131
    %v3046 = vunpack.c.h.b16 %v2131
    %v3047 = vunpack.c.l.b16 %v2132
    %v3048 = vunpack.c.h.b16 %v2132
    %v3049 = vunpack.c.l.b16 %v2133
    %v3050 = vunpack.c.h.b16 %v2133
    %v3051 = vunpack.c.l.b16 %v2134
    %v3052 = vunpack.c.h.b16 %v2134
    %v3053 = vunpack.c.l.b16 %v2135
    %v3054 = vunpack.c.h.b16 %v2135
    %v3055 = vunpack.c.l.b16 %v2136
    %v3056 = vunpack.c.h.b16 %v2136
    %v3057 = vunpack.c.l.b16 %v2137
    %v3058 = vunpack.c.h.b16 %v2137
    %v3059 = vunpack.c.l.b16 %v2138
    %v3060 = vunpack.c.h.b16 %v2138
    %v3061 = vunpack.c.l.b16 %v2139
    %v3062 = vunpack.c.h.b16 %v2139
    %v3063 = vunpack.c.l.b16 %v2140
    %v3064 = vunpack.c.h.b16 %v2140
    %v3065 = vunpack.c.l.b16 %v2141
    %v3066 = vunpack.c.h.b16 %v2141
    %v3067 = vunpack.c.l.b16 %v2142
    %v3068 = vunpack.c.h.b16 %v2142
    %v3069 = vunpack.c.l.b16 %v2143
    %v3070 = vunpack.c.h.b16 %v2143
    %v3071 = vunpack.c.l.b16 %v2144
    %v3072 = vunpack.c.h.b16 %v2144
    %v3073 = vunpack.c.l.b16 %v2145
    %v3074 = vunpack.c.h.b16 %v2145
    %v3075 = vunpack.c.l.b16 %v2146
    %v3076 = vunpack.c.h.b16 %v2146
    %v3077 = vunpack.c.l.b16 %v2147
    %v3078 = vunpack.c.h.b16 %v2147
    %v3079 = vunpack.c.l.b16 %v2148
    %v3080 = vunpack.c.h.b16 %v2148
    %v3081 = vunpack.c.l.b16 %v2149
    %v3082 = vunpack.c.h.b16 %v2149
    %v3083 = vunpack.c.l.b16 %v2150
    %v3084 = vunpack.c.h.b16 %v2150
    %v3085 = vunpack.c.l.b16 %v2151
    %v3086 = vunpack.c.h.b16 %v2151
    %v3087 = vunpack.c.l.b16 %v2152
    %v3088 = vunpack.c.h.b16 %v2152
    %v3089 = vunpack.c.l.b16 %v2153
    %v3090 = vunpack.c.h.b16 %v2153
    %v3091 = vunpack.c.l.b16 %v2154
    %v3092 = vunpack.c.h.b16 %v2154
    %v3093 = vunpack.c.l.b16 %v2155
    %v3094 = vunpack.c.h.b16 %v2155
    %v3095 = vunpack.c.l.b16 %v2156
    %v3096 = vunpack.c.h.b16 %v2156
    %v3097 = vunpack.c.l.b16 %v2157
    %v3098 = vunpack.c.h.b16 %v2157
    %v3099 = vunpack.c.l.b16 %v2158
    %v3100 = vunpack.c.h.b16 %v2158
    %v3101 = vunpack.c.l.b16 %v2159
    %v3102 = vunpack.c.h.b16 %v2159
    %v3103 = vunpack.c.l.b16 %v2160
    %v3104 = vunpack.c.h.b16 %v2160
    %v3105 = vunpack.c.l.b16 %v2161
    %v3106 = vunpack.c.h.b16 %v2161
    %v3107 = vunpack.c.l.b16 %v2162
    %v3108 = vunpack.c.h.b16 %v2162
    %v3109 = vunpack.c.l.b16 %v2163
    %v3110 = vunpack.c.h.b16 %v2163
    %v3111 = vunpack.c.l.b16 %v2164
    %v3112 = vunpack.c.h.b16 %v2164
    %v3113 = vunpack.c.l.b16 %v2165
    %v3114 = vunpack.c.h.b16 %v2165
    %v3115 = vunpack.c.l.b16 %v2166
    %v3116 = vunpack.c.h.b16 %v2166
    %v3117 = vunpack.c.l.b16 %v2167
    %v3118 = vunpack.c.h.b16 %v2167
    %v3119 = vunpack.c.l.b16 %v2168
    %v3120 = vunpack.c.h.b16 %v2168
    %v3121 = vunpack.c.l.b16 %v2169
    %v3122 = vunpack.c.h.b16 %v2169
    %v3123 = vunpack.c.l.b16 %v2170
    %v3124 = vunpack.c.h.b16 %v2170
    %v3125 = vunpack.c.l.b16 %v2171
    %v3126 = vunpack.c.h.b16 %v2171
    %v3127 = vunpack.c.l.b16 %v2172
    %v3128 = vunpack.c.h.b16 %v2172
    %v3129 = vunpack.c.l.b16 %v2173
    %v3130 = vunpack.c.h.b16 %v2173
    %v3131 = vunpack.c.l.b16 %v2174
    %v3132 = vunpack.c.h.b16 %v2174
    %v3133 = vunpack.c.l.b16 %v2175
    %v3134 = vunpack.c.h.b16 %v2175
    %v3135 = vunpack.c.l.b16 %v2176
    %v3136 = vunpack.c.h.b16 %v2176
    %v3137 = vpack.c.b16 %v2537, %v2497
    %v3138 = vpack.c.b16 %v2538, %v2498
    %v3139 = vpack.c.b16 %v2539, %v2499
    %v3140 = vpack.c.b16 %v2540, %v2500
    %v3141 = vpack.c.b16 %v2541, %v2501
    %v3142 = vpack.c.b16 %v2542, %v2502
    %v3143 = vpack.c.b16 %v2543, %v2503
    %v3144 = vpack.c.b16 %v2544, %v2504
    %v3145 = vpack.c.b16 %v2545, %v2505
    %v3146 = vpack.c.b16 %v2546, %v2506
    %v3147 = vpack.c.b16 %v2547, %v2507
    %v3148 = vpack.c.b16 %v2548, %v2508
    %v3149 = vpack.c.b16 %v2549, %v2509
    %v3150 = vpack.c.b16 %v2550, %v2510
    %v3151 = vpack.c.b16 %v2551, %v2511
    %v3152 = vpack.c.b16 %v2552, %v2512
    %v3153 = vpack.c.b16 %v2553, %v2513
    %v3154 = vpack.c.b16 %v2554, %v2514
    %v3155 = vpack.c.b16 %v2555, %v2515
    %v3156 = vpack.c.b16 %v2556, %v2516
    %v3157 = vpack.c.b16 %v2557, %v2517
    %v3158 = vpack.c.b16 %v2558, %v2518
    %v3159 = vpack.c.b16 %v2559, %v2519
    %v3160 = vpack.c.b16 %v2560, %v2520
    %v3161 = vpack.c.b16 %v2561, %v2521
    %v3162 = vpack.c.b16 %v2562, %v2522
    %v3163 = vpack.c.b16 %v2563, %v2523
    %v3164 = vpack.c.b16 %v2564, %v2524
    %v3165 = vpack.c.b16 %v2565, %v2525
    %v3166 = vpack.c.b16 %v2566, %v2526
    %v3167 = vpack.c.b16 %v2567, %v2527
    %v3168 = vpack.c.b16 %v2568, %v2528
    %v3169 = vpack.c.b16 %v2569, %v2529
    %v3170 = vpack.c.b16 %v2570, %v2530
    %v3171 = vpack.c.b16 %v2571, %v2531
    %v3172 = vpack.c.b16 %v2572, %v2532
    %v3173 = vpack.c.b16 %v2573, %v2533
    %v3174 = vpack.c.b16 %v2574, %v2534
    %v3175 = vpack.c.b16 %v2575, %v2535
    %v3176 = vpack.c.b16 %v2576, %v2536
    %v3177 = vpack.c.b16 %v2617, %v2577
    %v3178 = vpack.c.b16 %v2618, %v2578
    %v3179 = vpack.c.b16 %v2619, %v2579
    %v3180 = vpack.c.b16 %v2620, %v2580
    %v3181 = vpack.c.b16 %v2621, %v2581
    %v3182 = vpack.c.b16 %v2622, %v2582
    %v3183 = vpack.c.b16 %v2623, %v2583
    %v3184 = vpack.c.b16 %v2624, %v2584
    %v3185 = vpack.c.b16 %v2625, %v2585
    %v3186 = vpack.c.b16 %v2626, %v2586
    %v3187 = vpack.c.b16 %v2627, %v2587
    %v3188 = vpack.c.b16 %v2628, %v2588
    %v3189 = vpack.c.b16 %v2629, %v2589
    %v3190 = vpack.c.b16 %v2630, %v2590
    %v3191 = vpack.c.b16 %v2631, %v2591
    %v3192 = vpack.c.b16 %v2632, %v2592
    %v3193 = vpack.c.b16 %v2633, %v2593
    %v3194 = vpack.c.b16 %v2634, %v2594
    %v3195 = vpack.c.b16 %v2635, %v2595
    %v3196 = vpack.c.b16 %v2636, %v2596
    %v3197 = vpack.c.b16 %v2637, %v2597
    %v3198 = vpack.c.b16 %v2638, %v2598
    %v3199 = vpack.c.b16 %v2639, %v2599
    %v3200 = vpack.c.b16 %v2640, %v2600
    %v3201 = vpack.c.b16 %v2641, %v2601
    %v3202 = vpack.c.b16 %v2642, %v2602
    %v3203 = vpack.c.b16 %v2643, %v2603
    %v3204 = vpack.c.b16 %v2644, %v2604
    %v3205 = vpack.c.b16 %v2645, %v2605
    %v3206 = vpack.c.b16 %v2646, %v2606
    %v3207 = vpack.c.b16 %v2647, %v2607
    %v3208 = vpack.c.b16 %v2648, %v2608
    %v3209 = vpack.c.b16 %v2649, %v2609
    %v3210 = vpack.c.b16 %v2650, %v2610
    %v3211 = vpack.c.b16 %v2651, %v2611
    %v3212 = vpack.c.b16 %v2652, %v2612
    %v3213 = vpack.c.b16 %v2653, %v2613
    %v3214 = vpack.c.b16 %v2654, %v2614
    %v3215 = vpack.c.b16 %v2655, %v2615
    %v3216 = vpack.c.b16 %v2656, %v2616
    %v3217 = vpack.c.b16 %v2697, %v2657
    %v3218 = vpack.c.b16 %v2698, %v2658
    %v3219 = vpack.c.b16 %v2699, %v2659
    %v3220 = vpack.c.b16 %v2700, %v2660
    %v3221 = vpack.c.b16 %v2701, %v2661
    %v3222 = vpack.c.b16 %v2702, %v2662
    %v3223 = vpack.c.b16 %v2703, %v2663
    %v3224 = vpack.c.b16 %v2704, %v2664
    %v3225 = vpack.c.b16 %v2705, %v2665
    %v3226 = vpack.c.b16 %v2706, %v2666
    %v3227 = vpack.c.b16 %v2707, %v2667
    %v3228 = vpack.c.b16 %v2708, %v2668
    %v3229 = vpack.c.b16 %v2709, %v2669
    %v3230 = vpack.c.b16 %v2710, %v2670
    %v3231 = vpack.c.b16 %v2711, %v2671
    %v3232 = vpack.c.b16 %v2712, %v2672
    %v3233 = vpack.c.b16 %v2713, %v2673
    %v3234 = vpack.c.b16 %v2714, %v2674
    %v3235 = vpack.c.b16 %v2715, %v2675
    %v3236 = vpack.c.b16 %v2716, %v2676
    %v3237 = vpack.c.b16 %v2717, %v2677
    %v3238 = vpack.c.b16 %v2718, %v2678
    %v3239 = vpack.c.b16 %v2719, %v2679
    %v3240 = vpack.c.b16 %v2720, %v2680
    %v3241 = vpack.c.b16 %v2721, %v2681
    %v3242 = vpack.c.b16 %v2722, %v2682
    %v3243 = vpack.c.b16 %v2723, %v2683
    %v3244 = vpack.c.b16 %v2724, %v2684
    %v3245 = vpack.c.b16 %v2725, %v2685
    %v3246 = vpack.c.b16 %v2726, %v2686
    %v3247 = vpack.c.b16 %v2727, %v2687
    %v3248 = vpack.c.b16 %v2728, %v2688
    %v3249 = vpack.c.b16 %v2729, %v2689
    %v3250 = vpack.c.b16 %v2730, %v2690
    %v3251 = vpack.c.b16 %v2731, %v2691
    %v3252 = vpack.c.b16 %v2732, %v2692
    %v3253 = vpack.c.b16 %v2733, %v2693
    %v3254 = vpack.c.b16 %v2734, %v2694
    %v3255 = vpack.c.b16 %v2735, %v2695
    %v3256 = vpack.c.b16 %v2736, %v2696
    %v3257 = vpack.c.b16 %v2777, %v2737
    %v3258 = vpack.c.b16 %v2778, %v2738
    %v3259 = vpack.c.b16 %v2779, %v2739
    %v3260 = vpack.c.b16 %v2780, %v2740
    %v3261 = vpack.c.b16 %v2781, %v2741
    %v3262 = vpack.c.b16 %v2782, %v2742
    %v3263 = vpack.c.b16 %v2783, %v2743
    %v3264 = vpack.c.b16 %v2784, %v2744
    %v3265 = vpack.c.b16 %v2785, %v2745
    %v3266 = vpack.c.b16 %v2786, %v2746
    %v3267 = vpack.c.b16 %v2787, %v2747
    %v3268 = vpack.c.b16 %v2788, %v2748
    %v3269 = vpack.c.b16 %v2789, %v2749
    %v3270 = vpack.c.b16 %v2790, %v2750
    %v3271 = vpack.c.b16 %v2791, %v2751
    %v3272 = vpack.c.b16 %v2792, %v2752
    %v3273 = vpack.c.b16 %v2793, %v2753
    %v3274 = vpack.c.b16 %v2794, %v2754
    %v3275 = vpack.c.b16 %v2795, %v2755
    %v3276 = vpack.c.b16 %v2796, %v2756
    %v3277 = vpack.c.b16 %v2797, %v2757
    %v3278 = vpack.c.b16 %v2798, %v2758
    %v3279 = vpack.c.b16 %v2799, %v2759
    %v3280 = vpack.c.b16 %v2800, %v2760
    %v3281 = vpack.c.b16 %v2801, %v2761
    %v3282 = vpack.c.b16 %v2802, %v2762
    %v3283 = vpack.c.b16 %v2803, %v2763
    %v3284 = vpack.c.b16 %v2804, %v2764
    %v3285 = vpack.c.b16 %v2805, %v2765
    %v3286 = vpack.c.b16 %v2806, %v2766
    %v3287 = vpack.c.b16 %v2807, %v2767
    %v3288 = vpack.c.b16 %v2808, %v2768
    %v3289 = vpack.c.b16 %v2809, %v2769
    %v3290 = vpack.c.b16 %v2810, %v2770
    %v3291 = vpack.c.b16 %v2811, %v2771
    %v3292 = vpack.c.b16 %v2812, %v2772
    %v3293 = vpack.c.b16 %v2813, %v2773
    %v3294 = vpack.c.b16 %v2814, %v2774
    %v3295 = vpack.c.b16 %v2815, %v2775
    %v3296 = vpack.c.b16 %v2816, %v2776
    %v3297 = vpack.c.b16 %v2857, %v2817
    %v3298 = vpack.c.b16 %v2858, %v2818
    %v3299 = vpack.c.b16 %v2859, %v2819
    %v3300 = vpack.c.b16 %v2860, %v2820
    %v3301 = vpack.c.b16 %v2861, %v2821
    %v3302 = vpack.c.b16 %v2862, %v2822
    %v3303 = vpack.c.b16 %v2863, %v2823
    %v3304 = vpack.c.b16 %v2864, %v2824
    %v3305 = vpack.c.b16 %v2865, %v2825
    %v3306 = vpack.c.b16 %v2866, %v2826
    %v3307 = vpack.c.b16 %v2867, %v2827
    %v3308 = vpack.c.b16 %v2868, %v2828
    %v3309 = vpack.c.b16 %v2869, %v2829
    %v3310 = vpack.c.b16 %v2870, %v2830
    %v3311 = vpack.c.b16 %v2871, %v2831
    %v3312 = vpack.c.b16 %v2872, %v2832
    %v3313 = vpack.c.b16 %v2873, %v2833
    %v3314 = vpack.c.b16 %v2874, %v2834
    %v3315 = vpack.c.b16 %v2875, %v2835
    %v3316 = vpack.c.b16 %v2876, %v2836
    %v3317 = vpack.c.b16 %v2877, %v2837
    %v3318 = vpack.c.b16 %v2878, %v2838
    %v3319 = vpack.c.b16 %v2879, %v2839
    %v3320 = vpack.c.b16 %v2880, %v2840
    %v3321 = vpack.c.b16 %v2881, %v2841
    %v3322 = vpack.c.b16 %v2882, %v2842
    %v3323 = vpack.c.b16 %v2883, %v2843
    %v3324 = vpack.c.b16 %v2884, %v2844
    %v3325 = vpack.c.b16 %v2885, %v2845
    %v3326 = vpack.c.b16 %v2886, %v2846
    %v3327 = vpack.c.b16 %v2887, %v2847
    %v3328 = vpack.c.b16 %v2888, %v2848
    %v3329 = vpack.c.b16 %v2889, %v2849
    %v3330 = vpack.c.b16 %v2890, %v2850
    %v3331 = vpack.c.b16 %v2891, %v2851
    %v3332 = vpack.c.b16 %v2892, %v2852
    %v3333 = vpack.c.b16 %v2893, %v2853
    %v3334 = vpack.c.b16 %v2894, %v2854
    %v3335 = vpack.c.b16 %v2895, %v2855
    %v3336 = vpack.c.b16 %v2896, %v2856
    %v3337 = vpack.c.b16 %v2937, %v2897
    %v3338 = vpack.c.b16 %v2938, %v2898
    %v3339 = vpack.c.b16 %v2939, %v2899
    %v3340 = vpack.c.b16 %v2940, %v2900
    %v3341 = vpack.c.b16 %v2941, %v2901
    %v3342 = vpack.c.b16 %v2942, %v2902
    %v3343 = vpack.c.b16 %v2943, %v2903
    %v3344 = vpack.c.b16 %v2944, %v2904
    %v3345 = vpack.c.b16 %v2945, %v2905
    %v3346 = vpack.c.b16 %v2946, %v2906
    %v3347 = vpack.c.b16 %v2947, %v2907
    %v3348 = vpack.c.b16 %v2948, %v2908
    %v3349 = vpack.c.b16 %v2949, %v2909
    %v3350 = vpack.c.b16 %v2950, %v2910
    %v3351 = vpack.c.b16 %v2951, %v2911
    %v3352 = vpack.c.b16 %v2952, %v2912
    %v3353 = vpack.c.b16 %v2953, %v2913
    %v3354 = vpack.c.b16 %v2954, %v2914
    %v3355 = vpack.c.b16 %v2955, %v2915
    %v3356 = vpack.c.b16 %v2956, %v2916
    %v3357 = vpack.c.b16 %v2957, %v2917
    %v3358 = vpack.c.b16 %v2958, %v2918
    %v3359 = vpack.c.b16 %v2959, %v2919
    %v3360 = vpack.c.b16 %v2960, %v2920
    %v3361 = vpack.c.b16 %v2961, %v2921
    %v3362 = vpack.c.b16 %v2962, %v2922
    %v3363 = vpack.c.b16 %v2963, %v2923
    %v3364 = vpack.c.b16 %v2964, %v2924
    %v3365 = vpack.c.b16 %v2965, %v2925
    %v3366 = vpack.c.b16 %v2966, %v2926
    %v3367 = vpack.c.b16 %v2967, %v2927
    %v3368 = vpack.c.b16 %v2968, %v2928
    %v3369 = vpack.c.b16 %v2969, %v2929
    %v3370 = vpack.c.b16 %v2970, %v2930
    %v3371 = vpack.c.b16 %v2971, %v2931
    %v3372 = vpack.c.b16 %v2972, %v2932
    %v3373 = vpack.c.b16 %v2973, %v2933
    %v3374 = vpack.c.b16 %v2974, %v2934
    %v3375 = vpack.c.b16 %v2975, %v2935
    %v3376 = vpack.c.b16 %v2976, %v2936
    %v3377 = vpack.c.b16 %v3017, %v2977
    %v3378 = vpack.c.b16 %v3018, %v2978
    %v3379 = vpack.c.b16 %v3019, %v2979
    %v3380 = vpack.c.b16 %v3020, %v2980
    %v3381 = vpack.c.b16 %v3021, %v2981
    %v3382 = vpack.c.b16 %v3022, %v2982
    %v3383 = vpack.c.b16 %v3023, %v2983
    %v3384 = vpack.c.b16 %v3024, %v2984
    %v3385 = vpack.c.b16 %v3025, %v2985
    %v3386 = vpack.c.b16 %v3026, %v2986
    %v3387 = vpack.c.b16 %v3027, %v2987
    %v3388 = vpack.c.b16 %v3028, %v2988
    %v3389 = vpack.c.b16 %v3029, %v2989
    %v3390 = vpack.c.b16 %v3030, %v2990
    %v3391 = vpack.c.b16 %v3031, %v2991
    %v3392 = vpack.c.b16 %v3032, %v2992
    %v3393 = vpack.c.b16 %v3033, %v2993
    %v3394 = vpack.c.b16 %v3034, %v2994
    %v3395 = vpack.c.b16 %v3035, %v2995
    %v3396 = vpack.c.b16 %v3036, %v2996
    %v3397 = vpack.c.b16 %v3037, %v2997
    %v3398 = vpack.c.b16 %v3038, %v2998
    %v3399 = vpack.c.b16 %v3039, %v2999
    %v3400 = vpack.c.b16 %v3040, %v3000
    %v3401 = vpack.c.b16 %v3041, %v3001
    %v3402 = vpack.c.b16 %v3042, %v3002
    %v3403 = vpack.c.b16 %v3043, %v3003
    %v3404 = vpack.c.b16 %v3044, %v3004
    %v3405 = vpack.c.b16 %v3045, %v3005
    %v3406 = vpack.c.b16 %v3046, %v3006
    %v3407 = vpack.c.b16 %v3047, %v3007
    %v3408 = vpack.c.b16 %v3048, %v3008
    %v3409 = vpack.c.b16 %v3049, %v3009
    %v3410 = vpack.c.b16 %v3050, %v3010
    %v3411 = vpack.c.b16 %v3051, %v3011
    %v3412 = vpack.c.b16 %v3052, %v3012
    %v3413 = vpack.c.b16 %v3053, %v3013
    %v3414 = vpack.c.b16 %v3054, %v3014
    %v3415 = vpack.c.b16 %v3055, %v3015
    %v3416 = vpack.c.b16 %v3056, %v3016
    %v3417 = vpack.c.b16 %v3097, %v3057
    %v3418 = vpack.c.b16 %v3098, %v3058
    %v3419 = vpack.c.b16 %v3099, %v3059
    %v3420 = vpack.c.b16 %v3100, %v3060
    %v3421 = vpack.c.b16 %v3101, %v3061
    %v3422 = vpack.c.b16 %v3102, %v3062
    %v3423 = vpack.c.b16 %v3103, %v3063
    %v3424 = vpack.c.b16 %v3104, %v3064
    %v3425 = vpack.c.b16 %v3105, %v3065
    %v3426 = vpack.c.b16 %v3106, %v3066
    %v3427 = vpack.c.b16 %v3107, %v3067
    %v3428 = vpack.c.b16 %v3108, %v3068
    %v3429 = vpack.c.b16 %v3109, %v3069
    %v3430 = vpack.c.b16 %v3110, %v3070
    %v3431 = vpack.c.b16 %v3111, %v3071
    %v3432 = vpack.c.b16 %v3112, %v3072
    %v3433 = vpack.c.b16 %v3113, %v3073
    %v3434 = vpack.c.b16 %v3114, %v3074
    %v3435 = vpack.c.b16 %v3115, %v3075
    %v3436 = vpack.c.b16 %v3116, %v3076
    %v3437 = vpack.c.b16 %v3117, %v3077
    %v3438 = vpack.c.b16 %v3118, %v3078
    %v3439 = vpack.c.b16 %v3119, %v3079
    %v3440 = vpack.c.b16 %v3120, %v3080
    %v3441 = vpack.c.b16 %v3121, %v3081
    %v3442 = vpack.c.b16 %v3122, %v3082
    %v3443 = vpack.c.b16 %v3123, %v3083
    %v3444 = vpack.c.b16 %v3124, %v3084
    %v3445 = vpack.c.b16 %v3125, %v3085
    %v3446 = vpack.c.b16 %v3126, %v3086
    %v3447 = vpack.c.b16 %v3127, %v3087
    %v3448 = vpack.c.b16 %v3128, %v3088
    %v3449 = vpack.c.b16 %v3129, %v3089
    %v3450 = vpack.c.b16 %v3130, %v3090
    %v3451 = vpack.c.b16 %v3131, %v3091
    %v3452 = vpack.c.b16 %v3132, %v3092
    %v3453 = vpack.c.b16 %v3133, %v3093
    %v3454 = vpack.c.b16 %v3134, %v3094
    %v3455 = vpack.c.b16 %v3135, %v3095
    %v3456 = vpack.c.b16 %v3136, %v3096
    %3777 = vmatpush.bf16.msra.mxu0 %v1544
    %3778 = vmatpush.bf16.msra.mxu0 %v1543
    %3779 = vmatpush.bf16.msra.mxu0 %v1542
    %3780 = vmatpush.bf16.msra.mxu0 %v1541
    %3781 = vmatpush.bf16.msra.mxu0 %v1540
    %3782 = vmatpush.bf16.msra.mxu0 %v1539
    %3783 = vmatpush.bf16.msra.mxu0 %v1538
    %3784 = vmatpush.bf16.msra.mxu0 %v1537
    %3785 = vmatmul.bf16.gmra.mxu0 %v3137
    %v3786 = vpop.f32.mrf.mxu0
    %v3787 = vadd.f32 0.0, %v3786
    %v3788 = vpop.f32.mrf.mxu0
    %v3789 = vadd.f32 0.0, %v3788
    %3790 = vmatmul.bf16.gmra.mxu0 %v3177
    %v3791 = vpop.f32.mrf.mxu0
    %v3792 = vadd.f32 0.0, %v3791
    %v3793 = vpop.f32.mrf.mxu0
    %v3794 = vadd.f32 0.0, %v3793
    %3795 = vmatmul.bf16.gmra.mxu0 %v3217
    %v3796 = vpop.f32.mrf.mxu0
    %v3797 = vadd.f32 0.0, %v3796
    %v3798 = vpop.f32.mrf.mxu0
    %v3799 = vadd.f32 0.0, %v3798
    %3800 = vmatmul.bf16.gmra.mxu0 %v3257
    %v3801 = vpop.f32.mrf.mxu0
    %v3802 = vadd.f32 0.0, %v3801
    %v3803 = vpop.f32.mrf.mxu0
    %v3804 = vadd.f32 0.0, %v3803
    %3805 = vmatmul.bf16.gmra.mxu0 %v3297
    %v3806 = vpop.f32.mrf.mxu0
    %v3807 = vadd.f32 0.0, %v3806
    %v3808 = vpop.f32.mrf.mxu0
    %v3809 = vadd.f32 0.0, %v3808
    %3810 = vmatmul.bf16.gmra.mxu0 %v3337
    %v3811 = vpop.f32.mrf.mxu0
    %v3812 = vadd.f32 0.0, %v3811
    %v3813 = vpop.f32.mrf.mxu0
    %v3814 = vadd.f32 0.0, %v3813
    %3815 = vmatmul.bf16.gmra.mxu0 %v3377
    %v3816 = vpop.f32.mrf.mxu0
    %v3817 = vadd.f32 0.0, %v3816
    %v3818 = vpop.f32.mrf.mxu0
    %v3819 = vadd.f32 0.0, %v3818
    %3820 = vmatmul.bf16.gmra.mxu0 %v3417
    %v3821 = vpop.f32.mrf.mxu0
    %v3822 = vadd.f32 0.0, %v3821
    %v3823 = vpop.f32.mrf.mxu0
    %v3824 = vadd.f32 0.0, %v3823
    %3825 = vdwg.mxu0
    %3826 = vmatpush.bf16.msra.mxu0 %v1552
    %3827 = vmatpush.bf16.msra.mxu0 %v1551
    %3828 = vmatpush.bf16.msra.mxu0 %v1550
    %3829 = vmatpush.bf16.msra.mxu0 %v1549
    %3830 = vmatpush.bf16.msra.mxu0 %v1548
    %3831 = vmatpush.bf16.msra.mxu0 %v1547
    %3832 = vmatpush.bf16.msra.mxu0 %v1546
    %3833 = vmatpush.bf16.msra.mxu0 %v1545
    %3834 = vmatmul.bf16.gmra.mxu0 %v3138
    %v3835 = vpop.f32.mrf.mxu0
    %v3836 = vadd.f32 %v3787, %v3835
    %v3837 = vpop.f32.mrf.mxu0
    %v3838 = vadd.f32 %v3789, %v3837
    %3839 = vmatmul.bf16.gmra.mxu0 %v3178
    %v3840 = vpop.f32.mrf.mxu0
    %v3841 = vadd.f32 %v3792, %v3840
    %v3842 = vpop.f32.mrf.mxu0
    %v3843 = vadd.f32 %v3794, %v3842
    %3844 = vmatmul.bf16.gmra.mxu0 %v3218
    %v3845 = vpop.f32.mrf.mxu0
    %v3846 = vadd.f32 %v3797, %v3845
    %v3847 = vpop.f32.mrf.mxu0
    %v3848 = vadd.f32 %v3799, %v3847
    %3849 = vmatmul.bf16.gmra.mxu0 %v3258
    %v3850 = vpop.f32.mrf.mxu0
    %v3851 = vadd.f32 %v3802, %v3850
    %v3852 = vpop.f32.mrf.mxu0
    %v3853 = vadd.f32 %v3804, %v3852
    %3854 = vmatmul.bf16.gmra.mxu0 %v3298
    %v3855 = vpop.f32.mrf.mxu0
    %v3856 = vadd.f32 %v3807, %v3855
    %v3857 = vpop.f32.mrf.mxu0
    %v3858 = vadd.f32 %v3809, %v3857
    %3859 = vmatmul.bf16.gmra.mxu0 %v3338
    %v3860 = vpop.f32.mrf.mxu0
    %v3861 = vadd.f32 %v3812, %v3860
    %v3862 = vpop.f32.mrf.mxu0
    %v3863 = vadd.f32 %v3814, %v3862
    %3864 = vmatmul.bf16.gmra.mxu0 %v3378
    %v3865 = vpop.f32.mrf.mxu0
    %v3866 = vadd.f32 %v3817, %v3865
    %v3867 = vpop.f32.mrf.mxu0
    %v3868 = vadd.f32 %v3819, %v3867
    %3869 = vmatmul.bf16.gmra.mxu0 %v3418
    %v3870 = vpop.f32.mrf.mxu0
    %v3871 = vadd.f32 %v3822, %v3870
    %v3872 = vpop.f32.mrf.mxu0
    %v3873 = vadd.f32 %v3824, %v3872
    %3874 = vdwg.mxu0
    %3875 = vmatpush.bf16.msra.mxu0 %v1560
    %3876 = vmatpush.bf16.msra.mxu0 %v1559
    %3877 = vmatpush.bf16.msra.mxu0 %v1558
    %3878 = vmatpush.bf16.msra.mxu0 %v1557
    %3879 = vmatpush.bf16.msra.mxu0 %v1556
    %3880 = vmatpush.bf16.msra.mxu0 %v1555
    %3881 = vmatpush.bf16.msra.mxu0 %v1554
    %3882 = vmatpush.bf16.msra.mxu0 %v1553
    %3883 = vmatmul.bf16.gmra.mxu0 %v3139
    %v3884 = vpop.f32.mrf.mxu0
    %v3885 = vadd.f32 %v3836, %v3884
    %v3886 = vpop.f32.mrf.mxu0
    %v3887 = vadd.f32 %v3838, %v3886
    %3888 = vmatmul.bf16.gmra.mxu0 %v3179
    %v3889 = vpop.f32.mrf.mxu0
    %v3890 = vadd.f32 %v3841, %v3889
    %v3891 = vpop.f32.mrf.mxu0
    %v3892 = vadd.f32 %v3843, %v3891
    %3893 = vmatmul.bf16.gmra.mxu0 %v3219
    %v3894 = vpop.f32.mrf.mxu0
    %v3895 = vadd.f32 %v3846, %v3894
    %v3896 = vpop.f32.mrf.mxu0
    %v3897 = vadd.f32 %v3848, %v3896
    %3898 = vmatmul.bf16.gmra.mxu0 %v3259
    %v3899 = vpop.f32.mrf.mxu0
    %v3900 = vadd.f32 %v3851, %v3899
    %v3901 = vpop.f32.mrf.mxu0
    %v3902 = vadd.f32 %v3853, %v3901
    %3903 = vmatmul.bf16.gmra.mxu0 %v3299
    %v3904 = vpop.f32.mrf.mxu0
    %v3905 = vadd.f32 %v3856, %v3904
    %v3906 = vpop.f32.mrf.mxu0
    %v3907 = vadd.f32 %v3858, %v3906
    %3908 = vmatmul.bf16.gmra.mxu0 %v3339
    %v3909 = vpop.f32.mrf.mxu0
    %v3910 = vadd.f32 %v3861, %v3909
    %v3911 = vpop.f32.mrf.mxu0
    %v3912 = vadd.f32 %v3863, %v3911
    %3913 = vmatmul.bf16.gmra.mxu0 %v3379
    %v3914 = vpop.f32.mrf.mxu0
    %v3915 = vadd.f32 %v3866, %v3914
    %v3916 = vpop.f32.mrf.mxu0
    %v3917 = vadd.f32 %v3868, %v3916
    %3918 = vmatmul.bf16.gmra.mxu0 %v3419
    %v3919 = vpop.f32.mrf.mxu0
    %v3920 = vadd.f32 %v3871, %v3919
    %v3921 = vpop.f32.mrf.mxu0
    %v3922 = vadd.f32 %v3873, %v3921
    %3923 = vdwg.mxu0
    %3924 = vmatpush.bf16.msra.mxu0 %v1568
    %3925 = vmatpush.bf16.msra.mxu0 %v1567
    %3926 = vmatpush.bf16.msra.mxu0 %v1566
    %3927 = vmatpush.bf16.msra.mxu0 %v1565
    %3928 = vmatpush.bf16.msra.mxu0 %v1564
    %3929 = vmatpush.bf16.msra.mxu0 %v1563
    %3930 = vmatpush.bf16.msra.mxu0 %v1562
    %3931 = vmatpush.bf16.msra.mxu0 %v1561
    %3932 = vmatmul.bf16.gmra.mxu0 %v3140
    %v3933 = vpop.f32.mrf.mxu0
    %v3934 = vadd.f32 %v3885, %v3933
    %v3935 = vpop.f32.mrf.mxu0
    %v3936 = vadd.f32 %v3887, %v3935
    %3937 = vmatmul.bf16.gmra.mxu0 %v3180
    %v3938 = vpop.f32.mrf.mxu0
    %v3939 = vadd.f32 %v3890, %v3938
    %v3940 = vpop.f32.mrf.mxu0
    %v3941 = vadd.f32 %v3892, %v3940
    %3942 = vmatmul.bf16.gmra.mxu0 %v3220
    %v3943 = vpop.f32.mrf.mxu0
    %v3944 = vadd.f32 %v3895, %v3943
    %v3945 = vpop.f32.mrf.mxu0
    %v3946 = vadd.f32 %v3897, %v3945
    %3947 = vmatmul.bf16.gmra.mxu0 %v3260
    %v3948 = vpop.f32.mrf.mxu0
    %v3949 = vadd.f32 %v3900, %v3948
    %v3950 = vpop.f32.mrf.mxu0
    %v3951 = vadd.f32 %v3902, %v3950
    %3952 = vmatmul.bf16.gmra.mxu0 %v3300
    %v3953 = vpop.f32.mrf.mxu0
    %v3954 = vadd.f32 %v3905, %v3953
    %v3955 = vpop.f32.mrf.mxu0
    %v3956 = vadd.f32 %v3907, %v3955
    %3957 = vmatmul.bf16.gmra.mxu0 %v3340
    %v3958 = vpop.f32.mrf.mxu0
    %v3959 = vadd.f32 %v3910, %v3958
    %v3960 = vpop.f32.mrf.mxu0
    %v3961 = vadd.f32 %v3912, %v3960
    %3962 = vmatmul.bf16.gmra.mxu0 %v3380
    %v3963 = vpop.f32.mrf.mxu0
    %v3964 = vadd.f32 %v3915, %v3963
    %v3965 = vpop.f32.mrf.mxu0
    %v3966 = vadd.f32 %v3917, %v3965
    %3967 = vmatmul.bf16.gmra.mxu0 %v3420
    %v3968 = vpop.f32.mrf.mxu0
    %v3969 = vadd.f32 %v3920, %v3968
    %v3970 = vpop.f32.mrf.mxu0
    %v3971 = vadd.f32 %v3922, %v3970
    %3972 = vdwg.mxu0
    %3973 = vmatpush.bf16.msra.mxu0 %v1576
    %3974 = vmatpush.bf16.msra.mxu0 %v1575
    %3975 = vmatpush.bf16.msra.mxu0 %v1574
    %3976 = vmatpush.bf16.msra.mxu0 %v1573
    %3977 = vmatpush.bf16.msra.mxu0 %v1572
    %3978 = vmatpush.bf16.msra.mxu0 %v1571
    %3979 = vmatpush.bf16.msra.mxu0 %v1570
    %3980 = vmatpush.bf16.msra.mxu0 %v1569
    %3981 = vmatmul.bf16.gmra.mxu0 %v3141
    %v3982 = vpop.f32.mrf.mxu0
    %v3983 = vadd.f32 %v3934, %v3982
    %v3984 = vpop.f32.mrf.mxu0
    %v3985 = vadd.f32 %v3936, %v3984
    %3986 = vmatmul.bf16.gmra.mxu0 %v3181
    %v3987 = vpop.f32.mrf.mxu0
    %v3988 = vadd.f32 %v3939, %v3987
    %v3989 = vpop.f32.mrf.mxu0
    %v3990 = vadd.f32 %v3941, %v3989
    %3991 = vmatmul.bf16.gmra.mxu0 %v3221
    %v3992 = vpop.f32.mrf.mxu0
    %v3993 = vadd.f32 %v3944, %v3992
    %v3994 = vpop.f32.mrf.mxu0
    %v3995 = vadd.f32 %v3946, %v3994
    %3996 = vmatmul.bf16.gmra.mxu0 %v3261
    %v3997 = vpop.f32.mrf.mxu0
    %v3998 = vadd.f32 %v3949, %v3997
    %v3999 = vpop.f32.mrf.mxu0
    %v4000 = vadd.f32 %v3951, %v3999
    %4001 = vmatmul.bf16.gmra.mxu0 %v3301
    %v4002 = vpop.f32.mrf.mxu0
    %v4003 = vadd.f32 %v3954, %v4002
    %v4004 = vpop.f32.mrf.mxu0
    %v4005 = vadd.f32 %v3956, %v4004
    %4006 = vmatmul.bf16.gmra.mxu0 %v3341
    %v4007 = vpop.f32.mrf.mxu0
    %v4008 = vadd.f32 %v3959, %v4007
    %v4009 = vpop.f32.mrf.mxu0
    %v4010 = vadd.f32 %v3961, %v4009
    %4011 = vmatmul.bf16.gmra.mxu0 %v3381
    %v4012 = vpop.f32.mrf.mxu0
    %v4013 = vadd.f32 %v3964, %v4012
    %v4014 = vpop.f32.mrf.mxu0
    %v4015 = vadd.f32 %v3966, %v4014
    %4016 = vmatmul.bf16.gmra.mxu0 %v3421
    %v4017 = vpop.f32.mrf.mxu0
    %v4018 = vadd.f32 %v3969, %v4017
    %v4019 = vpop.f32.mrf.mxu0
    %v4020 = vadd.f32 %v3971, %v4019
    %4021 = vdwg.mxu0
    %4022 = vmatpush.bf16.msra.mxu0 %v1584
    %4023 = vmatpush.bf16.msra.mxu0 %v1583
    %4024 = vmatpush.bf16.msra.mxu0 %v1582
    %4025 = vmatpush.bf16.msra.mxu0 %v1581
    %4026 = vmatpush.bf16.msra.mxu0 %v1580
    %4027 = vmatpush.bf16.msra.mxu0 %v1579
    %4028 = vmatpush.bf16.msra.mxu0 %v1578
    %4029 = vmatpush.bf16.msra.mxu0 %v1577
    %4030 = vmatmul.bf16.gmra.mxu0 %v3142
    %v4031 = vpop.f32.mrf.mxu0
    %v4032 = vadd.f32 %v3983, %v4031
    %v4033 = vpop.f32.mrf.mxu0
    %v4034 = vadd.f32 %v3985, %v4033
    %4035 = vmatmul.bf16.gmra.mxu0 %v3182
    %v4036 = vpop.f32.mrf.mxu0
    %v4037 = vadd.f32 %v3988, %v4036
    %v4038 = vpop.f32.mrf.mxu0
    %v4039 = vadd.f32 %v3990, %v4038
    %4040 = vmatmul.bf16.gmra.mxu0 %v3222
    %v4041 = vpop.f32.mrf.mxu0
    %v4042 = vadd.f32 %v3993, %v4041
    %v4043 = vpop.f32.mrf.mxu0
    %v4044 = vadd.f32 %v3995, %v4043
    %4045 = vmatmul.bf16.gmra.mxu0 %v3262
    %v4046 = vpop.f32.mrf.mxu0
    %v4047 = vadd.f32 %v3998, %v4046
    %v4048 = vpop.f32.mrf.mxu0
    %v4049 = vadd.f32 %v4000, %v4048
    %4050 = vmatmul.bf16.gmra.mxu0 %v3302
    %v4051 = vpop.f32.mrf.mxu0
    %v4052 = vadd.f32 %v4003, %v4051
    %v4053 = vpop.f32.mrf.mxu0
    %v4054 = vadd.f32 %v4005, %v4053
    %4055 = vmatmul.bf16.gmra.mxu0 %v3342
    %v4056 = vpop.f32.mrf.mxu0
    %v4057 = vadd.f32 %v4008, %v4056
    %v4058 = vpop.f32.mrf.mxu0
    %v4059 = vadd.f32 %v4010, %v4058
    %4060 = vmatmul.bf16.gmra.mxu0 %v3382
    %v4061 = vpop.f32.mrf.mxu0
    %v4062 = vadd.f32 %v4013, %v4061
    %v4063 = vpop.f32.mrf.mxu0
    %v4064 = vadd.f32 %v4015, %v4063
    %4065 = vmatmul.bf16.gmra.mxu0 %v3422
    %v4066 = vpop.f32.mrf.mxu0
    %v4067 = vadd.f32 %v4018, %v4066
    %v4068 = vpop.f32.mrf.mxu0
    %v4069 = vadd.f32 %v4020, %v4068
    %4070 = vdwg.mxu0
    %4071 = vmatpush.bf16.msra.mxu0 %v1592
    %4072 = vmatpush.bf16.msra.mxu0 %v1591
    %4073 = vmatpush.bf16.msra.mxu0 %v1590
    %4074 = vmatpush.bf16.msra.mxu0 %v1589
    %4075 = vmatpush.bf16.msra.mxu0 %v1588
    %4076 = vmatpush.bf16.msra.mxu0 %v1587
    %4077 = vmatpush.bf16.msra.mxu0 %v1586
    %4078 = vmatpush.bf16.msra.mxu0 %v1585
    %4079 = vmatmul.bf16.gmra.mxu0 %v3143
    %v4080 = vpop.f32.mrf.mxu0
    %v4081 = vadd.f32 %v4032, %v4080
    %v4082 = vpop.f32.mrf.mxu0
    %v4083 = vadd.f32 %v4034, %v4082
    %4084 = vmatmul.bf16.gmra.mxu0 %v3183
    %v4085 = vpop.f32.mrf.mxu0
    %v4086 = vadd.f32 %v4037, %v4085
    %v4087 = vpop.f32.mrf.mxu0
    %v4088 = vadd.f32 %v4039, %v4087
    %4089 = vmatmul.bf16.gmra.mxu0 %v3223
    %v4090 = vpop.f32.mrf.mxu0
    %v4091 = vadd.f32 %v4042, %v4090
    %v4092 = vpop.f32.mrf.mxu0
    %v4093 = vadd.f32 %v4044, %v4092
    %4094 = vmatmul.bf16.gmra.mxu0 %v3263
    %v4095 = vpop.f32.mrf.mxu0
    %v4096 = vadd.f32 %v4047, %v4095
    %v4097 = vpop.f32.mrf.mxu0
    %v4098 = vadd.f32 %v4049, %v4097
    %4099 = vmatmul.bf16.gmra.mxu0 %v3303
    %v4100 = vpop.f32.mrf.mxu0
    %v4101 = vadd.f32 %v4052, %v4100
    %v4102 = vpop.f32.mrf.mxu0
    %v4103 = vadd.f32 %v4054, %v4102
    %4104 = vmatmul.bf16.gmra.mxu0 %v3343
    %v4105 = vpop.f32.mrf.mxu0
    %v4106 = vadd.f32 %v4057, %v4105
    %v4107 = vpop.f32.mrf.mxu0
    %v4108 = vadd.f32 %v4059, %v4107
    %4109 = vmatmul.bf16.gmra.mxu0 %v3383
    %v4110 = vpop.f32.mrf.mxu0
    %v4111 = vadd.f32 %v4062, %v4110
    %v4112 = vpop.f32.mrf.mxu0
    %v4113 = vadd.f32 %v4064, %v4112
    %4114 = vmatmul.bf16.gmra.mxu0 %v3423
    %v4115 = vpop.f32.mrf.mxu0
    %v4116 = vadd.f32 %v4067, %v4115
    %v4117 = vpop.f32.mrf.mxu0
    %v4118 = vadd.f32 %v4069, %v4117
    %4119 = vdwg.mxu0
    %4120 = vmatpush.bf16.msra.mxu0 %v1600
    %4121 = vmatpush.bf16.msra.mxu0 %v1599
    %4122 = vmatpush.bf16.msra.mxu0 %v1598
    %4123 = vmatpush.bf16.msra.mxu0 %v1597
    %4124 = vmatpush.bf16.msra.mxu0 %v1596
    %4125 = vmatpush.bf16.msra.mxu0 %v1595
    %4126 = vmatpush.bf16.msra.mxu0 %v1594
    %4127 = vmatpush.bf16.msra.mxu0 %v1593
    %4128 = vmatmul.bf16.gmra.mxu0 %v3144
    %v4129 = vpop.f32.mrf.mxu0
    %v4130 = vadd.f32 %v4081, %v4129
    %v4131 = vpop.f32.mrf.mxu0
    %v4132 = vadd.f32 %v4083, %v4131
    %4133 = vmatmul.bf16.gmra.mxu0 %v3184
    %v4134 = vpop.f32.mrf.mxu0
    %v4135 = vadd.f32 %v4086, %v4134
    %v4136 = vpop.f32.mrf.mxu0
    %v4137 = vadd.f32 %v4088, %v4136
    %4138 = vmatmul.bf16.gmra.mxu0 %v3224
    %v4139 = vpop.f32.mrf.mxu0
    %v4140 = vadd.f32 %v4091, %v4139
    %v4141 = vpop.f32.mrf.mxu0
    %v4142 = vadd.f32 %v4093, %v4141
    %4143 = vmatmul.bf16.gmra.mxu0 %v3264
    %v4144 = vpop.f32.mrf.mxu0
    %v4145 = vadd.f32 %v4096, %v4144
    %v4146 = vpop.f32.mrf.mxu0
    %v4147 = vadd.f32 %v4098, %v4146
    %4148 = vmatmul.bf16.gmra.mxu0 %v3304
    %v4149 = vpop.f32.mrf.mxu0
    %v4150 = vadd.f32 %v4101, %v4149
    %v4151 = vpop.f32.mrf.mxu0
    %v4152 = vadd.f32 %v4103, %v4151
    %4153 = vmatmul.bf16.gmra.mxu0 %v3344
    %v4154 = vpop.f32.mrf.mxu0
    %v4155 = vadd.f32 %v4106, %v4154
    %v4156 = vpop.f32.mrf.mxu0
    %v4157 = vadd.f32 %v4108, %v4156
    %4158 = vmatmul.bf16.gmra.mxu0 %v3384
    %v4159 = vpop.f32.mrf.mxu0
    %v4160 = vadd.f32 %v4111, %v4159
    %v4161 = vpop.f32.mrf.mxu0
    %v4162 = vadd.f32 %v4113, %v4161
    %4163 = vmatmul.bf16.gmra.mxu0 %v3424
    %v4164 = vpop.f32.mrf.mxu0
    %v4165 = vadd.f32 %v4116, %v4164
    %v4166 = vpop.f32.mrf.mxu0
    %v4167 = vadd.f32 %v4118, %v4166
    %4168 = vdwg.mxu0
    %4169 = vmatpush.bf16.msra.mxu0 %v1608
    %4170 = vmatpush.bf16.msra.mxu0 %v1607
    %4171 = vmatpush.bf16.msra.mxu0 %v1606
    %4172 = vmatpush.bf16.msra.mxu0 %v1605
    %4173 = vmatpush.bf16.msra.mxu0 %v1604
    %4174 = vmatpush.bf16.msra.mxu0 %v1603
    %4175 = vmatpush.bf16.msra.mxu0 %v1602
    %4176 = vmatpush.bf16.msra.mxu0 %v1601
    %4177 = vmatmul.bf16.gmra.mxu0 %v3145
    %v4178 = vpop.f32.mrf.mxu0
    %v4179 = vadd.f32 %v4130, %v4178
    %v4180 = vpop.f32.mrf.mxu0
    %v4181 = vadd.f32 %v4132, %v4180
    %4182 = vmatmul.bf16.gmra.mxu0 %v3185
    %v4183 = vpop.f32.mrf.mxu0
    %v4184 = vadd.f32 %v4135, %v4183
    %v4185 = vpop.f32.mrf.mxu0
    %v4186 = vadd.f32 %v4137, %v4185
    %4187 = vmatmul.bf16.gmra.mxu0 %v3225
    %v4188 = vpop.f32.mrf.mxu0
    %v4189 = vadd.f32 %v4140, %v4188
    %v4190 = vpop.f32.mrf.mxu0
    %v4191 = vadd.f32 %v4142, %v4190
    %4192 = vmatmul.bf16.gmra.mxu0 %v3265
    %v4193 = vpop.f32.mrf.mxu0
    %v4194 = vadd.f32 %v4145, %v4193
    %v4195 = vpop.f32.mrf.mxu0
    %v4196 = vadd.f32 %v4147, %v4195
    %4197 = vmatmul.bf16.gmra.mxu0 %v3305
    %v4198 = vpop.f32.mrf.mxu0
    %v4199 = vadd.f32 %v4150, %v4198
    %v4200 = vpop.f32.mrf.mxu0
    %v4201 = vadd.f32 %v4152, %v4200
    %4202 = vmatmul.bf16.gmra.mxu0 %v3345
    %v4203 = vpop.f32.mrf.mxu0
    %v4204 = vadd.f32 %v4155, %v4203
    %v4205 = vpop.f32.mrf.mxu0
    %v4206 = vadd.f32 %v4157, %v4205
    %4207 = vmatmul.bf16.gmra.mxu0 %v3385
    %v4208 = vpop.f32.mrf.mxu0
    %v4209 = vadd.f32 %v4160, %v4208
    %v4210 = vpop.f32.mrf.mxu0
    %v4211 = vadd.f32 %v4162, %v4210
    %4212 = vmatmul.bf16.gmra.mxu0 %v3425
    %v4213 = vpop.f32.mrf.mxu0
    %v4214 = vadd.f32 %v4165, %v4213
    %v4215 = vpop.f32.mrf.mxu0
    %v4216 = vadd.f32 %v4167, %v4215
    %4217 = vdwg.mxu0
    %4218 = vmatpush.bf16.msra.mxu0 %v1616
    %4219 = vmatpush.bf16.msra.mxu0 %v1615
    %4220 = vmatpush.bf16.msra.mxu0 %v1614
    %4221 = vmatpush.bf16.msra.mxu0 %v1613
    %4222 = vmatpush.bf16.msra.mxu0 %v1612
    %4223 = vmatpush.bf16.msra.mxu0 %v1611
    %4224 = vmatpush.bf16.msra.mxu0 %v1610
    %4225 = vmatpush.bf16.msra.mxu0 %v1609
    %4226 = vmatmul.bf16.gmra.mxu0 %v3146
    %v4227 = vpop.f32.mrf.mxu0
    %v4228 = vadd.f32 %v4179, %v4227
    %v4229 = vpop.f32.mrf.mxu0
    %v4230 = vadd.f32 %v4181, %v4229
    %4231 = vmatmul.bf16.gmra.mxu0 %v3186
    %v4232 = vpop.f32.mrf.mxu0
    %v4233 = vadd.f32 %v4184, %v4232
    %v4234 = vpop.f32.mrf.mxu0
    %v4235 = vadd.f32 %v4186, %v4234
    %4236 = vmatmul.bf16.gmra.mxu0 %v3226
    %v4237 = vpop.f32.mrf.mxu0
    %v4238 = vadd.f32 %v4189, %v4237
    %v4239 = vpop.f32.mrf.mxu0
    %v4240 = vadd.f32 %v4191, %v4239
    %4241 = vmatmul.bf16.gmra.mxu0 %v3266
    %v4242 = vpop.f32.mrf.mxu0
    %v4243 = vadd.f32 %v4194, %v4242
    %v4244 = vpop.f32.mrf.mxu0
    %v4245 = vadd.f32 %v4196, %v4244
    %4246 = vmatmul.bf16.gmra.mxu0 %v3306
    %v4247 = vpop.f32.mrf.mxu0
    %v4248 = vadd.f32 %v4199, %v4247
    %v4249 = vpop.f32.mrf.mxu0
    %v4250 = vadd.f32 %v4201, %v4249
    %4251 = vmatmul.bf16.gmra.mxu0 %v3346
    %v4252 = vpop.f32.mrf.mxu0
    %v4253 = vadd.f32 %v4204, %v4252
    %v4254 = vpop.f32.mrf.mxu0
    %v4255 = vadd.f32 %v4206, %v4254
    %4256 = vmatmul.bf16.gmra.mxu0 %v3386
    %v4257 = vpop.f32.mrf.mxu0
    %v4258 = vadd.f32 %v4209, %v4257
    %v4259 = vpop.f32.mrf.mxu0
    %v4260 = vadd.f32 %v4211, %v4259
    %4261 = vmatmul.bf16.gmra.mxu0 %v3426
    %v4262 = vpop.f32.mrf.mxu0
    %v4263 = vadd.f32 %v4214, %v4262
    %v4264 = vpop.f32.mrf.mxu0
    %v4265 = vadd.f32 %v4216, %v4264
    %4266 = vdwg.mxu0
    %4267 = vmatpush.bf16.msra.mxu0 %v1624
    %4268 = vmatpush.bf16.msra.mxu0 %v1623
    %4269 = vmatpush.bf16.msra.mxu0 %v1622
    %4270 = vmatpush.bf16.msra.mxu0 %v1621
    %4271 = vmatpush.bf16.msra.mxu0 %v1620
    %4272 = vmatpush.bf16.msra.mxu0 %v1619
    %4273 = vmatpush.bf16.msra.mxu0 %v1618
    %4274 = vmatpush.bf16.msra.mxu0 %v1617
    %4275 = vmatmul.bf16.gmra.mxu0 %v3147
    %v4276 = vpop.f32.mrf.mxu0
    %v4277 = vadd.f32 %v4228, %v4276
    %v4278 = vpop.f32.mrf.mxu0
    %v4279 = vadd.f32 %v4230, %v4278
    %4280 = vmatmul.bf16.gmra.mxu0 %v3187
    %v4281 = vpop.f32.mrf.mxu0
    %v4282 = vadd.f32 %v4233, %v4281
    %v4283 = vpop.f32.mrf.mxu0
    %v4284 = vadd.f32 %v4235, %v4283
    %4285 = vmatmul.bf16.gmra.mxu0 %v3227
    %v4286 = vpop.f32.mrf.mxu0
    %v4287 = vadd.f32 %v4238, %v4286
    %v4288 = vpop.f32.mrf.mxu0
    %v4289 = vadd.f32 %v4240, %v4288
    %4290 = vmatmul.bf16.gmra.mxu0 %v3267
    %v4291 = vpop.f32.mrf.mxu0
    %v4292 = vadd.f32 %v4243, %v4291
    %v4293 = vpop.f32.mrf.mxu0
    %v4294 = vadd.f32 %v4245, %v4293
    %4295 = vmatmul.bf16.gmra.mxu0 %v3307
    %v4296 = vpop.f32.mrf.mxu0
    %v4297 = vadd.f32 %v4248, %v4296
    %v4298 = vpop.f32.mrf.mxu0
    %v4299 = vadd.f32 %v4250, %v4298
    %4300 = vmatmul.bf16.gmra.mxu0 %v3347
    %v4301 = vpop.f32.mrf.mxu0
    %v4302 = vadd.f32 %v4253, %v4301
    %v4303 = vpop.f32.mrf.mxu0
    %v4304 = vadd.f32 %v4255, %v4303
    %4305 = vmatmul.bf16.gmra.mxu0 %v3387
    %v4306 = vpop.f32.mrf.mxu0
    %v4307 = vadd.f32 %v4258, %v4306
    %v4308 = vpop.f32.mrf.mxu0
    %v4309 = vadd.f32 %v4260, %v4308
    %4310 = vmatmul.bf16.gmra.mxu0 %v3427
    %v4311 = vpop.f32.mrf.mxu0
    %v4312 = vadd.f32 %v4263, %v4311
    %v4313 = vpop.f32.mrf.mxu0
    %v4314 = vadd.f32 %v4265, %v4313
    %4315 = vdwg.mxu0
    %4316 = vmatpush.bf16.msra.mxu0 %v1632
    %4317 = vmatpush.bf16.msra.mxu0 %v1631
    %4318 = vmatpush.bf16.msra.mxu0 %v1630
    %4319 = vmatpush.bf16.msra.mxu0 %v1629
    %4320 = vmatpush.bf16.msra.mxu0 %v1628
    %4321 = vmatpush.bf16.msra.mxu0 %v1627
    %4322 = vmatpush.bf16.msra.mxu0 %v1626
    %4323 = vmatpush.bf16.msra.mxu0 %v1625
    %4324 = vmatmul.bf16.gmra.mxu0 %v3148
    %v4325 = vpop.f32.mrf.mxu0
    %v4326 = vadd.f32 %v4277, %v4325
    %v4327 = vpop.f32.mrf.mxu0
    %v4328 = vadd.f32 %v4279, %v4327
    %4329 = vmatmul.bf16.gmra.mxu0 %v3188
    %v4330 = vpop.f32.mrf.mxu0
    %v4331 = vadd.f32 %v4282, %v4330
    %v4332 = vpop.f32.mrf.mxu0
    %v4333 = vadd.f32 %v4284, %v4332
    %4334 = vmatmul.bf16.gmra.mxu0 %v3228
    %v4335 = vpop.f32.mrf.mxu0
    %v4336 = vadd.f32 %v4287, %v4335
    %v4337 = vpop.f32.mrf.mxu0
    %v4338 = vadd.f32 %v4289, %v4337
    %4339 = vmatmul.bf16.gmra.mxu0 %v3268
    %v4340 = vpop.f32.mrf.mxu0
    %v4341 = vadd.f32 %v4292, %v4340
    %v4342 = vpop.f32.mrf.mxu0
    %v4343 = vadd.f32 %v4294, %v4342
    %4344 = vmatmul.bf16.gmra.mxu0 %v3308
    %v4345 = vpop.f32.mrf.mxu0
    %v4346 = vadd.f32 %v4297, %v4345
    %v4347 = vpop.f32.mrf.mxu0
    %v4348 = vadd.f32 %v4299, %v4347
    %4349 = vmatmul.bf16.gmra.mxu0 %v3348
    %v4350 = vpop.f32.mrf.mxu0
    %v4351 = vadd.f32 %v4302, %v4350
    %v4352 = vpop.f32.mrf.mxu0
    %v4353 = vadd.f32 %v4304, %v4352
    %4354 = vmatmul.bf16.gmra.mxu0 %v3388
    %v4355 = vpop.f32.mrf.mxu0
    %v4356 = vadd.f32 %v4307, %v4355
    %v4357 = vpop.f32.mrf.mxu0
    %v4358 = vadd.f32 %v4309, %v4357
    %4359 = vmatmul.bf16.gmra.mxu0 %v3428
    %v4360 = vpop.f32.mrf.mxu0
    %v4361 = vadd.f32 %v4312, %v4360
    %v4362 = vpop.f32.mrf.mxu0
    %v4363 = vadd.f32 %v4314, %v4362
    %4364 = vdwg.mxu0
    %4365 = vmatpush.bf16.msra.mxu0 %v1640
    %4366 = vmatpush.bf16.msra.mxu0 %v1639
    %4367 = vmatpush.bf16.msra.mxu0 %v1638
    %4368 = vmatpush.bf16.msra.mxu0 %v1637
    %4369 = vmatpush.bf16.msra.mxu0 %v1636
    %4370 = vmatpush.bf16.msra.mxu0 %v1635
    %4371 = vmatpush.bf16.msra.mxu0 %v1634
    %4372 = vmatpush.bf16.msra.mxu0 %v1633
    %4373 = vmatmul.bf16.gmra.mxu0 %v3149
    %v4374 = vpop.f32.mrf.mxu0
    %v4375 = vadd.f32 %v4326, %v4374
    %v4376 = vpop.f32.mrf.mxu0
    %v4377 = vadd.f32 %v4328, %v4376
    %4378 = vmatmul.bf16.gmra.mxu0 %v3189
    %v4379 = vpop.f32.mrf.mxu0
    %v4380 = vadd.f32 %v4331, %v4379
    %v4381 = vpop.f32.mrf.mxu0
    %v4382 = vadd.f32 %v4333, %v4381
    %4383 = vmatmul.bf16.gmra.mxu0 %v3229
    %v4384 = vpop.f32.mrf.mxu0
    %v4385 = vadd.f32 %v4336, %v4384
    %v4386 = vpop.f32.mrf.mxu0
    %v4387 = vadd.f32 %v4338, %v4386
    %4388 = vmatmul.bf16.gmra.mxu0 %v3269
    %v4389 = vpop.f32.mrf.mxu0
    %v4390 = vadd.f32 %v4341, %v4389
    %v4391 = vpop.f32.mrf.mxu0
    %v4392 = vadd.f32 %v4343, %v4391
    %4393 = vmatmul.bf16.gmra.mxu0 %v3309
    %v4394 = vpop.f32.mrf.mxu0
    %v4395 = vadd.f32 %v4346, %v4394
    %v4396 = vpop.f32.mrf.mxu0
    %v4397 = vadd.f32 %v4348, %v4396
    %4398 = vmatmul.bf16.gmra.mxu0 %v3349
    %v4399 = vpop.f32.mrf.mxu0
    %v4400 = vadd.f32 %v4351, %v4399
    %v4401 = vpop.f32.mrf.mxu0
    %v4402 = vadd.f32 %v4353, %v4401
    %4403 = vmatmul.bf16.gmra.mxu0 %v3389
    %v4404 = vpop.f32.mrf.mxu0
    %v4405 = vadd.f32 %v4356, %v4404
    %v4406 = vpop.f32.mrf.mxu0
    %v4407 = vadd.f32 %v4358, %v4406
    %4408 = vmatmul.bf16.gmra.mxu0 %v3429
    %v4409 = vpop.f32.mrf.mxu0
    %v4410 = vadd.f32 %v4361, %v4409
    %v4411 = vpop.f32.mrf.mxu0
    %v4412 = vadd.f32 %v4363, %v4411
    %4413 = vdwg.mxu0
    %4414 = vmatpush.bf16.msra.mxu0 %v1648
    %4415 = vmatpush.bf16.msra.mxu0 %v1647
    %4416 = vmatpush.bf16.msra.mxu0 %v1646
    %4417 = vmatpush.bf16.msra.mxu0 %v1645
    %4418 = vmatpush.bf16.msra.mxu0 %v1644
    %4419 = vmatpush.bf16.msra.mxu0 %v1643
    %4420 = vmatpush.bf16.msra.mxu0 %v1642
    %4421 = vmatpush.bf16.msra.mxu0 %v1641
    %4422 = vmatmul.bf16.gmra.mxu0 %v3150
    %v4423 = vpop.f32.mrf.mxu0
    %v4424 = vadd.f32 %v4375, %v4423
    %v4425 = vpop.f32.mrf.mxu0
    %v4426 = vadd.f32 %v4377, %v4425
    %4427 = vmatmul.bf16.gmra.mxu0 %v3190
    %v4428 = vpop.f32.mrf.mxu0
    %v4429 = vadd.f32 %v4380, %v4428
    %v4430 = vpop.f32.mrf.mxu0
    %v4431 = vadd.f32 %v4382, %v4430
    %4432 = vmatmul.bf16.gmra.mxu0 %v3230
    %v4433 = vpop.f32.mrf.mxu0
    %v4434 = vadd.f32 %v4385, %v4433
    %v4435 = vpop.f32.mrf.mxu0
    %v4436 = vadd.f32 %v4387, %v4435
    %4437 = vmatmul.bf16.gmra.mxu0 %v3270
    %v4438 = vpop.f32.mrf.mxu0
    %v4439 = vadd.f32 %v4390, %v4438
    %v4440 = vpop.f32.mrf.mxu0
    %v4441 = vadd.f32 %v4392, %v4440
    %4442 = vmatmul.bf16.gmra.mxu0 %v3310
    %v4443 = vpop.f32.mrf.mxu0
    %v4444 = vadd.f32 %v4395, %v4443
    %v4445 = vpop.f32.mrf.mxu0
    %v4446 = vadd.f32 %v4397, %v4445
    %4447 = vmatmul.bf16.gmra.mxu0 %v3350
    %v4448 = vpop.f32.mrf.mxu0
    %v4449 = vadd.f32 %v4400, %v4448
    %v4450 = vpop.f32.mrf.mxu0
    %v4451 = vadd.f32 %v4402, %v4450
    %4452 = vmatmul.bf16.gmra.mxu0 %v3390
    %v4453 = vpop.f32.mrf.mxu0
    %v4454 = vadd.f32 %v4405, %v4453
    %v4455 = vpop.f32.mrf.mxu0
    %v4456 = vadd.f32 %v4407, %v4455
    %4457 = vmatmul.bf16.gmra.mxu0 %v3430
    %v4458 = vpop.f32.mrf.mxu0
    %v4459 = vadd.f32 %v4410, %v4458
    %v4460 = vpop.f32.mrf.mxu0
    %v4461 = vadd.f32 %v4412, %v4460
    %4462 = vdwg.mxu0
    %4463 = vmatpush.bf16.msra.mxu0 %v1656
    %4464 = vmatpush.bf16.msra.mxu0 %v1655
    %4465 = vmatpush.bf16.msra.mxu0 %v1654
    %4466 = vmatpush.bf16.msra.mxu0 %v1653
    %4467 = vmatpush.bf16.msra.mxu0 %v1652
    %4468 = vmatpush.bf16.msra.mxu0 %v1651
    %4469 = vmatpush.bf16.msra.mxu0 %v1650
    %4470 = vmatpush.bf16.msra.mxu0 %v1649
    %4471 = vmatmul.bf16.gmra.mxu0 %v3151
    %v4472 = vpop.f32.mrf.mxu0
    %v4473 = vadd.f32 %v4424, %v4472
    %v4474 = vpop.f32.mrf.mxu0
    %v4475 = vadd.f32 %v4426, %v4474
    %4476 = vmatmul.bf16.gmra.mxu0 %v3191
    %v4477 = vpop.f32.mrf.mxu0
    %v4478 = vadd.f32 %v4429, %v4477
    %v4479 = vpop.f32.mrf.mxu0
    %v4480 = vadd.f32 %v4431, %v4479
    %4481 = vmatmul.bf16.gmra.mxu0 %v3231
    %v4482 = vpop.f32.mrf.mxu0
    %v4483 = vadd.f32 %v4434, %v4482
    %v4484 = vpop.f32.mrf.mxu0
    %v4485 = vadd.f32 %v4436, %v4484
    %4486 = vmatmul.bf16.gmra.mxu0 %v3271
    %v4487 = vpop.f32.mrf.mxu0
    %v4488 = vadd.f32 %v4439, %v4487
    %v4489 = vpop.f32.mrf.mxu0
    %v4490 = vadd.f32 %v4441, %v4489
    %4491 = vmatmul.bf16.gmra.mxu0 %v3311
    %v4492 = vpop.f32.mrf.mxu0
    %v4493 = vadd.f32 %v4444, %v4492
    %v4494 = vpop.f32.mrf.mxu0
    %v4495 = vadd.f32 %v4446, %v4494
    %4496 = vmatmul.bf16.gmra.mxu0 %v3351
    %v4497 = vpop.f32.mrf.mxu0
    %v4498 = vadd.f32 %v4449, %v4497
    %v4499 = vpop.f32.mrf.mxu0
    %v4500 = vadd.f32 %v4451, %v4499
    %4501 = vmatmul.bf16.gmra.mxu0 %v3391
    %v4502 = vpop.f32.mrf.mxu0
    %v4503 = vadd.f32 %v4454, %v4502
    %v4504 = vpop.f32.mrf.mxu0
    %v4505 = vadd.f32 %v4456, %v4504
    %4506 = vmatmul.bf16.gmra.mxu0 %v3431
    %v4507 = vpop.f32.mrf.mxu0
    %v4508 = vadd.f32 %v4459, %v4507
    %v4509 = vpop.f32.mrf.mxu0
    %v4510 = vadd.f32 %v4461, %v4509
    %4511 = vdwg.mxu0
    %4512 = vmatpush.bf16.msra.mxu0 %v1664
    %4513 = vmatpush.bf16.msra.mxu0 %v1663
    %4514 = vmatpush.bf16.msra.mxu0 %v1662
    %4515 = vmatpush.bf16.msra.mxu0 %v1661
    %4516 = vmatpush.bf16.msra.mxu0 %v1660
    %4517 = vmatpush.bf16.msra.mxu0 %v1659
    %4518 = vmatpush.bf16.msra.mxu0 %v1658
    %4519 = vmatpush.bf16.msra.mxu0 %v1657
    %4520 = vmatmul.bf16.gmra.mxu0 %v3152
    %v4521 = vpop.f32.mrf.mxu0
    %v4522 = vadd.f32 %v4473, %v4521
    %v4523 = vpop.f32.mrf.mxu0
    %v4524 = vadd.f32 %v4475, %v4523
    %4525 = vmatmul.bf16.gmra.mxu0 %v3192
    %v4526 = vpop.f32.mrf.mxu0
    %v4527 = vadd.f32 %v4478, %v4526
    %v4528 = vpop.f32.mrf.mxu0
    %v4529 = vadd.f32 %v4480, %v4528
    %4530 = vmatmul.bf16.gmra.mxu0 %v3232
    %v4531 = vpop.f32.mrf.mxu0
    %v4532 = vadd.f32 %v4483, %v4531
    %v4533 = vpop.f32.mrf.mxu0
    %v4534 = vadd.f32 %v4485, %v4533
    %4535 = vmatmul.bf16.gmra.mxu0 %v3272
    %v4536 = vpop.f32.mrf.mxu0
    %v4537 = vadd.f32 %v4488, %v4536
    %v4538 = vpop.f32.mrf.mxu0
    %v4539 = vadd.f32 %v4490, %v4538
    %4540 = vmatmul.bf16.gmra.mxu0 %v3312
    %v4541 = vpop.f32.mrf.mxu0
    %v4542 = vadd.f32 %v4493, %v4541
    %v4543 = vpop.f32.mrf.mxu0
    %v4544 = vadd.f32 %v4495, %v4543
    %4545 = vmatmul.bf16.gmra.mxu0 %v3352
    %v4546 = vpop.f32.mrf.mxu0
    %v4547 = vadd.f32 %v4498, %v4546
    %v4548 = vpop.f32.mrf.mxu0
    %v4549 = vadd.f32 %v4500, %v4548
    %4550 = vmatmul.bf16.gmra.mxu0 %v3392
    %v4551 = vpop.f32.mrf.mxu0
    %v4552 = vadd.f32 %v4503, %v4551
    %v4553 = vpop.f32.mrf.mxu0
    %v4554 = vadd.f32 %v4505, %v4553
    %4555 = vmatmul.bf16.gmra.mxu0 %v3432
    %v4556 = vpop.f32.mrf.mxu0
    %v4557 = vadd.f32 %v4508, %v4556
    %v4558 = vpop.f32.mrf.mxu0
    %v4559 = vadd.f32 %v4510, %v4558
    %4560 = vdwg.mxu0
    %4561 = vmatpush.bf16.msra.mxu0 %v1672
    %4562 = vmatpush.bf16.msra.mxu0 %v1671
    %4563 = vmatpush.bf16.msra.mxu0 %v1670
    %4564 = vmatpush.bf16.msra.mxu0 %v1669
    %4565 = vmatpush.bf16.msra.mxu0 %v1668
    %4566 = vmatpush.bf16.msra.mxu0 %v1667
    %4567 = vmatpush.bf16.msra.mxu0 %v1666
    %4568 = vmatpush.bf16.msra.mxu0 %v1665
    %4569 = vmatmul.bf16.gmra.mxu0 %v3153
    %v4570 = vpop.f32.mrf.mxu0
    %v4571 = vadd.f32 %v4522, %v4570
    %v4572 = vpop.f32.mrf.mxu0
    %v4573 = vadd.f32 %v4524, %v4572
    %4574 = vmatmul.bf16.gmra.mxu0 %v3193
    %v4575 = vpop.f32.mrf.mxu0
    %v4576 = vadd.f32 %v4527, %v4575
    %v4577 = vpop.f32.mrf.mxu0
    %v4578 = vadd.f32 %v4529, %v4577
    %4579 = vmatmul.bf16.gmra.mxu0 %v3233
    %v4580 = vpop.f32.mrf.mxu0
    %v4581 = vadd.f32 %v4532, %v4580
    %v4582 = vpop.f32.mrf.mxu0
    %v4583 = vadd.f32 %v4534, %v4582
    %4584 = vmatmul.bf16.gmra.mxu0 %v3273
    %v4585 = vpop.f32.mrf.mxu0
    %v4586 = vadd.f32 %v4537, %v4585
    %v4587 = vpop.f32.mrf.mxu0
    %v4588 = vadd.f32 %v4539, %v4587
    %4589 = vmatmul.bf16.gmra.mxu0 %v3313
    %v4590 = vpop.f32.mrf.mxu0
    %v4591 = vadd.f32 %v4542, %v4590
    %v4592 = vpop.f32.mrf.mxu0
    %v4593 = vadd.f32 %v4544, %v4592
    %4594 = vmatmul.bf16.gmra.mxu0 %v3353
    %v4595 = vpop.f32.mrf.mxu0
    %v4596 = vadd.f32 %v4547, %v4595
    %v4597 = vpop.f32.mrf.mxu0
    %v4598 = vadd.f32 %v4549, %v4597
    %4599 = vmatmul.bf16.gmra.mxu0 %v3393
    %v4600 = vpop.f32.mrf.mxu0
    %v4601 = vadd.f32 %v4552, %v4600
    %v4602 = vpop.f32.mrf.mxu0
    %v4603 = vadd.f32 %v4554, %v4602
    %4604 = vmatmul.bf16.gmra.mxu0 %v3433
    %v4605 = vpop.f32.mrf.mxu0
    %v4606 = vadd.f32 %v4557, %v4605
    %v4607 = vpop.f32.mrf.mxu0
    %v4608 = vadd.f32 %v4559, %v4607
    %4609 = vdwg.mxu0
    %4610 = vmatpush.bf16.msra.mxu0 %v1680
    %4611 = vmatpush.bf16.msra.mxu0 %v1679
    %4612 = vmatpush.bf16.msra.mxu0 %v1678
    %4613 = vmatpush.bf16.msra.mxu0 %v1677
    %4614 = vmatpush.bf16.msra.mxu0 %v1676
    %4615 = vmatpush.bf16.msra.mxu0 %v1675
    %4616 = vmatpush.bf16.msra.mxu0 %v1674
    %4617 = vmatpush.bf16.msra.mxu0 %v1673
    %4618 = vmatmul.bf16.gmra.mxu0 %v3154
    %v4619 = vpop.f32.mrf.mxu0
    %v4620 = vadd.f32 %v4571, %v4619
    %v4621 = vpop.f32.mrf.mxu0
    %v4622 = vadd.f32 %v4573, %v4621
    %4623 = vmatmul.bf16.gmra.mxu0 %v3194
    %v4624 = vpop.f32.mrf.mxu0
    %v4625 = vadd.f32 %v4576, %v4624
    %v4626 = vpop.f32.mrf.mxu0
    %v4627 = vadd.f32 %v4578, %v4626
    %4628 = vmatmul.bf16.gmra.mxu0 %v3234
    %v4629 = vpop.f32.mrf.mxu0
    %v4630 = vadd.f32 %v4581, %v4629
    %v4631 = vpop.f32.mrf.mxu0
    %v4632 = vadd.f32 %v4583, %v4631
    %4633 = vmatmul.bf16.gmra.mxu0 %v3274
    %v4634 = vpop.f32.mrf.mxu0
    %v4635 = vadd.f32 %v4586, %v4634
    %v4636 = vpop.f32.mrf.mxu0
    %v4637 = vadd.f32 %v4588, %v4636
    %4638 = vmatmul.bf16.gmra.mxu0 %v3314
    %v4639 = vpop.f32.mrf.mxu0
    %v4640 = vadd.f32 %v4591, %v4639
    %v4641 = vpop.f32.mrf.mxu0
    %v4642 = vadd.f32 %v4593, %v4641
    %4643 = vmatmul.bf16.gmra.mxu0 %v3354
    %v4644 = vpop.f32.mrf.mxu0
    %v4645 = vadd.f32 %v4596, %v4644
    %v4646 = vpop.f32.mrf.mxu0
    %v4647 = vadd.f32 %v4598, %v4646
    %4648 = vmatmul.bf16.gmra.mxu0 %v3394
    %v4649 = vpop.f32.mrf.mxu0
    %v4650 = vadd.f32 %v4601, %v4649
    %v4651 = vpop.f32.mrf.mxu0
    %v4652 = vadd.f32 %v4603, %v4651
    %4653 = vmatmul.bf16.gmra.mxu0 %v3434
    %v4654 = vpop.f32.mrf.mxu0
    %v4655 = vadd.f32 %v4606, %v4654
    %v4656 = vpop.f32.mrf.mxu0
    %v4657 = vadd.f32 %v4608, %v4656
    %4658 = vdwg.mxu0
    %4659 = vmatpush.bf16.msra.mxu0 %v1688
    %4660 = vmatpush.bf16.msra.mxu0 %v1687
    %4661 = vmatpush.bf16.msra.mxu0 %v1686
    %4662 = vmatpush.bf16.msra.mxu0 %v1685
    %4663 = vmatpush.bf16.msra.mxu0 %v1684
    %4664 = vmatpush.bf16.msra.mxu0 %v1683
    %4665 = vmatpush.bf16.msra.mxu0 %v1682
    %4666 = vmatpush.bf16.msra.mxu0 %v1681
    %4667 = vmatmul.bf16.gmra.mxu0 %v3155
    %v4668 = vpop.f32.mrf.mxu0
    %v4669 = vadd.f32 %v4620, %v4668
    %v4670 = vpop.f32.mrf.mxu0
    %v4671 = vadd.f32 %v4622, %v4670
    %4672 = vmatmul.bf16.gmra.mxu0 %v3195
    %v4673 = vpop.f32.mrf.mxu0
    %v4674 = vadd.f32 %v4625, %v4673
    %v4675 = vpop.f32.mrf.mxu0
    %v4676 = vadd.f32 %v4627, %v4675
    %4677 = vmatmul.bf16.gmra.mxu0 %v3235
    %v4678 = vpop.f32.mrf.mxu0
    %v4679 = vadd.f32 %v4630, %v4678
    %v4680 = vpop.f32.mrf.mxu0
    %v4681 = vadd.f32 %v4632, %v4680
    %4682 = vmatmul.bf16.gmra.mxu0 %v3275
    %v4683 = vpop.f32.mrf.mxu0
    %v4684 = vadd.f32 %v4635, %v4683
    %v4685 = vpop.f32.mrf.mxu0
    %v4686 = vadd.f32 %v4637, %v4685
    %4687 = vmatmul.bf16.gmra.mxu0 %v3315
    %v4688 = vpop.f32.mrf.mxu0
    %v4689 = vadd.f32 %v4640, %v4688
    %v4690 = vpop.f32.mrf.mxu0
    %v4691 = vadd.f32 %v4642, %v4690
    %4692 = vmatmul.bf16.gmra.mxu0 %v3355
    %v4693 = vpop.f32.mrf.mxu0
    %v4694 = vadd.f32 %v4645, %v4693
    %v4695 = vpop.f32.mrf.mxu0
    %v4696 = vadd.f32 %v4647, %v4695
    %4697 = vmatmul.bf16.gmra.mxu0 %v3395
    %v4698 = vpop.f32.mrf.mxu0
    %v4699 = vadd.f32 %v4650, %v4698
    %v4700 = vpop.f32.mrf.mxu0
    %v4701 = vadd.f32 %v4652, %v4700
    %4702 = vmatmul.bf16.gmra.mxu0 %v3435
    %v4703 = vpop.f32.mrf.mxu0
    %v4704 = vadd.f32 %v4655, %v4703
    %v4705 = vpop.f32.mrf.mxu0
    %v4706 = vadd.f32 %v4657, %v4705
    %4707 = vdwg.mxu0
    %4708 = vmatpush.bf16.msra.mxu0 %v1696
    %4709 = vmatpush.bf16.msra.mxu0 %v1695
    %4710 = vmatpush.bf16.msra.mxu0 %v1694
    %4711 = vmatpush.bf16.msra.mxu0 %v1693
    %4712 = vmatpush.bf16.msra.mxu0 %v1692
    %4713 = vmatpush.bf16.msra.mxu0 %v1691
    %4714 = vmatpush.bf16.msra.mxu0 %v1690
    %4715 = vmatpush.bf16.msra.mxu0 %v1689
    %4716 = vmatmul.bf16.gmra.mxu0 %v3156
    %v4717 = vpop.f32.mrf.mxu0
    %v4718 = vadd.f32 %v4669, %v4717
    %v4719 = vpop.f32.mrf.mxu0
    %v4720 = vadd.f32 %v4671, %v4719
    %4721 = vmatmul.bf16.gmra.mxu0 %v3196
    %v4722 = vpop.f32.mrf.mxu0
    %v4723 = vadd.f32 %v4674, %v4722
    %v4724 = vpop.f32.mrf.mxu0
    %v4725 = vadd.f32 %v4676, %v4724
    %4726 = vmatmul.bf16.gmra.mxu0 %v3236
    %v4727 = vpop.f32.mrf.mxu0
    %v4728 = vadd.f32 %v4679, %v4727
    %v4729 = vpop.f32.mrf.mxu0
    %v4730 = vadd.f32 %v4681, %v4729
    %4731 = vmatmul.bf16.gmra.mxu0 %v3276
    %v4732 = vpop.f32.mrf.mxu0
    %v4733 = vadd.f32 %v4684, %v4732
    %v4734 = vpop.f32.mrf.mxu0
    %v4735 = vadd.f32 %v4686, %v4734
    %4736 = vmatmul.bf16.gmra.mxu0 %v3316
    %v4737 = vpop.f32.mrf.mxu0
    %v4738 = vadd.f32 %v4689, %v4737
    %v4739 = vpop.f32.mrf.mxu0
    %v4740 = vadd.f32 %v4691, %v4739
    %4741 = vmatmul.bf16.gmra.mxu0 %v3356
    %v4742 = vpop.f32.mrf.mxu0
    %v4743 = vadd.f32 %v4694, %v4742
    %v4744 = vpop.f32.mrf.mxu0
    %v4745 = vadd.f32 %v4696, %v4744
    %4746 = vmatmul.bf16.gmra.mxu0 %v3396
    %v4747 = vpop.f32.mrf.mxu0
    %v4748 = vadd.f32 %v4699, %v4747
    %v4749 = vpop.f32.mrf.mxu0
    %v4750 = vadd.f32 %v4701, %v4749
    %4751 = vmatmul.bf16.gmra.mxu0 %v3436
    %v4752 = vpop.f32.mrf.mxu0
    %v4753 = vadd.f32 %v4704, %v4752
    %v4754 = vpop.f32.mrf.mxu0
    %v4755 = vadd.f32 %v4706, %v4754
    %4756 = vdwg.mxu0
    %4757 = vmatpush.bf16.msra.mxu0 %v1704
    %4758 = vmatpush.bf16.msra.mxu0 %v1703
    %4759 = vmatpush.bf16.msra.mxu0 %v1702
    %4760 = vmatpush.bf16.msra.mxu0 %v1701
    %4761 = vmatpush.bf16.msra.mxu0 %v1700
    %4762 = vmatpush.bf16.msra.mxu0 %v1699
    %4763 = vmatpush.bf16.msra.mxu0 %v1698
    %4764 = vmatpush.bf16.msra.mxu0 %v1697
    %4765 = vmatmul.bf16.gmra.mxu0 %v3157
    %v4766 = vpop.f32.mrf.mxu0
    %v4767 = vadd.f32 %v4718, %v4766
    %v4768 = vpop.f32.mrf.mxu0
    %v4769 = vadd.f32 %v4720, %v4768
    %4770 = vmatmul.bf16.gmra.mxu0 %v3197
    %v4771 = vpop.f32.mrf.mxu0
    %v4772 = vadd.f32 %v4723, %v4771
    %v4773 = vpop.f32.mrf.mxu0
    %v4774 = vadd.f32 %v4725, %v4773
    %4775 = vmatmul.bf16.gmra.mxu0 %v3237
    %v4776 = vpop.f32.mrf.mxu0
    %v4777 = vadd.f32 %v4728, %v4776
    %v4778 = vpop.f32.mrf.mxu0
    %v4779 = vadd.f32 %v4730, %v4778
    %4780 = vmatmul.bf16.gmra.mxu0 %v3277
    %v4781 = vpop.f32.mrf.mxu0
    %v4782 = vadd.f32 %v4733, %v4781
    %v4783 = vpop.f32.mrf.mxu0
    %v4784 = vadd.f32 %v4735, %v4783
    %4785 = vmatmul.bf16.gmra.mxu0 %v3317
    %v4786 = vpop.f32.mrf.mxu0
    %v4787 = vadd.f32 %v4738, %v4786
    %v4788 = vpop.f32.mrf.mxu0
    %v4789 = vadd.f32 %v4740, %v4788
    %4790 = vmatmul.bf16.gmra.mxu0 %v3357
    %v4791 = vpop.f32.mrf.mxu0
    %v4792 = vadd.f32 %v4743, %v4791
    %v4793 = vpop.f32.mrf.mxu0
    %v4794 = vadd.f32 %v4745, %v4793
    %4795 = vmatmul.bf16.gmra.mxu0 %v3397
    %v4796 = vpop.f32.mrf.mxu0
    %v4797 = vadd.f32 %v4748, %v4796
    %v4798 = vpop.f32.mrf.mxu0
    %v4799 = vadd.f32 %v4750, %v4798
    %4800 = vmatmul.bf16.gmra.mxu0 %v3437
    %v4801 = vpop.f32.mrf.mxu0
    %v4802 = vadd.f32 %v4753, %v4801
    %v4803 = vpop.f32.mrf.mxu0
    %v4804 = vadd.f32 %v4755, %v4803
    %4805 = vdwg.mxu0
    %4806 = vmatpush.bf16.msra.mxu0 %v1712
    %4807 = vmatpush.bf16.msra.mxu0 %v1711
    %4808 = vmatpush.bf16.msra.mxu0 %v1710
    %4809 = vmatpush.bf16.msra.mxu0 %v1709
    %4810 = vmatpush.bf16.msra.mxu0 %v1708
    %4811 = vmatpush.bf16.msra.mxu0 %v1707
    %4812 = vmatpush.bf16.msra.mxu0 %v1706
    %4813 = vmatpush.bf16.msra.mxu0 %v1705
    %4814 = vmatmul.bf16.gmra.mxu0 %v3158
    %v4815 = vpop.f32.mrf.mxu0
    %v4816 = vadd.f32 %v4767, %v4815
    %v4817 = vpop.f32.mrf.mxu0
    %v4818 = vadd.f32 %v4769, %v4817
    %4819 = vmatmul.bf16.gmra.mxu0 %v3198
    %v4820 = vpop.f32.mrf.mxu0
    %v4821 = vadd.f32 %v4772, %v4820
    %v4822 = vpop.f32.mrf.mxu0
    %v4823 = vadd.f32 %v4774, %v4822
    %4824 = vmatmul.bf16.gmra.mxu0 %v3238
    %v4825 = vpop.f32.mrf.mxu0
    %v4826 = vadd.f32 %v4777, %v4825
    %v4827 = vpop.f32.mrf.mxu0
    %v4828 = vadd.f32 %v4779, %v4827
    %4829 = vmatmul.bf16.gmra.mxu0 %v3278
    %v4830 = vpop.f32.mrf.mxu0
    %v4831 = vadd.f32 %v4782, %v4830
    %v4832 = vpop.f32.mrf.mxu0
    %v4833 = vadd.f32 %v4784, %v4832
    %4834 = vmatmul.bf16.gmra.mxu0 %v3318
    %v4835 = vpop.f32.mrf.mxu0
    %v4836 = vadd.f32 %v4787, %v4835
    %v4837 = vpop.f32.mrf.mxu0
    %v4838 = vadd.f32 %v4789, %v4837
    %4839 = vmatmul.bf16.gmra.mxu0 %v3358
    %v4840 = vpop.f32.mrf.mxu0
    %v4841 = vadd.f32 %v4792, %v4840
    %v4842 = vpop.f32.mrf.mxu0
    %v4843 = vadd.f32 %v4794, %v4842
    %4844 = vmatmul.bf16.gmra.mxu0 %v3398
    %v4845 = vpop.f32.mrf.mxu0
    %v4846 = vadd.f32 %v4797, %v4845
    %v4847 = vpop.f32.mrf.mxu0
    %v4848 = vadd.f32 %v4799, %v4847
    %4849 = vmatmul.bf16.gmra.mxu0 %v3438
    %v4850 = vpop.f32.mrf.mxu0
    %v4851 = vadd.f32 %v4802, %v4850
    %v4852 = vpop.f32.mrf.mxu0
    %v4853 = vadd.f32 %v4804, %v4852
    %4854 = vdwg.mxu0
    %4855 = vmatpush.bf16.msra.mxu0 %v1720
    %4856 = vmatpush.bf16.msra.mxu0 %v1719
    %4857 = vmatpush.bf16.msra.mxu0 %v1718
    %4858 = vmatpush.bf16.msra.mxu0 %v1717
    %4859 = vmatpush.bf16.msra.mxu0 %v1716
    %4860 = vmatpush.bf16.msra.mxu0 %v1715
    %4861 = vmatpush.bf16.msra.mxu0 %v1714
    %4862 = vmatpush.bf16.msra.mxu0 %v1713
    %4863 = vmatmul.bf16.gmra.mxu0 %v3159
    %v4864 = vpop.f32.mrf.mxu0
    %v4865 = vadd.f32 %v4816, %v4864
    %v4866 = vpop.f32.mrf.mxu0
    %v4867 = vadd.f32 %v4818, %v4866
    %4868 = vmatmul.bf16.gmra.mxu0 %v3199
    %v4869 = vpop.f32.mrf.mxu0
    %v4870 = vadd.f32 %v4821, %v4869
    %v4871 = vpop.f32.mrf.mxu0
    %v4872 = vadd.f32 %v4823, %v4871
    %4873 = vmatmul.bf16.gmra.mxu0 %v3239
    %v4874 = vpop.f32.mrf.mxu0
    %v4875 = vadd.f32 %v4826, %v4874
    %v4876 = vpop.f32.mrf.mxu0
    %v4877 = vadd.f32 %v4828, %v4876
    %4878 = vmatmul.bf16.gmra.mxu0 %v3279
    %v4879 = vpop.f32.mrf.mxu0
    %v4880 = vadd.f32 %v4831, %v4879
    %v4881 = vpop.f32.mrf.mxu0
    %v4882 = vadd.f32 %v4833, %v4881
    %4883 = vmatmul.bf16.gmra.mxu0 %v3319
    %v4884 = vpop.f32.mrf.mxu0
    %v4885 = vadd.f32 %v4836, %v4884
    %v4886 = vpop.f32.mrf.mxu0
    %v4887 = vadd.f32 %v4838, %v4886
    %4888 = vmatmul.bf16.gmra.mxu0 %v3359
    %v4889 = vpop.f32.mrf.mxu0
    %v4890 = vadd.f32 %v4841, %v4889
    %v4891 = vpop.f32.mrf.mxu0
    %v4892 = vadd.f32 %v4843, %v4891
    %4893 = vmatmul.bf16.gmra.mxu0 %v3399
    %v4894 = vpop.f32.mrf.mxu0
    %v4895 = vadd.f32 %v4846, %v4894
    %v4896 = vpop.f32.mrf.mxu0
    %v4897 = vadd.f32 %v4848, %v4896
    %4898 = vmatmul.bf16.gmra.mxu0 %v3439
    %v4899 = vpop.f32.mrf.mxu0
    %v4900 = vadd.f32 %v4851, %v4899
    %v4901 = vpop.f32.mrf.mxu0
    %v4902 = vadd.f32 %v4853, %v4901
    %4903 = vdwg.mxu0
    %4904 = vmatpush.bf16.msra.mxu0 %v1728
    %4905 = vmatpush.bf16.msra.mxu0 %v1727
    %4906 = vmatpush.bf16.msra.mxu0 %v1726
    %4907 = vmatpush.bf16.msra.mxu0 %v1725
    %4908 = vmatpush.bf16.msra.mxu0 %v1724
    %4909 = vmatpush.bf16.msra.mxu0 %v1723
    %4910 = vmatpush.bf16.msra.mxu0 %v1722
    %4911 = vmatpush.bf16.msra.mxu0 %v1721
    %4912 = vmatmul.bf16.gmra.mxu0 %v3160
    %v4913 = vpop.f32.mrf.mxu0
    %v4914 = vadd.f32 %v4865, %v4913
    %v4915 = vpop.f32.mrf.mxu0
    %v4916 = vadd.f32 %v4867, %v4915
    %4917 = vmatmul.bf16.gmra.mxu0 %v3200
    %v4918 = vpop.f32.mrf.mxu0
    %v4919 = vadd.f32 %v4870, %v4918
    %v4920 = vpop.f32.mrf.mxu0
    %v4921 = vadd.f32 %v4872, %v4920
    %4922 = vmatmul.bf16.gmra.mxu0 %v3240
    %v4923 = vpop.f32.mrf.mxu0
    %v4924 = vadd.f32 %v4875, %v4923
    %v4925 = vpop.f32.mrf.mxu0
    %v4926 = vadd.f32 %v4877, %v4925
    %4927 = vmatmul.bf16.gmra.mxu0 %v3280
    %v4928 = vpop.f32.mrf.mxu0
    %v4929 = vadd.f32 %v4880, %v4928
    %v4930 = vpop.f32.mrf.mxu0
    %v4931 = vadd.f32 %v4882, %v4930
    %4932 = vmatmul.bf16.gmra.mxu0 %v3320
    %v4933 = vpop.f32.mrf.mxu0
    %v4934 = vadd.f32 %v4885, %v4933
    %v4935 = vpop.f32.mrf.mxu0
    %v4936 = vadd.f32 %v4887, %v4935
    %4937 = vmatmul.bf16.gmra.mxu0 %v3360
    %v4938 = vpop.f32.mrf.mxu0
    %v4939 = vadd.f32 %v4890, %v4938
    %v4940 = vpop.f32.mrf.mxu0
    %v4941 = vadd.f32 %v4892, %v4940
    %4942 = vmatmul.bf16.gmra.mxu0 %v3400
    %v4943 = vpop.f32.mrf.mxu0
    %v4944 = vadd.f32 %v4895, %v4943
    %v4945 = vpop.f32.mrf.mxu0
    %v4946 = vadd.f32 %v4897, %v4945
    %4947 = vmatmul.bf16.gmra.mxu0 %v3440
    %v4948 = vpop.f32.mrf.mxu0
    %v4949 = vadd.f32 %v4900, %v4948
    %v4950 = vpop.f32.mrf.mxu0
    %v4951 = vadd.f32 %v4902, %v4950
    %4952 = vdwg.mxu0
    %4953 = vmatpush.bf16.msra.mxu0 %v1736
    %4954 = vmatpush.bf16.msra.mxu0 %v1735
    %4955 = vmatpush.bf16.msra.mxu0 %v1734
    %4956 = vmatpush.bf16.msra.mxu0 %v1733
    %4957 = vmatpush.bf16.msra.mxu0 %v1732
    %4958 = vmatpush.bf16.msra.mxu0 %v1731
    %4959 = vmatpush.bf16.msra.mxu0 %v1730
    %4960 = vmatpush.bf16.msra.mxu0 %v1729
    %4961 = vmatmul.bf16.gmra.mxu0 %v3161
    %v4962 = vpop.f32.mrf.mxu0
    %v4963 = vadd.f32 %v4914, %v4962
    %v4964 = vpop.f32.mrf.mxu0
    %v4965 = vadd.f32 %v4916, %v4964
    %4966 = vmatmul.bf16.gmra.mxu0 %v3201
    %v4967 = vpop.f32.mrf.mxu0
    %v4968 = vadd.f32 %v4919, %v4967
    %v4969 = vpop.f32.mrf.mxu0
    %v4970 = vadd.f32 %v4921, %v4969
    %4971 = vmatmul.bf16.gmra.mxu0 %v3241
    %v4972 = vpop.f32.mrf.mxu0
    %v4973 = vadd.f32 %v4924, %v4972
    %v4974 = vpop.f32.mrf.mxu0
    %v4975 = vadd.f32 %v4926, %v4974
    %4976 = vmatmul.bf16.gmra.mxu0 %v3281
    %v4977 = vpop.f32.mrf.mxu0
    %v4978 = vadd.f32 %v4929, %v4977
    %v4979 = vpop.f32.mrf.mxu0
    %v4980 = vadd.f32 %v4931, %v4979
    %4981 = vmatmul.bf16.gmra.mxu0 %v3321
    %v4982 = vpop.f32.mrf.mxu0
    %v4983 = vadd.f32 %v4934, %v4982
    %v4984 = vpop.f32.mrf.mxu0
    %v4985 = vadd.f32 %v4936, %v4984
    %4986 = vmatmul.bf16.gmra.mxu0 %v3361
    %v4987 = vpop.f32.mrf.mxu0
    %v4988 = vadd.f32 %v4939, %v4987
    %v4989 = vpop.f32.mrf.mxu0
    %v4990 = vadd.f32 %v4941, %v4989
    %4991 = vmatmul.bf16.gmra.mxu0 %v3401
    %v4992 = vpop.f32.mrf.mxu0
    %v4993 = vadd.f32 %v4944, %v4992
    %v4994 = vpop.f32.mrf.mxu0
    %v4995 = vadd.f32 %v4946, %v4994
    %4996 = vmatmul.bf16.gmra.mxu0 %v3441
    %v4997 = vpop.f32.mrf.mxu0
    %v4998 = vadd.f32 %v4949, %v4997
    %v4999 = vpop.f32.mrf.mxu0
    %v5000 = vadd.f32 %v4951, %v4999
    %5001 = vdwg.mxu0
    %5002 = vmatpush.bf16.msra.mxu0 %v1744
    %5003 = vmatpush.bf16.msra.mxu0 %v1743
    %5004 = vmatpush.bf16.msra.mxu0 %v1742
    %5005 = vmatpush.bf16.msra.mxu0 %v1741
    %5006 = vmatpush.bf16.msra.mxu0 %v1740
    %5007 = vmatpush.bf16.msra.mxu0 %v1739
    %5008 = vmatpush.bf16.msra.mxu0 %v1738
    %5009 = vmatpush.bf16.msra.mxu0 %v1737
    %5010 = vmatmul.bf16.gmra.mxu0 %v3162
    %v5011 = vpop.f32.mrf.mxu0
    %v5012 = vadd.f32 %v4963, %v5011
    %v5013 = vpop.f32.mrf.mxu0
    %v5014 = vadd.f32 %v4965, %v5013
    %5015 = vmatmul.bf16.gmra.mxu0 %v3202
    %v5016 = vpop.f32.mrf.mxu0
    %v5017 = vadd.f32 %v4968, %v5016
    %v5018 = vpop.f32.mrf.mxu0
    %v5019 = vadd.f32 %v4970, %v5018
    %5020 = vmatmul.bf16.gmra.mxu0 %v3242
    %v5021 = vpop.f32.mrf.mxu0
    %v5022 = vadd.f32 %v4973, %v5021
    %v5023 = vpop.f32.mrf.mxu0
    %v5024 = vadd.f32 %v4975, %v5023
    %5025 = vmatmul.bf16.gmra.mxu0 %v3282
    %v5026 = vpop.f32.mrf.mxu0
    %v5027 = vadd.f32 %v4978, %v5026
    %v5028 = vpop.f32.mrf.mxu0
    %v5029 = vadd.f32 %v4980, %v5028
    %5030 = vmatmul.bf16.gmra.mxu0 %v3322
    %v5031 = vpop.f32.mrf.mxu0
    %v5032 = vadd.f32 %v4983, %v5031
    %v5033 = vpop.f32.mrf.mxu0
    %v5034 = vadd.f32 %v4985, %v5033
    %5035 = vmatmul.bf16.gmra.mxu0 %v3362
    %v5036 = vpop.f32.mrf.mxu0
    %v5037 = vadd.f32 %v4988, %v5036
    %v5038 = vpop.f32.mrf.mxu0
    %v5039 = vadd.f32 %v4990, %v5038
    %5040 = vmatmul.bf16.gmra.mxu0 %v3402
    %v5041 = vpop.f32.mrf.mxu0
    %v5042 = vadd.f32 %v4993, %v5041
    %v5043 = vpop.f32.mrf.mxu0
    %v5044 = vadd.f32 %v4995, %v5043
    %5045 = vmatmul.bf16.gmra.mxu0 %v3442
    %v5046 = vpop.f32.mrf.mxu0
    %v5047 = vadd.f32 %v4998, %v5046
    %v5048 = vpop.f32.mrf.mxu0
    %v5049 = vadd.f32 %v5000, %v5048
    %5050 = vdwg.mxu0
    %5051 = vmatpush.bf16.msra.mxu0 %v1752
    %5052 = vmatpush.bf16.msra.mxu0 %v1751
    %5053 = vmatpush.bf16.msra.mxu0 %v1750
    %5054 = vmatpush.bf16.msra.mxu0 %v1749
    %5055 = vmatpush.bf16.msra.mxu0 %v1748
    %5056 = vmatpush.bf16.msra.mxu0 %v1747
    %5057 = vmatpush.bf16.msra.mxu0 %v1746
    %5058 = vmatpush.bf16.msra.mxu0 %v1745
    %5059 = vmatmul.bf16.gmra.mxu0 %v3163
    %v5060 = vpop.f32.mrf.mxu0
    %v5061 = vadd.f32 %v5012, %v5060
    %v5062 = vpop.f32.mrf.mxu0
    %v5063 = vadd.f32 %v5014, %v5062
    %5064 = vmatmul.bf16.gmra.mxu0 %v3203
    %v5065 = vpop.f32.mrf.mxu0
    %v5066 = vadd.f32 %v5017, %v5065
    %v5067 = vpop.f32.mrf.mxu0
    %v5068 = vadd.f32 %v5019, %v5067
    %5069 = vmatmul.bf16.gmra.mxu0 %v3243
    %v5070 = vpop.f32.mrf.mxu0
    %v5071 = vadd.f32 %v5022, %v5070
    %v5072 = vpop.f32.mrf.mxu0
    %v5073 = vadd.f32 %v5024, %v5072
    %5074 = vmatmul.bf16.gmra.mxu0 %v3283
    %v5075 = vpop.f32.mrf.mxu0
    %v5076 = vadd.f32 %v5027, %v5075
    %v5077 = vpop.f32.mrf.mxu0
    %v5078 = vadd.f32 %v5029, %v5077
    %5079 = vmatmul.bf16.gmra.mxu0 %v3323
    %v5080 = vpop.f32.mrf.mxu0
    %v5081 = vadd.f32 %v5032, %v5080
    %v5082 = vpop.f32.mrf.mxu0
    %v5083 = vadd.f32 %v5034, %v5082
    %5084 = vmatmul.bf16.gmra.mxu0 %v3363
    %v5085 = vpop.f32.mrf.mxu0
    %v5086 = vadd.f32 %v5037, %v5085
    %v5087 = vpop.f32.mrf.mxu0
    %v5088 = vadd.f32 %v5039, %v5087
    %5089 = vmatmul.bf16.gmra.mxu0 %v3403
    %v5090 = vpop.f32.mrf.mxu0
    %v5091 = vadd.f32 %v5042, %v5090
    %v5092 = vpop.f32.mrf.mxu0
    %v5093 = vadd.f32 %v5044, %v5092
    %5094 = vmatmul.bf16.gmra.mxu0 %v3443
    %v5095 = vpop.f32.mrf.mxu0
    %v5096 = vadd.f32 %v5047, %v5095
    %v5097 = vpop.f32.mrf.mxu0
    %v5098 = vadd.f32 %v5049, %v5097
    %5099 = vdwg.mxu0
    %5100 = vmatpush.bf16.msra.mxu0 %v1760
    %5101 = vmatpush.bf16.msra.mxu0 %v1759
    %5102 = vmatpush.bf16.msra.mxu0 %v1758
    %5103 = vmatpush.bf16.msra.mxu0 %v1757
    %5104 = vmatpush.bf16.msra.mxu0 %v1756
    %5105 = vmatpush.bf16.msra.mxu0 %v1755
    %5106 = vmatpush.bf16.msra.mxu0 %v1754
    %5107 = vmatpush.bf16.msra.mxu0 %v1753
    %5108 = vmatmul.bf16.gmra.mxu0 %v3164
    %v5109 = vpop.f32.mrf.mxu0
    %v5110 = vadd.f32 %v5061, %v5109
    %v5111 = vpop.f32.mrf.mxu0
    %v5112 = vadd.f32 %v5063, %v5111
    %5113 = vmatmul.bf16.gmra.mxu0 %v3204
    %v5114 = vpop.f32.mrf.mxu0
    %v5115 = vadd.f32 %v5066, %v5114
    %v5116 = vpop.f32.mrf.mxu0
    %v5117 = vadd.f32 %v5068, %v5116
    %5118 = vmatmul.bf16.gmra.mxu0 %v3244
    %v5119 = vpop.f32.mrf.mxu0
    %v5120 = vadd.f32 %v5071, %v5119
    %v5121 = vpop.f32.mrf.mxu0
    %v5122 = vadd.f32 %v5073, %v5121
    %5123 = vmatmul.bf16.gmra.mxu0 %v3284
    %v5124 = vpop.f32.mrf.mxu0
    %v5125 = vadd.f32 %v5076, %v5124
    %v5126 = vpop.f32.mrf.mxu0
    %v5127 = vadd.f32 %v5078, %v5126
    %5128 = vmatmul.bf16.gmra.mxu0 %v3324
    %v5129 = vpop.f32.mrf.mxu0
    %v5130 = vadd.f32 %v5081, %v5129
    %v5131 = vpop.f32.mrf.mxu0
    %v5132 = vadd.f32 %v5083, %v5131
    %5133 = vmatmul.bf16.gmra.mxu0 %v3364
    %v5134 = vpop.f32.mrf.mxu0
    %v5135 = vadd.f32 %v5086, %v5134
    %v5136 = vpop.f32.mrf.mxu0
    %v5137 = vadd.f32 %v5088, %v5136
    %5138 = vmatmul.bf16.gmra.mxu0 %v3404
    %v5139 = vpop.f32.mrf.mxu0
    %v5140 = vadd.f32 %v5091, %v5139
    %v5141 = vpop.f32.mrf.mxu0
    %v5142 = vadd.f32 %v5093, %v5141
    %5143 = vmatmul.bf16.gmra.mxu0 %v3444
    %v5144 = vpop.f32.mrf.mxu0
    %v5145 = vadd.f32 %v5096, %v5144
    %v5146 = vpop.f32.mrf.mxu0
    %v5147 = vadd.f32 %v5098, %v5146
    %5148 = vdwg.mxu0
    %5149 = vmatpush.bf16.msra.mxu0 %v1768
    %5150 = vmatpush.bf16.msra.mxu0 %v1767
    %5151 = vmatpush.bf16.msra.mxu0 %v1766
    %5152 = vmatpush.bf16.msra.mxu0 %v1765
    %5153 = vmatpush.bf16.msra.mxu0 %v1764
    %5154 = vmatpush.bf16.msra.mxu0 %v1763
    %5155 = vmatpush.bf16.msra.mxu0 %v1762
    %5156 = vmatpush.bf16.msra.mxu0 %v1761
    %5157 = vmatmul.bf16.gmra.mxu0 %v3165
    %v5158 = vpop.f32.mrf.mxu0
    %v5159 = vadd.f32 %v5110, %v5158
    %v5160 = vpop.f32.mrf.mxu0
    %v5161 = vadd.f32 %v5112, %v5160
    %5162 = vmatmul.bf16.gmra.mxu0 %v3205
    %v5163 = vpop.f32.mrf.mxu0
    %v5164 = vadd.f32 %v5115, %v5163
    %v5165 = vpop.f32.mrf.mxu0
    %v5166 = vadd.f32 %v5117, %v5165
    %5167 = vmatmul.bf16.gmra.mxu0 %v3245
    %v5168 = vpop.f32.mrf.mxu0
    %v5169 = vadd.f32 %v5120, %v5168
    %v5170 = vpop.f32.mrf.mxu0
    %v5171 = vadd.f32 %v5122, %v5170
    %5172 = vmatmul.bf16.gmra.mxu0 %v3285
    %v5173 = vpop.f32.mrf.mxu0
    %v5174 = vadd.f32 %v5125, %v5173
    %v5175 = vpop.f32.mrf.mxu0
    %v5176 = vadd.f32 %v5127, %v5175
    %5177 = vmatmul.bf16.gmra.mxu0 %v3325
    %v5178 = vpop.f32.mrf.mxu0
    %v5179 = vadd.f32 %v5130, %v5178
    %v5180 = vpop.f32.mrf.mxu0
    %v5181 = vadd.f32 %v5132, %v5180
    %5182 = vmatmul.bf16.gmra.mxu0 %v3365
    %v5183 = vpop.f32.mrf.mxu0
    %v5184 = vadd.f32 %v5135, %v5183
    %v5185 = vpop.f32.mrf.mxu0
    %v5186 = vadd.f32 %v5137, %v5185
    %5187 = vmatmul.bf16.gmra.mxu0 %v3405
    %v5188 = vpop.f32.mrf.mxu0
    %v5189 = vadd.f32 %v5140, %v5188
    %v5190 = vpop.f32.mrf.mxu0
    %v5191 = vadd.f32 %v5142, %v5190
    %5192 = vmatmul.bf16.gmra.mxu0 %v3445
    %v5193 = vpop.f32.mrf.mxu0
    %v5194 = vadd.f32 %v5145, %v5193
    %v5195 = vpop.f32.mrf.mxu0
    %v5196 = vadd.f32 %v5147, %v5195
    %5197 = vdwg.mxu0
    %5198 = vmatpush.bf16.msra.mxu0 %v1776
    %5199 = vmatpush.bf16.msra.mxu0 %v1775
    %5200 = vmatpush.bf16.msra.mxu0 %v1774
    %5201 = vmatpush.bf16.msra.mxu0 %v1773
    %5202 = vmatpush.bf16.msra.mxu0 %v1772
    %5203 = vmatpush.bf16.msra.mxu0 %v1771
    %5204 = vmatpush.bf16.msra.mxu0 %v1770
    %5205 = vmatpush.bf16.msra.mxu0 %v1769
    %5206 = vmatmul.bf16.gmra.mxu0 %v3166
    %v5207 = vpop.f32.mrf.mxu0
    %v5208 = vadd.f32 %v5159, %v5207
    %v5209 = vpop.f32.mrf.mxu0
    %v5210 = vadd.f32 %v5161, %v5209
    %5211 = vmatmul.bf16.gmra.mxu0 %v3206
    %v5212 = vpop.f32.mrf.mxu0
    %v5213 = vadd.f32 %v5164, %v5212
    %v5214 = vpop.f32.mrf.mxu0
    %v5215 = vadd.f32 %v5166, %v5214
    %5216 = vmatmul.bf16.gmra.mxu0 %v3246
    %v5217 = vpop.f32.mrf.mxu0
    %v5218 = vadd.f32 %v5169, %v5217
    %v5219 = vpop.f32.mrf.mxu0
    %v5220 = vadd.f32 %v5171, %v5219
    %5221 = vmatmul.bf16.gmra.mxu0 %v3286
    %v5222 = vpop.f32.mrf.mxu0
    %v5223 = vadd.f32 %v5174, %v5222
    %v5224 = vpop.f32.mrf.mxu0
    %v5225 = vadd.f32 %v5176, %v5224
    %5226 = vmatmul.bf16.gmra.mxu0 %v3326
    %v5227 = vpop.f32.mrf.mxu0
    %v5228 = vadd.f32 %v5179, %v5227
    %v5229 = vpop.f32.mrf.mxu0
    %v5230 = vadd.f32 %v5181, %v5229
    %5231 = vmatmul.bf16.gmra.mxu0 %v3366
    %v5232 = vpop.f32.mrf.mxu0
    %v5233 = vadd.f32 %v5184, %v5232
    %v5234 = vpop.f32.mrf.mxu0
    %v5235 = vadd.f32 %v5186, %v5234
    %5236 = vmatmul.bf16.gmra.mxu0 %v3406
    %v5237 = vpop.f32.mrf.mxu0
    %v5238 = vadd.f32 %v5189, %v5237
    %v5239 = vpop.f32.mrf.mxu0
    %v5240 = vadd.f32 %v5191, %v5239
    %5241 = vmatmul.bf16.gmra.mxu0 %v3446
    %v5242 = vpop.f32.mrf.mxu0
    %v5243 = vadd.f32 %v5194, %v5242
    %v5244 = vpop.f32.mrf.mxu0
    %v5245 = vadd.f32 %v5196, %v5244
    %5246 = vdwg.mxu0
    %5247 = vmatpush.bf16.msra.mxu0 %v1784
    %5248 = vmatpush.bf16.msra.mxu0 %v1783
    %5249 = vmatpush.bf16.msra.mxu0 %v1782
    %5250 = vmatpush.bf16.msra.mxu0 %v1781
    %5251 = vmatpush.bf16.msra.mxu0 %v1780
    %5252 = vmatpush.bf16.msra.mxu0 %v1779
    %5253 = vmatpush.bf16.msra.mxu0 %v1778
    %5254 = vmatpush.bf16.msra.mxu0 %v1777
    %5255 = vmatmul.bf16.gmra.mxu0 %v3167
    %v5256 = vpop.f32.mrf.mxu0
    %v5257 = vadd.f32 %v5208, %v5256
    %v5258 = vpop.f32.mrf.mxu0
    %v5259 = vadd.f32 %v5210, %v5258
    %5260 = vmatmul.bf16.gmra.mxu0 %v3207
    %v5261 = vpop.f32.mrf.mxu0
    %v5262 = vadd.f32 %v5213, %v5261
    %v5263 = vpop.f32.mrf.mxu0
    %v5264 = vadd.f32 %v5215, %v5263
    %5265 = vmatmul.bf16.gmra.mxu0 %v3247
    %v5266 = vpop.f32.mrf.mxu0
    %v5267 = vadd.f32 %v5218, %v5266
    %v5268 = vpop.f32.mrf.mxu0
    %v5269 = vadd.f32 %v5220, %v5268
    %5270 = vmatmul.bf16.gmra.mxu0 %v3287
    %v5271 = vpop.f32.mrf.mxu0
    %v5272 = vadd.f32 %v5223, %v5271
    %v5273 = vpop.f32.mrf.mxu0
    %v5274 = vadd.f32 %v5225, %v5273
    %5275 = vmatmul.bf16.gmra.mxu0 %v3327
    %v5276 = vpop.f32.mrf.mxu0
    %v5277 = vadd.f32 %v5228, %v5276
    %v5278 = vpop.f32.mrf.mxu0
    %v5279 = vadd.f32 %v5230, %v5278
    %5280 = vmatmul.bf16.gmra.mxu0 %v3367
    %v5281 = vpop.f32.mrf.mxu0
    %v5282 = vadd.f32 %v5233, %v5281
    %v5283 = vpop.f32.mrf.mxu0
    %v5284 = vadd.f32 %v5235, %v5283
    %5285 = vmatmul.bf16.gmra.mxu0 %v3407
    %v5286 = vpop.f32.mrf.mxu0
    %v5287 = vadd.f32 %v5238, %v5286
    %v5288 = vpop.f32.mrf.mxu0
    %v5289 = vadd.f32 %v5240, %v5288
    %5290 = vmatmul.bf16.gmra.mxu0 %v3447
    %v5291 = vpop.f32.mrf.mxu0
    %v5292 = vadd.f32 %v5243, %v5291
    %v5293 = vpop.f32.mrf.mxu0
    %v5294 = vadd.f32 %v5245, %v5293
    %5295 = vdwg.mxu0
    %5296 = vmatpush.bf16.msra.mxu0 %v1792
    %5297 = vmatpush.bf16.msra.mxu0 %v1791
    %5298 = vmatpush.bf16.msra.mxu0 %v1790
    %5299 = vmatpush.bf16.msra.mxu0 %v1789
    %5300 = vmatpush.bf16.msra.mxu0 %v1788
    %5301 = vmatpush.bf16.msra.mxu0 %v1787
    %5302 = vmatpush.bf16.msra.mxu0 %v1786
    %5303 = vmatpush.bf16.msra.mxu0 %v1785
    %5304 = vmatmul.bf16.gmra.mxu0 %v3168
    %v5305 = vpop.f32.mrf.mxu0
    %v5306 = vadd.f32 %v5257, %v5305
    %v5307 = vpop.f32.mrf.mxu0
    %v5308 = vadd.f32 %v5259, %v5307
    %5309 = vmatmul.bf16.gmra.mxu0 %v3208
    %v5310 = vpop.f32.mrf.mxu0
    %v5311 = vadd.f32 %v5262, %v5310
    %v5312 = vpop.f32.mrf.mxu0
    %v5313 = vadd.f32 %v5264, %v5312
    %5314 = vmatmul.bf16.gmra.mxu0 %v3248
    %v5315 = vpop.f32.mrf.mxu0
    %v5316 = vadd.f32 %v5267, %v5315
    %v5317 = vpop.f32.mrf.mxu0
    %v5318 = vadd.f32 %v5269, %v5317
    %5319 = vmatmul.bf16.gmra.mxu0 %v3288
    %v5320 = vpop.f32.mrf.mxu0
    %v5321 = vadd.f32 %v5272, %v5320
    %v5322 = vpop.f32.mrf.mxu0
    %v5323 = vadd.f32 %v5274, %v5322
    %5324 = vmatmul.bf16.gmra.mxu0 %v3328
    %v5325 = vpop.f32.mrf.mxu0
    %v5326 = vadd.f32 %v5277, %v5325
    %v5327 = vpop.f32.mrf.mxu0
    %v5328 = vadd.f32 %v5279, %v5327
    %5329 = vmatmul.bf16.gmra.mxu0 %v3368
    %v5330 = vpop.f32.mrf.mxu0
    %v5331 = vadd.f32 %v5282, %v5330
    %v5332 = vpop.f32.mrf.mxu0
    %v5333 = vadd.f32 %v5284, %v5332
    %5334 = vmatmul.bf16.gmra.mxu0 %v3408
    %v5335 = vpop.f32.mrf.mxu0
    %v5336 = vadd.f32 %v5287, %v5335
    %v5337 = vpop.f32.mrf.mxu0
    %v5338 = vadd.f32 %v5289, %v5337
    %5339 = vmatmul.bf16.gmra.mxu0 %v3448
    %v5340 = vpop.f32.mrf.mxu0
    %v5341 = vadd.f32 %v5292, %v5340
    %v5342 = vpop.f32.mrf.mxu0
    %v5343 = vadd.f32 %v5294, %v5342
    %5344 = vdwg.mxu0
    %5345 = vmatpush.bf16.msra.mxu0 %v1800
    %5346 = vmatpush.bf16.msra.mxu0 %v1799
    %5347 = vmatpush.bf16.msra.mxu0 %v1798
    %5348 = vmatpush.bf16.msra.mxu0 %v1797
    %5349 = vmatpush.bf16.msra.mxu0 %v1796
    %5350 = vmatpush.bf16.msra.mxu0 %v1795
    %5351 = vmatpush.bf16.msra.mxu0 %v1794
    %5352 = vmatpush.bf16.msra.mxu0 %v1793
    %5353 = vmatmul.bf16.gmra.mxu0 %v3169
    %v5354 = vpop.f32.mrf.mxu0
    %v5355 = vadd.f32 %v5306, %v5354
    %v5356 = vpop.f32.mrf.mxu0
    %v5357 = vadd.f32 %v5308, %v5356
    %5358 = vmatmul.bf16.gmra.mxu0 %v3209
    %v5359 = vpop.f32.mrf.mxu0
    %v5360 = vadd.f32 %v5311, %v5359
    %v5361 = vpop.f32.mrf.mxu0
    %v5362 = vadd.f32 %v5313, %v5361
    %5363 = vmatmul.bf16.gmra.mxu0 %v3249
    %v5364 = vpop.f32.mrf.mxu0
    %v5365 = vadd.f32 %v5316, %v5364
    %v5366 = vpop.f32.mrf.mxu0
    %v5367 = vadd.f32 %v5318, %v5366
    %5368 = vmatmul.bf16.gmra.mxu0 %v3289
    %v5369 = vpop.f32.mrf.mxu0
    %v5370 = vadd.f32 %v5321, %v5369
    %v5371 = vpop.f32.mrf.mxu0
    %v5372 = vadd.f32 %v5323, %v5371
    %5373 = vmatmul.bf16.gmra.mxu0 %v3329
    %v5374 = vpop.f32.mrf.mxu0
    %v5375 = vadd.f32 %v5326, %v5374
    %v5376 = vpop.f32.mrf.mxu0
    %v5377 = vadd.f32 %v5328, %v5376
    %5378 = vmatmul.bf16.gmra.mxu0 %v3369
    %v5379 = vpop.f32.mrf.mxu0
    %v5380 = vadd.f32 %v5331, %v5379
    %v5381 = vpop.f32.mrf.mxu0
    %v5382 = vadd.f32 %v5333, %v5381
    %5383 = vmatmul.bf16.gmra.mxu0 %v3409
    %v5384 = vpop.f32.mrf.mxu0
    %v5385 = vadd.f32 %v5336, %v5384
    %v5386 = vpop.f32.mrf.mxu0
    %v5387 = vadd.f32 %v5338, %v5386
    %5388 = vmatmul.bf16.gmra.mxu0 %v3449
    %v5389 = vpop.f32.mrf.mxu0
    %v5390 = vadd.f32 %v5341, %v5389
    %v5391 = vpop.f32.mrf.mxu0
    %v5392 = vadd.f32 %v5343, %v5391
    %5393 = vdwg.mxu0
    %5394 = vmatpush.bf16.msra.mxu0 %v1808
    %5395 = vmatpush.bf16.msra.mxu0 %v1807
    %5396 = vmatpush.bf16.msra.mxu0 %v1806
    %5397 = vmatpush.bf16.msra.mxu0 %v1805
    %5398 = vmatpush.bf16.msra.mxu0 %v1804
    %5399 = vmatpush.bf16.msra.mxu0 %v1803
    %5400 = vmatpush.bf16.msra.mxu0 %v1802
    %5401 = vmatpush.bf16.msra.mxu0 %v1801
    %5402 = vmatmul.bf16.gmra.mxu0 %v3170
    %v5403 = vpop.f32.mrf.mxu0
    %v5404 = vadd.f32 %v5355, %v5403
    %v5405 = vpop.f32.mrf.mxu0
    %v5406 = vadd.f32 %v5357, %v5405
    %5407 = vmatmul.bf16.gmra.mxu0 %v3210
    %v5408 = vpop.f32.mrf.mxu0
    %v5409 = vadd.f32 %v5360, %v5408
    %v5410 = vpop.f32.mrf.mxu0
    %v5411 = vadd.f32 %v5362, %v5410
    %5412 = vmatmul.bf16.gmra.mxu0 %v3250
    %v5413 = vpop.f32.mrf.mxu0
    %v5414 = vadd.f32 %v5365, %v5413
    %v5415 = vpop.f32.mrf.mxu0
    %v5416 = vadd.f32 %v5367, %v5415
    %5417 = vmatmul.bf16.gmra.mxu0 %v3290
    %v5418 = vpop.f32.mrf.mxu0
    %v5419 = vadd.f32 %v5370, %v5418
    %v5420 = vpop.f32.mrf.mxu0
    %v5421 = vadd.f32 %v5372, %v5420
    %5422 = vmatmul.bf16.gmra.mxu0 %v3330
    %v5423 = vpop.f32.mrf.mxu0
    %v5424 = vadd.f32 %v5375, %v5423
    %v5425 = vpop.f32.mrf.mxu0
    %v5426 = vadd.f32 %v5377, %v5425
    %5427 = vmatmul.bf16.gmra.mxu0 %v3370
    %v5428 = vpop.f32.mrf.mxu0
    %v5429 = vadd.f32 %v5380, %v5428
    %v5430 = vpop.f32.mrf.mxu0
    %v5431 = vadd.f32 %v5382, %v5430
    %5432 = vmatmul.bf16.gmra.mxu0 %v3410
    %v5433 = vpop.f32.mrf.mxu0
    %v5434 = vadd.f32 %v5385, %v5433
    %v5435 = vpop.f32.mrf.mxu0
    %v5436 = vadd.f32 %v5387, %v5435
    %5437 = vmatmul.bf16.gmra.mxu0 %v3450
    %v5438 = vpop.f32.mrf.mxu0
    %v5439 = vadd.f32 %v5390, %v5438
    %v5440 = vpop.f32.mrf.mxu0
    %v5441 = vadd.f32 %v5392, %v5440
    %5442 = vdwg.mxu0
    %5443 = vmatpush.bf16.msra.mxu0 %v1816
    %5444 = vmatpush.bf16.msra.mxu0 %v1815
    %5445 = vmatpush.bf16.msra.mxu0 %v1814
    %5446 = vmatpush.bf16.msra.mxu0 %v1813
    %5447 = vmatpush.bf16.msra.mxu0 %v1812
    %5448 = vmatpush.bf16.msra.mxu0 %v1811
    %5449 = vmatpush.bf16.msra.mxu0 %v1810
    %5450 = vmatpush.bf16.msra.mxu0 %v1809
    %5451 = vmatmul.bf16.gmra.mxu0 %v3171
    %v5452 = vpop.f32.mrf.mxu0
    %v5453 = vadd.f32 %v5404, %v5452
    %v5454 = vpop.f32.mrf.mxu0
    %v5455 = vadd.f32 %v5406, %v5454
    %5456 = vmatmul.bf16.gmra.mxu0 %v3211
    %v5457 = vpop.f32.mrf.mxu0
    %v5458 = vadd.f32 %v5409, %v5457
    %v5459 = vpop.f32.mrf.mxu0
    %v5460 = vadd.f32 %v5411, %v5459
    %5461 = vmatmul.bf16.gmra.mxu0 %v3251
    %v5462 = vpop.f32.mrf.mxu0
    %v5463 = vadd.f32 %v5414, %v5462
    %v5464 = vpop.f32.mrf.mxu0
    %v5465 = vadd.f32 %v5416, %v5464
    %5466 = vmatmul.bf16.gmra.mxu0 %v3291
    %v5467 = vpop.f32.mrf.mxu0
    %v5468 = vadd.f32 %v5419, %v5467
    %v5469 = vpop.f32.mrf.mxu0
    %v5470 = vadd.f32 %v5421, %v5469
    %5471 = vmatmul.bf16.gmra.mxu0 %v3331
    %v5472 = vpop.f32.mrf.mxu0
    %v5473 = vadd.f32 %v5424, %v5472
    %v5474 = vpop.f32.mrf.mxu0
    %v5475 = vadd.f32 %v5426, %v5474
    %5476 = vmatmul.bf16.gmra.mxu0 %v3371
    %v5477 = vpop.f32.mrf.mxu0
    %v5478 = vadd.f32 %v5429, %v5477
    %v5479 = vpop.f32.mrf.mxu0
    %v5480 = vadd.f32 %v5431, %v5479
    %5481 = vmatmul.bf16.gmra.mxu0 %v3411
    %v5482 = vpop.f32.mrf.mxu0
    %v5483 = vadd.f32 %v5434, %v5482
    %v5484 = vpop.f32.mrf.mxu0
    %v5485 = vadd.f32 %v5436, %v5484
    %5486 = vmatmul.bf16.gmra.mxu0 %v3451
    %v5487 = vpop.f32.mrf.mxu0
    %v5488 = vadd.f32 %v5439, %v5487
    %v5489 = vpop.f32.mrf.mxu0
    %v5490 = vadd.f32 %v5441, %v5489
    %5491 = vdwg.mxu0
    %5492 = vmatpush.bf16.msra.mxu0 %v1824
    %5493 = vmatpush.bf16.msra.mxu0 %v1823
    %5494 = vmatpush.bf16.msra.mxu0 %v1822
    %5495 = vmatpush.bf16.msra.mxu0 %v1821
    %5496 = vmatpush.bf16.msra.mxu0 %v1820
    %5497 = vmatpush.bf16.msra.mxu0 %v1819
    %5498 = vmatpush.bf16.msra.mxu0 %v1818
    %5499 = vmatpush.bf16.msra.mxu0 %v1817
    %5500 = vmatmul.bf16.gmra.mxu0 %v3172
    %v5501 = vpop.f32.mrf.mxu0
    %v5502 = vadd.f32 %v5453, %v5501
    %v5503 = vpop.f32.mrf.mxu0
    %v5504 = vadd.f32 %v5455, %v5503
    %5505 = vmatmul.bf16.gmra.mxu0 %v3212
    %v5506 = vpop.f32.mrf.mxu0
    %v5507 = vadd.f32 %v5458, %v5506
    %v5508 = vpop.f32.mrf.mxu0
    %v5509 = vadd.f32 %v5460, %v5508
    %5510 = vmatmul.bf16.gmra.mxu0 %v3252
    %v5511 = vpop.f32.mrf.mxu0
    %v5512 = vadd.f32 %v5463, %v5511
    %v5513 = vpop.f32.mrf.mxu0
    %v5514 = vadd.f32 %v5465, %v5513
    %5515 = vmatmul.bf16.gmra.mxu0 %v3292
    %v5516 = vpop.f32.mrf.mxu0
    %v5517 = vadd.f32 %v5468, %v5516
    %v5518 = vpop.f32.mrf.mxu0
    %v5519 = vadd.f32 %v5470, %v5518
    %5520 = vmatmul.bf16.gmra.mxu0 %v3332
    %v5521 = vpop.f32.mrf.mxu0
    %v5522 = vadd.f32 %v5473, %v5521
    %v5523 = vpop.f32.mrf.mxu0
    %v5524 = vadd.f32 %v5475, %v5523
    %5525 = vmatmul.bf16.gmra.mxu0 %v3372
    %v5526 = vpop.f32.mrf.mxu0
    %v5527 = vadd.f32 %v5478, %v5526
    %v5528 = vpop.f32.mrf.mxu0
    %v5529 = vadd.f32 %v5480, %v5528
    %5530 = vmatmul.bf16.gmra.mxu0 %v3412
    %v5531 = vpop.f32.mrf.mxu0
    %v5532 = vadd.f32 %v5483, %v5531
    %v5533 = vpop.f32.mrf.mxu0
    %v5534 = vadd.f32 %v5485, %v5533
    %5535 = vmatmul.bf16.gmra.mxu0 %v3452
    %v5536 = vpop.f32.mrf.mxu0
    %v5537 = vadd.f32 %v5488, %v5536
    %v5538 = vpop.f32.mrf.mxu0
    %v5539 = vadd.f32 %v5490, %v5538
    %5540 = vdwg.mxu0
    %5541 = vmatpush.bf16.msra.mxu0 %v1832
    %5542 = vmatpush.bf16.msra.mxu0 %v1831
    %5543 = vmatpush.bf16.msra.mxu0 %v1830
    %5544 = vmatpush.bf16.msra.mxu0 %v1829
    %5545 = vmatpush.bf16.msra.mxu0 %v1828
    %5546 = vmatpush.bf16.msra.mxu0 %v1827
    %5547 = vmatpush.bf16.msra.mxu0 %v1826
    %5548 = vmatpush.bf16.msra.mxu0 %v1825
    %5549 = vmatmul.bf16.gmra.mxu0 %v3173
    %v5550 = vpop.f32.mrf.mxu0
    %v5551 = vadd.f32 %v5502, %v5550
    %v5552 = vpop.f32.mrf.mxu0
    %v5553 = vadd.f32 %v5504, %v5552
    %5554 = vmatmul.bf16.gmra.mxu0 %v3213
    %v5555 = vpop.f32.mrf.mxu0
    %v5556 = vadd.f32 %v5507, %v5555
    %v5557 = vpop.f32.mrf.mxu0
    %v5558 = vadd.f32 %v5509, %v5557
    %5559 = vmatmul.bf16.gmra.mxu0 %v3253
    %v5560 = vpop.f32.mrf.mxu0
    %v5561 = vadd.f32 %v5512, %v5560
    %v5562 = vpop.f32.mrf.mxu0
    %v5563 = vadd.f32 %v5514, %v5562
    %5564 = vmatmul.bf16.gmra.mxu0 %v3293
    %v5565 = vpop.f32.mrf.mxu0
    %v5566 = vadd.f32 %v5517, %v5565
    %v5567 = vpop.f32.mrf.mxu0
    %v5568 = vadd.f32 %v5519, %v5567
    %5569 = vmatmul.bf16.gmra.mxu0 %v3333
    %v5570 = vpop.f32.mrf.mxu0
    %v5571 = vadd.f32 %v5522, %v5570
    %v5572 = vpop.f32.mrf.mxu0
    %v5573 = vadd.f32 %v5524, %v5572
    %5574 = vmatmul.bf16.gmra.mxu0 %v3373
    %v5575 = vpop.f32.mrf.mxu0
    %v5576 = vadd.f32 %v5527, %v5575
    %v5577 = vpop.f32.mrf.mxu0
    %v5578 = vadd.f32 %v5529, %v5577
    %5579 = vmatmul.bf16.gmra.mxu0 %v3413
    %v5580 = vpop.f32.mrf.mxu0
    %v5581 = vadd.f32 %v5532, %v5580
    %v5582 = vpop.f32.mrf.mxu0
    %v5583 = vadd.f32 %v5534, %v5582
    %5584 = vmatmul.bf16.gmra.mxu0 %v3453
    %v5585 = vpop.f32.mrf.mxu0
    %v5586 = vadd.f32 %v5537, %v5585
    %v5587 = vpop.f32.mrf.mxu0
    %v5588 = vadd.f32 %v5539, %v5587
    %5589 = vdwg.mxu0
    %5590 = vmatpush.bf16.msra.mxu0 %v1840
    %5591 = vmatpush.bf16.msra.mxu0 %v1839
    %5592 = vmatpush.bf16.msra.mxu0 %v1838
    %5593 = vmatpush.bf16.msra.mxu0 %v1837
    %5594 = vmatpush.bf16.msra.mxu0 %v1836
    %5595 = vmatpush.bf16.msra.mxu0 %v1835
    %5596 = vmatpush.bf16.msra.mxu0 %v1834
    %5597 = vmatpush.bf16.msra.mxu0 %v1833
    %5598 = vmatmul.bf16.gmra.mxu0 %v3174
    %v5599 = vpop.f32.mrf.mxu0
    %v5600 = vadd.f32 %v5551, %v5599
    %v5601 = vpop.f32.mrf.mxu0
    %v5602 = vadd.f32 %v5553, %v5601
    %5603 = vmatmul.bf16.gmra.mxu0 %v3214
    %v5604 = vpop.f32.mrf.mxu0
    %v5605 = vadd.f32 %v5556, %v5604
    %v5606 = vpop.f32.mrf.mxu0
    %v5607 = vadd.f32 %v5558, %v5606
    %5608 = vmatmul.bf16.gmra.mxu0 %v3254
    %v5609 = vpop.f32.mrf.mxu0
    %v5610 = vadd.f32 %v5561, %v5609
    %v5611 = vpop.f32.mrf.mxu0
    %v5612 = vadd.f32 %v5563, %v5611
    %5613 = vmatmul.bf16.gmra.mxu0 %v3294
    %v5614 = vpop.f32.mrf.mxu0
    %v5615 = vadd.f32 %v5566, %v5614
    %v5616 = vpop.f32.mrf.mxu0
    %v5617 = vadd.f32 %v5568, %v5616
    %5618 = vmatmul.bf16.gmra.mxu0 %v3334
    %v5619 = vpop.f32.mrf.mxu0
    %v5620 = vadd.f32 %v5571, %v5619
    %v5621 = vpop.f32.mrf.mxu0
    %v5622 = vadd.f32 %v5573, %v5621
    %5623 = vmatmul.bf16.gmra.mxu0 %v3374
    %v5624 = vpop.f32.mrf.mxu0
    %v5625 = vadd.f32 %v5576, %v5624
    %v5626 = vpop.f32.mrf.mxu0
    %v5627 = vadd.f32 %v5578, %v5626
    %5628 = vmatmul.bf16.gmra.mxu0 %v3414
    %v5629 = vpop.f32.mrf.mxu0
    %v5630 = vadd.f32 %v5581, %v5629
    %v5631 = vpop.f32.mrf.mxu0
    %v5632 = vadd.f32 %v5583, %v5631
    %5633 = vmatmul.bf16.gmra.mxu0 %v3454
    %v5634 = vpop.f32.mrf.mxu0
    %v5635 = vadd.f32 %v5586, %v5634
    %v5636 = vpop.f32.mrf.mxu0
    %v5637 = vadd.f32 %v5588, %v5636
    %5638 = vdwg.mxu0
    %5639 = vmatpush.bf16.msra.mxu0 %v1848
    %5640 = vmatpush.bf16.msra.mxu0 %v1847
    %5641 = vmatpush.bf16.msra.mxu0 %v1846
    %5642 = vmatpush.bf16.msra.mxu0 %v1845
    %5643 = vmatpush.bf16.msra.mxu0 %v1844
    %5644 = vmatpush.bf16.msra.mxu0 %v1843
    %5645 = vmatpush.bf16.msra.mxu0 %v1842
    %5646 = vmatpush.bf16.msra.mxu0 %v1841
    %5647 = vmatmul.bf16.gmra.mxu0 %v3175
    %v5648 = vpop.f32.mrf.mxu0
    %v5649 = vadd.f32 %v5600, %v5648
    %v5650 = vpop.f32.mrf.mxu0
    %v5651 = vadd.f32 %v5602, %v5650
    %5652 = vmatmul.bf16.gmra.mxu0 %v3215
    %v5653 = vpop.f32.mrf.mxu0
    %v5654 = vadd.f32 %v5605, %v5653
    %v5655 = vpop.f32.mrf.mxu0
    %v5656 = vadd.f32 %v5607, %v5655
    %5657 = vmatmul.bf16.gmra.mxu0 %v3255
    %v5658 = vpop.f32.mrf.mxu0
    %v5659 = vadd.f32 %v5610, %v5658
    %v5660 = vpop.f32.mrf.mxu0
    %v5661 = vadd.f32 %v5612, %v5660
    %5662 = vmatmul.bf16.gmra.mxu0 %v3295
    %v5663 = vpop.f32.mrf.mxu0
    %v5664 = vadd.f32 %v5615, %v5663
    %v5665 = vpop.f32.mrf.mxu0
    %v5666 = vadd.f32 %v5617, %v5665
    %5667 = vmatmul.bf16.gmra.mxu0 %v3335
    %v5668 = vpop.f32.mrf.mxu0
    %v5669 = vadd.f32 %v5620, %v5668
    %v5670 = vpop.f32.mrf.mxu0
    %v5671 = vadd.f32 %v5622, %v5670
    %5672 = vmatmul.bf16.gmra.mxu0 %v3375
    %v5673 = vpop.f32.mrf.mxu0
    %v5674 = vadd.f32 %v5625, %v5673
    %v5675 = vpop.f32.mrf.mxu0
    %v5676 = vadd.f32 %v5627, %v5675
    %5677 = vmatmul.bf16.gmra.mxu0 %v3415
    %v5678 = vpop.f32.mrf.mxu0
    %v5679 = vadd.f32 %v5630, %v5678
    %v5680 = vpop.f32.mrf.mxu0
    %v5681 = vadd.f32 %v5632, %v5680
    %5682 = vmatmul.bf16.gmra.mxu0 %v3455
    %v5683 = vpop.f32.mrf.mxu0
    %v5684 = vadd.f32 %v5635, %v5683
    %v5685 = vpop.f32.mrf.mxu0
    %v5686 = vadd.f32 %v5637, %v5685
    %5687 = vdwg.mxu0
    %5688 = vmatpush.bf16.msra.mxu0 %v1856
    %5689 = vmatpush.bf16.msra.mxu0 %v1855
    %5690 = vmatpush.bf16.msra.mxu0 %v1854
    %5691 = vmatpush.bf16.msra.mxu0 %v1853
    %5692 = vmatpush.bf16.msra.mxu0 %v1852
    %5693 = vmatpush.bf16.msra.mxu0 %v1851
    %5694 = vmatpush.bf16.msra.mxu0 %v1850
    %5695 = vmatpush.bf16.msra.mxu0 %v1849
    %5696 = vmatmul.bf16.gmra.mxu0 %v3176
    %v5697 = vpop.f32.mrf.mxu0
    %v5698 = vadd.f32 %v5649, %v5697
    %v5699 = vpop.f32.mrf.mxu0
    %v5700 = vadd.f32 %v5651, %v5699
    %5701 = vmatmul.bf16.gmra.mxu0 %v3216
    %v5702 = vpop.f32.mrf.mxu0
    %v5703 = vadd.f32 %v5654, %v5702
    %v5704 = vpop.f32.mrf.mxu0
    %v5705 = vadd.f32 %v5656, %v5704
    %5706 = vmatmul.bf16.gmra.mxu0 %v3256
    %v5707 = vpop.f32.mrf.mxu0
    %v5708 = vadd.f32 %v5659, %v5707
    %v5709 = vpop.f32.mrf.mxu0
    %v5710 = vadd.f32 %v5661, %v5709
    %5711 = vmatmul.bf16.gmra.mxu0 %v3296
    %v5712 = vpop.f32.mrf.mxu0
    %v5713 = vadd.f32 %v5664, %v5712
    %v5714 = vpop.f32.mrf.mxu0
    %v5715 = vadd.f32 %v5666, %v5714
    %5716 = vmatmul.bf16.gmra.mxu0 %v3336
    %v5717 = vpop.f32.mrf.mxu0
    %v5718 = vadd.f32 %v5669, %v5717
    %v5719 = vpop.f32.mrf.mxu0
    %v5720 = vadd.f32 %v5671, %v5719
    %5721 = vmatmul.bf16.gmra.mxu0 %v3376
    %v5722 = vpop.f32.mrf.mxu0
    %v5723 = vadd.f32 %v5674, %v5722
    %v5724 = vpop.f32.mrf.mxu0
    %v5725 = vadd.f32 %v5676, %v5724
    %5726 = vmatmul.bf16.gmra.mxu0 %v3416
    %v5727 = vpop.f32.mrf.mxu0
    %v5728 = vadd.f32 %v5679, %v5727
    %v5729 = vpop.f32.mrf.mxu0
    %v5730 = vadd.f32 %v5681, %v5729
    %5731 = vmatmul.bf16.gmra.mxu0 %v3456
    %v5732 = vpop.f32.mrf.mxu0
    %v5733 = vadd.f32 %v5684, %v5732
    %v5734 = vpop.f32.mrf.mxu0
    %v5735 = vadd.f32 %v5686, %v5734
    %5736 = vdwg.mxu0
    %v5737 = vld [vmem:[#allocation7] sm:$0x1]
    %v5739 = vperm.slane %v5737, 0
    %v5741 = vmul.f32 %v5698, %v5739
    %v5742 = vmul.f32 %v5700, %v5739
    %v5743 = vmul.f32 %v5703, %v5739
    %v5744 = vmul.f32 %v5705, %v5739
    %v5745 = vmul.f32 %v5708, %v5739
    %v5746 = vmul.f32 %v5710, %v5739
    %v5747 = vmul.f32 %v5713, %v5739
    %v5748 = vmul.f32 %v5715, %v5739
    %v5749 = vmul.f32 %v5718, %v5739
    %v5750 = vmul.f32 %v5720, %v5739
    %v5751 = vmul.f32 %v5723, %v5739
    %v5752 = vmul.f32 %v5725, %v5739
    %v5753 = vmul.f32 %v5728, %v5739
    %v5754 = vmul.f32 %v5730, %v5739
    %v5755 = vmul.f32 %v5733, %v5739
    %v5756 = vmul.f32 %v5735, %v5739
    %v5757 = vld [vmem:[#allocation8] sm:$0x1]
    %v5759 = vperm.slane %v5757, 0
    %v5761 = vadd.f32 %v5741, %v5759
    %v5762 = vadd.f32 %v5742, %v5759
    %v5763 = vadd.f32 %v5743, %v5759
    %v5764 = vadd.f32 %v5744, %v5759
    %v5765 = vadd.f32 %v5745, %v5759
    %v5766 = vadd.f32 %v5746, %v5759
    %v5767 = vadd.f32 %v5747, %v5759
    %v5768 = vadd.f32 %v5748, %v5759
    %v5769 = vadd.f32 %v5749, %v5759
    %v5770 = vadd.f32 %v5750, %v5759
    %v5771 = vadd.f32 %v5751, %v5759
    %v5772 = vadd.f32 %v5752, %v5759
    %v5773 = vadd.f32 %v5753, %v5759
    %v5774 = vadd.f32 %v5754, %v5759
    %v5775 = vadd.f32 %v5755, %v5759
    %v5776 = vadd.f32 %v5756, %v5759
    %v5777 = vmax.f32 %v5761, 0.0
    %v5778 = vmax.f32 %v5762, 0.0
    %v5779 = vmax.f32 %v5763, 0.0
    %v5780 = vmax.f32 %v5764, 0.0
    %v5781 = vmax.f32 %v5765, 0.0
    %v5782 = vmax.f32 %v5766, 0.0
    %v5783 = vmax.f32 %v5767, 0.0
    %v5784 = vmax.f32 %v5768, 0.0
    %v5785 = vmax.f32 %v5769, 0.0
    %v5786 = vmax.f32 %v5770, 0.0
    %v5787 = vmax.f32 %v5771, 0.0
    %v5788 = vmax.f32 %v5772, 0.0
    %v5789 = vmax.f32 %v5773, 0.0
    %v5790 = vmax.f32 %v5774, 0.0
    %v5791 = vmax.f32 %v5775, 0.0
    %v5792 = vmax.f32 %v5776, 0.0
    %v5793 = vld [vmem:[#allocation10] sm:$0x1]
    %v5795 = vperm.slane %v5793, 0
    %v5797 = vmul.f32 %v5777, %v5795
    %v5798 = vmul.f32 %v5778, %v5795
    %v5799 = vmul.f32 %v5779, %v5795
    %v5800 = vmul.f32 %v5780, %v5795
    %v5801 = vmul.f32 %v5781, %v5795
    %v5802 = vmul.f32 %v5782, %v5795
    %v5803 = vmul.f32 %v5783, %v5795
    %v5804 = vmul.f32 %v5784, %v5795
    %v5805 = vmul.f32 %v5785, %v5795
    %v5806 = vmul.f32 %v5786, %v5795
    %v5807 = vmul.f32 %v5787, %v5795
    %v5808 = vmul.f32 %v5788, %v5795
    %v5809 = vmul.f32 %v5789, %v5795
    %v5810 = vmul.f32 %v5790, %v5795
    %v5811 = vmul.f32 %v5791, %v5795
    %v5812 = vmul.f32 %v5792, %v5795
    %5813 = vadd.xlane.f32.xlu0 %v5797
    %v5814 = vpop.xlane.xlu0 %5813
    %5815 = vadd.xlane.f32.xlu0 %v5798
    %v5816 = vpop.xlane.xlu0 %5815
    %5817 = vadd.xlane.f32.xlu0 %v5799
    %v5818 = vpop.xlane.xlu0 %5817
    %5819 = vadd.xlane.f32.xlu0 %v5800
    %v5820 = vpop.xlane.xlu0 %5819
    %5821 = vadd.xlane.f32.xlu0 %v5801
    %v5822 = vpop.xlane.xlu0 %5821
    %5823 = vadd.xlane.f32.xlu0 %v5802
    %v5824 = vpop.xlane.xlu0 %5823
    %5825 = vadd.xlane.f32.xlu0 %v5803
    %v5826 = vpop.xlane.xlu0 %5825
    %5827 = vadd.xlane.f32.xlu0 %v5804
    %v5828 = vpop.xlane.xlu0 %5827
    %5829 = vadd.xlane.f32.xlu0 %v5805
    %v5830 = vpop.xlane.xlu0 %5829
    %5831 = vadd.xlane.f32.xlu0 %v5806
    %v5832 = vpop.xlane.xlu0 %5831
    %5833 = vadd.xlane.f32.xlu0 %v5807
    %v5834 = vpop.xlane.xlu0 %5833
    %5835 = vadd.xlane.f32.xlu0 %v5808
    %v5836 = vpop.xlane.xlu0 %5835
    %5837 = vadd.xlane.f32.xlu0 %v5809
    %v5838 = vpop.xlane.xlu0 %5837
    %5839 = vadd.xlane.f32.xlu0 %v5810
    %v5840 = vpop.xlane.xlu0 %5839
    %5841 = vadd.xlane.f32.xlu0 %v5811
    %v5842 = vpop.xlane.xlu0 %5841
    %5843 = vadd.xlane.f32.xlu0 %v5812
    %v5844 = vpop.xlane.xlu0 %5843
    %v5845 = vld [vmem:[#allocation2] sm:$0x1]
    %v5847 = vperm.slane %v5845, 0
    %v5849 = vadd.f32 %v5814, %v5847
    %v5850 = vadd.f32 %v5816, %v5847
    %v5851 = vadd.f32 %v5818, %v5847
    %v5852 = vadd.f32 %v5820, %v5847
    %v5853 = vadd.f32 %v5822, %v5847
    %v5854 = vadd.f32 %v5824, %v5847
    %v5855 = vadd.f32 %v5826, %v5847
    %v5856 = vadd.f32 %v5828, %v5847
    %v5857 = vadd.f32 %v5830, %v5847
    %v5858 = vadd.f32 %v5832, %v5847
    %v5859 = vadd.f32 %v5834, %v5847
    %v5860 = vadd.f32 %v5836, %v5847
    %v5861 = vadd.f32 %v5838, %v5847
    %v5862 = vadd.f32 %v5840, %v5847
    %v5863 = vadd.f32 %v5842, %v5847
    %v5864 = vadd.f32 %v5844, %v5847
    %v5865 = vmax.f32 %v5849, -30.0
    %v5866 = vmax.f32 %v5850, -30.0
    %v5867 = vmax.f32 %v5851, -30.0
    %v5868 = vmax.f32 %v5852, -30.0
    %v5869 = vmax.f32 %v5853, -30.0
    %v5870 = vmax.f32 %v5854, -30.0
    %v5871 = vmax.f32 %v5855, -30.0
    %v5872 = vmax.f32 %v5856, -30.0
    %v5873 = vmax.f32 %v5857, -30.0
    %v5874 = vmax.f32 %v5858, -30.0
    %v5875 = vmax.f32 %v5859, -30.0
    %v5876 = vmax.f32 %v5860, -30.0
    %v5877 = vmax.f32 %v5861, -30.0
    %v5878 = vmax.f32 %v5862, -30.0
    %v5879 = vmax.f32 %v5863, -30.0
    %v5880 = vmax.f32 %v5864, -30.0
    %v5881 = vmin.f32 %v5865, 30.0
    %v5882 = vmin.f32 %v5866, 30.0
    %v5883 = vmin.f32 %v5867, 30.0
    %v5884 = vmin.f32 %v5868, 30.0
    %v5885 = vmin.f32 %v5869, 30.0
    %v5886 = vmin.f32 %v5870, 30.0
    %v5887 = vmin.f32 %v5871, 30.0
    %v5888 = vmin.f32 %v5872, 30.0
    %v5889 = vmin.f32 %v5873, 30.0
    %v5890 = vmin.f32 %v5874, 30.0
    %v5891 = vmin.f32 %v5875, 30.0
    %v5892 = vmin.f32 %v5876, 30.0
    %v5893 = vmin.f32 %v5877, 30.0
    %v5894 = vmin.f32 %v5878, 30.0
    %v5895 = vmin.f32 %v5879, 30.0
    %v5896 = vmin.f32 %v5880, 30.0
    %v5897 = vsub.f32 0.0, %v5881
    %v5898 = vsub.f32 0.0, %v5882
    %v5899 = vsub.f32 0.0, %v5883
    %v5900 = vsub.f32 0.0, %v5884
    %v5901 = vsub.f32 0.0, %v5885
    %v5902 = vsub.f32 0.0, %v5886
    %v5903 = vsub.f32 0.0, %v5887
    %v5904 = vsub.f32 0.0, %v5888
    %v5905 = vsub.f32 0.0, %v5889
    %v5906 = vsub.f32 0.0, %v5890
    %v5907 = vsub.f32 0.0, %v5891
    %v5908 = vsub.f32 0.0, %v5892
    %v5909 = vsub.f32 0.0, %v5893
    %v5910 = vsub.f32 0.0, %v5894
    %v5911 = vsub.f32 0.0, %v5895
    %v5912 = vsub.f32 0.0, %v5896
    %v5913 = vmul.f32 %v5897, 1.442695
    %v5914 = vpow.pop %v5913
    %v5915 = vmul.f32 %v5898, 1.442695
    %v5916 = vpow.pop %v5915
    %v5917 = vmul.f32 %v5899, 1.442695
    %v5918 = vpow.pop %v5917
    %v5919 = vmul.f32 %v5900, 1.442695
    %v5920 = vpow.pop %v5919
    %v5921 = vmul.f32 %v5901, 1.442695
    %v5922 = vpow.pop %v5921
    %v5923 = vmul.f32 %v5902, 1.442695
    %v5924 = vpow.pop %v5923
    %v5925 = vmul.f32 %v5903, 1.442695
    %v5926 = vpow.pop %v5925
    %v5927 = vmul.f32 %v5904, 1.442695
    %v5928 = vpow.pop %v5927
    %v5929 = vmul.f32 %v5905, 1.442695
    %v5930 = vpow.pop %v5929
    %v5931 = vmul.f32 %v5906, 1.442695
    %v5932 = vpow.pop %v5931
    %v5933 = vmul.f32 %v5907, 1.442695
    %v5934 = vpow.pop %v5933
    %v5935 = vmul.f32 %v5908, 1.442695
    %v5936 = vpow.pop %v5935
    %v5937 = vmul.f32 %v5909, 1.442695
    %v5938 = vpow.pop %v5937
    %v5939 = vmul.f32 %v5910, 1.442695
    %v5940 = vpow.pop %v5939
    %v5941 = vmul.f32 %v5911, 1.442695
    %v5942 = vpow.pop %v5941
    %v5943 = vmul.f32 %v5912, 1.442695
    %v5944 = vpow.pop %v5943
    %v5945 = vadd.f32 %v5914, 1.0
    %v5946 = vadd.f32 %v5916, 1.0
    %v5947 = vadd.f32 %v5918, 1.0
    %v5948 = vadd.f32 %v5920, 1.0
    %v5949 = vadd.f32 %v5922, 1.0
    %v5950 = vadd.f32 %v5924, 1.0
    %v5951 = vadd.f32 %v5926, 1.0
    %v5952 = vadd.f32 %v5928, 1.0
    %v5953 = vadd.f32 %v5930, 1.0
    %v5954 = vadd.f32 %v5932, 1.0
    %v5955 = vadd.f32 %v5934, 1.0
    %v5956 = vadd.f32 %v5936, 1.0
    %v5957 = vadd.f32 %v5938, 1.0
    %v5958 = vadd.f32 %v5940, 1.0
    %v5959 = vadd.f32 %v5942, 1.0
    %v5960 = vadd.f32 %v5944, 1.0
    %v5961 = vrcp.pop %v5945
    %v5962 = vrcp.pop %v5946
    %v5963 = vrcp.pop %v5947
    %v5964 = vrcp.pop %v5948
    %v5965 = vrcp.pop %v5949
    %v5966 = vrcp.pop %v5950
    %v5967 = vrcp.pop %v5951
    %v5968 = vrcp.pop %v5952
    %v5969 = vrcp.pop %v5953
    %v5970 = vrcp.pop %v5954
    %v5971 = vrcp.pop %v5955
    %v5972 = vrcp.pop %v5956
    %v5973 = vrcp.pop %v5957
    %v5974 = vrcp.pop %v5958
    %v5975 = vrcp.pop %v5959
    %v5976 = vrcp.pop %v5960
    %vm5977 = vcmask 7168
    %5978 = vst.msk [vmem:[%s6] sm:$0xff] %vm5977, %v5961
    %5979 = vst.msk [vmem:[%s6 + $0x8] sm:$0xff] %vm5977, %v5962
    %5980 = vst.msk [vmem:[%s6 + $0x10] sm:$0xff] %vm5977, %v5963
    %5981 = vst.msk [vmem:[%s6 + $0x18] sm:$0xff] %vm5977, %v5964
    %5982 = vst.msk [vmem:[%s6 + $0x20] sm:$0xff] %vm5977, %v5965
    %5983 = vst.msk [vmem:[%s6 + $0x28] sm:$0xff] %vm5977, %v5966
    %5984 = vst.msk [vmem:[%s6 + $0x30] sm:$0xff] %vm5977, %v5967
    %5985 = vst.msk [vmem:[%s6 + $0x38] sm:$0xff] %vm5977, %v5968
    %5986 = vst.msk [vmem:[%s6 + $0x40] sm:$0xff] %vm5977, %v5969
    %5987 = vst.msk [vmem:[%s6 + $0x48] sm:$0xff] %vm5977, %v5970
    %5988 = vst.msk [vmem:[%s6 + $0x50] sm:$0xff] %vm5977, %v5971
    %5989 = vst.msk [vmem:[%s6 + $0x58] sm:$0xff] %vm5977, %v5972
    %5990 = vst.msk [vmem:[%s6 + $0x60] sm:$0xff] %vm5977, %v5973
    %5991 = vst.msk [vmem:[%s6 + $0x68] sm:$0xff] %vm5977, %v5974
    %5992 = vst.msk [vmem:[%s6 + $0x70] sm:$0xff] %vm5977, %v5975
    %5993 = vst.msk [vmem:[%s6 + $0x78] sm:$0xff] %vm5977, %v5976
    // Predicated region
    $region46: #{tpu_custom_call.1} parent=1 // pred_check
      _
    $region47: #{tpu_custom_call.1} parent=1 // pred_check_branch
      %5995 = sbr.rel (0) target = $region49
    $region48: #{tpu_custom_call.1} parent=1 // pred_region
      _
    $region49: #{tpu_custom_call.1} parent=1 // pred_fallthru
      _
    // Predicated region
    $region50: #{tpu_custom_call.1} parent=1 // pred_check
      _
    $region51: #{tpu_custom_call.1} parent=1 // pred_check_branch
      %5997 = sbr.rel (0) target = $region53
    $region52: #{tpu_custom_call.1} parent=1 // pred_region
      _
    $region53: #{tpu_custom_call.1} parent=1 // pred_fallthru
      _
    %5998 = vsyncpa [#allocation4], 1
    %5999 = vsyncpa [#allocation6], 1
    %6000 = vsyncpa [#allocation9], 1

</llo_original>
